<compile_context>
chip_gen: v6e
topology: v6e:2x2x1
jax: 0.10.0
libtpu: 0.0.40
codegen_flags: <defaults>
</compile_context>

<pallas_src>
import functools
import sys

import numpy as np
import jax
import jax.numpy as jnp
from jax import lax
from jax.experimental import pallas as pl
from jax.experimental.pallas import tpu as pltpu


def _round_up(v, m):
    return (v + m - 1) // m * m


def _vmem_capacity_bytes():
    """Physical VMEM capacity (per TensorCore), with a conservative v7x fallback."""
    try:
        info = pltpu.get_tpu_info()
        cap = getattr(info, "vmem_capacity_bytes", None)
        if cap:
            return int(cap)
    except Exception:
        pass
    return 64 << 20


def _bottleneck_kernel(*refs, H, W, Cin, P, stride, has_downsample, pad0,
                       conv2_mode, packed, pool_mode):
    """One batch element per grid step; all convs + folded BN + pooling + residual fused."""
    s = stride
    Ho, Wo = H // s, W // s
    Cout = 4 * P
    HW = H * W
    HoWo = Ho * Wo

    it = iter(refs)
    x_ref = next(it)
    w1_ref, b1_ref = next(it), next(it)
    w2_ref, b2_ref = next(it), next(it)
    w3_ref, b3_ref = next(it), next(it)
    if has_downsample:
        wd_ref, bd_ref = next(it), next(it)
    pool_ref = next(it) if (pool_mode == "matmul" and s > 1) else None
    out_ref = next(it)
    scr_ref = next(it)                                              # (2*pad0+HW, P) bf16/f32
    pool1_ref = next(it) if (pool_mode == "strided" and s > 1) else None

    x2d = x_ref[...].reshape(HW, Cin)                               # bf16 (HW, Cin)

    # --- conv1 (1x1, BN scale folded) + bias + relu ---------------------------
    h = jnp.dot(x2d, w1_ref[...], preferred_element_type=jnp.float32)
    h = jnp.maximum(h + b1_ref[...], 0.0)                           # f32 (HW, P)
    h_bf = h.astype(jnp.bfloat16)

    # --- conv2 (3x3, padding=1, BN scale folded) + bias + relu ----------------
    # Zero only the halo rows; the live centre is written once.
    scr_ref[0:pad0, :] = jnp.zeros((pad0, P), scr_ref.dtype)
    scr_ref[pad0 + HW:2 * pad0 + HW, :] = jnp.zeros((pad0, P), scr_ref.dtype)
    scr_ref[pad0:pad0 + HW, :] = h_bf if conv2_mode == "roll" else h

    col = lax.broadcasted_iota(jnp.int32, (HW, 1), 0) % W           # output x coordinate
    mask_l = col >= 1                                               # valid for dx = -1
    mask_r = col < (W - 1)                                          # valid for dx = +1

    def taps(dy):
        """(left, mid, right) bf16 taps for dx = -1, 0, +1 at row offset dy."""
        if conv2_mode == "roll":
            # Aligned dy slice (pad0+dy*W is a multiple of 8 when W%8==0), dx via XLU roll.
            base = h_bf if dy == 0 else scr_ref[pad0 + dy * W:pad0 + dy * W + HW, :]
            left = pltpu.roll(base, 1, axis=0)                      # tap[r] = base[r-1]
            right = pltpu.roll(base, -1, axis=0)                    # tap[r] = base[r+1]
            mid = base
        else:
            c = pad0 + dy * W
            mid = h_bf if dy == 0 else scr_ref[c:c + HW, :]
            left = scr_ref[c - 1:c - 1 + HW, :]
            right = scr_ref[c + 1:c + 1 + HW, :]
        left = jnp.where(mask_l, left, 0.0).astype(jnp.bfloat16)
        right = jnp.where(mask_r, right, 0.0).astype(jnp.bfloat16)
        return left, mid.astype(jnp.bfloat16), right

    acc = jnp.zeros((HW, P), jnp.float32)
    for dyi, dy in enumerate((-1, 0, 1)):
        l, m, r = taps(dy)
        if packed:
            strip = jnp.concatenate([l, m, r], axis=1)              # (HW, 3P) bf16
            acc = acc + jnp.dot(strip, w2_ref[dyi],                 # K = 3P MXU matmul
                                preferred_element_type=jnp.float32)
        else:
            w2d = w2_ref[dyi]                                       # (3P, P)
            for dxi, tap in enumerate((l, m, r)):
                acc = acc + jnp.dot(tap, w2d[dxi * P:(dxi + 1) * P, :],
                                    preferred_element_type=jnp.float32)
    h2 = jnp.maximum(acc + b2_ref[...], 0.0)                        # f32 (HW, P)

    # --- avgpool(stride) on the main branch -----------------------------------
    if s > 1:
        if pool_mode == "strided":
            # Stage (Ho, s, W, P), sum dy via integer index and dx via a
            # sublane-strided read -- no O(HW^2) pooling matmul.
            pool1_ref[...] = h2.reshape(Ho, s, W, P)
            pooled = jnp.zeros((Ho, Wo, P), jnp.float32)
            for dy in range(s):
                for dx in range(s):
                    pooled = pooled + pool1_ref[:, dy, pl.ds(dx, Wo, stride=s), :]
            h2p = (pooled * (1.0 / (s * s))).reshape(HoWo, P)
        else:  # last-resort pooling-matrix matmul
            h2p = jnp.dot(pool_ref[...], h2, preferred_element_type=jnp.float32)
    else:
        h2p = h2                                                    # (HoWo, P) == (HW, P)

    # --- conv3 (1x1, BN scale folded) + bias -----------------------------------
    g = jnp.dot(h2p.astype(jnp.bfloat16), w3_ref[...],
                preferred_element_type=jnp.float32) + b3_ref[...]   # f32 (HoWo, 4P)

    # --- identity / downsample branch ------------------------------------------
    if has_downsample:
        if s > 1:
            if pool_mode == "strided":
                # In-kernel AvgPool of the already-resident x block.
                xac = jnp.zeros((Ho, Wo, Cin), jnp.float32)
                for dy in range(s):
                    for dx in range(s):
                        xac = xac + x_ref[:, dy, pl.ds(dx, Wo, stride=s), :].astype(jnp.float32)
                xid = (xac * (1.0 / (s * s))).reshape(HoWo, Cin).astype(jnp.bfloat16)
            else:
                xid = jnp.dot(pool_ref[...], x2d.astype(jnp.float32),
                              preferred_element_type=jnp.float32).astype(jnp.bfloat16)
        else:
            xid = x2d                                               # AvgPool2d(1) == identity
        idn = jnp.dot(xid, wd_ref[...], preferred_element_type=jnp.float32) + bd_ref[...]
    else:
        idn = x2d.astype(jnp.float32)                               # Cin == 4P, stride == 1

    out_ref[...] = jnp.maximum(g + idn, 0.0).astype(out_ref.dtype)  # (HoWo, Cout)


def _make_pool_matrix(H, W, s):
    """AvgPool2d(s) as an (Ho*Wo, H*W) matrix -- capability fallback only."""
    Ho, Wo = H // s, W // s
    A = np.zeros((Ho * Wo, H * W), np.float32)
    inv = 1.0 / (s * s)
    for ho in range(Ho):
        for wo in range(Wo):
            o = ho * Wo + wo
            for dy in range(s):
                for dx in range(s):
                    A[o, (ho * s + dy) * W + (wo * s + dx)] = inv
    return jnp.asarray(A)


def _prepare_params(params, has_downsample):
    """Fold BN scales into the conv weights in f32, then cast weights to bf16."""
    P = params["w1"].shape[1]
    prep = {
        "w1": (params["w1"] * params["s1"].reshape(1, -1)).astype(jnp.bfloat16),
        "b1": params["b1"],
        # (9, P, P) * scale over cout, then pack to (3, 3P, P): rows kx*P+ci per ky.
        "w2": (params["w2"] * params["s2"].reshape(1, 1, -1)
               ).reshape(3, 3 * P, P).astype(jnp.bfloat16),
        "b2": params["b2"],
        "w3": (params["w3"] * params["s3"].reshape(1, -1)).astype(jnp.bfloat16),
        "b3": params["b3"],
    }
    if has_downsample:
        prep["wd"] = (params["wd"] * params["sd"].reshape(1, -1)).astype(jnp.bfloat16)
        prep["bd"] = params["bd"]
    return prep


def bottleneck_forward(x_nchw, params, stride, has_downsample, *,
                       conv2_mode="roll", packed=True, pool_mode="strided",
                       single_buffer=True):
    """Bottleneck forward. x_nchw: (N, Cin, H, W) f32 -> (N, 4*planes, Ho, Wo) f32."""
    N, Cin, H, W = x_nchw.shape
    P = params["w1"].shape[1]
    Cout = 4 * P
    s = stride
    if not has_downsample:
        assert s == 1 and Cin == Cout, "stride>1 / channel change requires downsample"
    assert H % s == 0 and W % s == 0
    Ho, Wo = H // s, W // s
    HW = H * W
    HoWo = Ho * Wo
    pad0 = _round_up(W if conv2_mode == "roll" else W + 1, 8)

    prep = _prepare_params(params, has_downsample)

    # Single NHWC bf16 activation pass (no extra f32 copy of x, no wrapper pooling).
    x_nhwc = jnp.transpose(x_nchw, (0, 2, 3, 1)).astype(jnp.bfloat16)
    if s > 1:
        x_in = x_nhwc.reshape(N, Ho, s, W, Cin)
        x_spec = pl.BlockSpec((None, Ho, s, W, Cin), lambda n: (n, 0, 0, 0, 0))
    else:
        x_in = x_nhwc.reshape(N, HW, Cin)
        x_spec = pl.BlockSpec((None, HW, Cin), lambda n: (n, 0, 0))

    def inv_spec(a):
        """Grid-invariant input: full block, constant index map, single-buffered."""
        nd = a.ndim
        kw = {"pipeline_mode": pl.Buffered(1)} if single_buffer else {}
        return pl.BlockSpec(a.shape, lambda n, _nd=nd: (0,) * _nd, **kw)

    invariants = [prep["w1"], prep["b1"], prep["w2"], prep["b2"],
                  prep["w3"], prep["b3"]]
    if has_downsample:
        invariants += [prep["wd"], prep["bd"]]
    if pool_mode == "matmul" and s > 1:
        invariants.append(_make_pool_matrix(H, W, s))

    inputs = [x_in] + invariants
    in_specs = [x_spec] + [inv_spec(a) for a in invariants]

    scr_dtype = jnp.bfloat16 if conv2_mode == "roll" else jnp.float32
    scr_rows = 2 * pad0 + HW
    scratch_shapes = [pltpu.VMEM((scr_rows, P), scr_dtype)]
    scratch_bytes = scr_rows * P * (2 if scr_dtype == jnp.bfloat16 else 4)
    if pool_mode == "strided" and s > 1:
        scratch_shapes.append(pltpu.VMEM((Ho, s, W, P), jnp.float32))
        scratch_bytes += Ho * s * W * P * 4

    kernel = functools.partial(
        _bottleneck_kernel, H=H, W=W, Cin=Cin, P=P, stride=s,
        has_downsample=has_downsample, pad0=pad0, conv2_mode=conv2_mode,
        packed=packed, pool_mode=pool_mode)

    # Advisory cost estimate for the XLA scheduler.
    flops = 2 * HW * Cin * P + 2 * 9 * HW * P * P + 2 * HoWo * P * Cout
    if has_downsample:
        flops += 2 * HoWo * Cin * Cout
    flops *= N
    bytes_accessed = sum(int(a.size) * a.dtype.itemsize for a in inputs)
    bytes_accessed += N * HoWo * Cout * 4
    cost = pl.CostEstimate(flops=int(flops), transcendentals=0,
                           bytes_accessed=int(bytes_accessed))

    # VMEM limit: per-step footprint (blocks, weights, scratch, f32 intermediates),
    # clamped to the physical capacity (v7x: 64 MiB per TensorCore).
    weight_bytes = sum(int(a.size) * a.dtype.itemsize for a in invariants)
    block_bytes = int(np.prod(x_in.shape[1:])) * 2 + HoWo * Cout * 4
    inter_bytes = (5 * HW * P * 4 + 3 * HW * 3 * P * 2
                   + 3 * HoWo * Cout * 4 + HW * Cin * 2)
    est = (2 * block_bytes + (1 if single_buffer else 2) * weight_bytes
           + scratch_bytes + inter_bytes + (4 << 20))
    cap = _vmem_capacity_bytes()
    vmem_limit = int(min(cap - (4 << 20), max(32 << 20, 2 * est)))

    out2d = pl.pallas_call(
        kernel,
        out_shape=jax.ShapeDtypeStruct((N, HoWo, Cout), jnp.float32),
        grid_spec=pltpu.PrefetchScalarGridSpec(
            num_scalar_prefetch=0,
            grid=(N,),
            in_specs=in_specs,
            out_specs=pl.BlockSpec((None, HoWo, Cout), lambda n: (n, 0, 0)),
            scratch_shapes=scratch_shapes),
        compiler_params=pltpu.CompilerParams(
            dimension_semantics=("parallel",),
            vmem_limit_bytes=vmem_limit),
        cost_estimate=cost,
    )(*inputs)

    out_nhwc = out2d.reshape(N, Ho, Wo, Cout)
    return jnp.transpose(out_nhwc, (0, 3, 1, 2))                    # back to NCHW


# Capability ladder: fully optimized first; every fallback is numerically identical
# except the last-resort pooling matrix.  Fallbacks are logged to stderr.
_CONFIG_LADDER = (
    dict(conv2_mode="roll", packed=True, pool_mode="strided", single_buffer=True),
    dict(conv2_mode="slice", packed=True, pool_mode="strided", single_buffer=True),
    dict(conv2_mode="slice", packed=True, pool_mode="strided", single_buffer=False),
    dict(conv2_mode="slice", packed=False, pool_mode="matmul", single_buffer=False),
)
_LAST_CONFIG = None


def run_bottleneck(x, params, stride, has_downsample):
    global _LAST_CONFIG
    err = None
    for cfg in _CONFIG_LADDER:
        try:
            out = jax.block_until_ready(
                bottleneck_forward(x, params, stride, has_downsample, **cfg))
            _LAST_CONFIG = cfg
            if cfg is not _CONFIG_LADDER[0]:
                print("bottleneck: fell back to config %s" % (cfg,), file=sys.stderr)
            return out
        except Exception as e:  # capability fallback only
            err = e
    raise err


def init_params(key, inplanes, planes, stride):
    """Deterministic synthetic parameters (BN expressed as inference scale/bias)."""
    expansion = 4
    cout = planes * expansion
    has_downsample = stride > 1 or inplanes != cout
    eps = 1e-5
    ks = jax.random.split(key, 8)

    def conv_init(k, cin, co, ksz):
        fan_in = cin * ksz * ksz
        return (jax.random.normal(k, (ksz, ksz, cin, co), jnp.float32)
                / np.sqrt(fan_in)).astype(jnp.float32)

    def bn_init(k, c):
        k1, k2, k3, k4 = jax.random.split(k, 4)
        gamma = 1.0 + 0.1 * jax.random.normal(k1, (c,), jnp.float32)
        beta = 0.1 * jax.random.normal(k2, (c,), jnp.float32)
        mean = 0.1 * jax.random.normal(k3, (c,), jnp.float32)
        var = jnp.abs(jax.random.normal(k4, (c,), jnp.float32)) + 0.5
        scale = gamma / jnp.sqrt(var + eps)
        bias = beta - mean * scale
        return scale.reshape(1, c), bias.reshape(1, c)

    p = {}
    p["w1"] = conv_init(ks[0], inplanes, planes, 1).reshape(inplanes, planes)
    p["s1"], p["b1"] = bn_init(ks[1], planes)
    # (ky, kx, cin, cout) flattened to (9, cin, cout), k = ky*3 + kx
    p["w2"] = conv_init(ks[2], planes, planes, 3).reshape(9, planes, planes)
    p["s2"], p["b2"] = bn_init(ks[3], planes)
    p["w3"] = conv_init(ks[4], planes, cout, 1).reshape(planes, cout)
    p["s3"], p["b3"] = bn_init(ks[5], cout)
    if has_downsample:
        p["wd"] = conv_init(ks[6], inplanes, cout, 1).reshape(inplanes, cout)
        p["sd"], p["bd"] = bn_init(ks[7], cout)
    return p, has_downsample


def bottleneck_reference(x_nchw, params, stride, has_downsample):
    """Pure-JAX f32 reference (un-folded BN, plain XLA ops) for verification."""
    x = jnp.transpose(x_nchw, (0, 2, 3, 1)).astype(jnp.float32)
    planes = params["w1"].shape[1]
    h = jnp.einsum("nhwc,cp->nhwp", x, params["w1"])
    h = jax.nn.relu(h * params["s1"] + params["b1"])
    w2 = params["w2"].reshape(3, 3, planes, planes)
    h = lax.conv_general_dilated(h, w2, (1, 1), "SAME",
                                 dimension_numbers=("NHWC", "HWIO", "NHWC"))
    h = jax.nn.relu(h * params["s2"] + params["b2"])

    def avgpool(t):
        n, hh, ww, c = t.shape
        return t.reshape(n, hh // stride, stride, ww // stride, stride, c).mean(axis=(2, 4))

    if stride > 1:
        h = avgpool(h)
    h = jnp.einsum("nhwc,cp->nhwp", h, params["w3"])
    h = h * params["s3"] + params["b3"]

    idn = x
    if has_downsample:
        if stride > 1:
            idn = avgpool(idn)
        idn = jnp.einsum("nhwc,cp->nhwp", idn, params["wd"])
        idn = idn * params["sd"] + params["bd"]

    out = jax.nn.relu(h + idn)
    return jnp.transpose(out, (0, 3, 1, 2))


def _check(name, out, ref):
    out = np.asarray(out)
    ref = np.asarray(ref)
    # Elementwise tolerance dominated by bf16 matmul operands vs the full-f32 reference.
    np.testing.assert_allclose(out, ref, rtol=0.1, atol=0.1, err_msg=name)
    # Stronger bulk check: relative RMS error must stay small.
    rms_err = float(np.sqrt(np.mean((out - ref) ** 2)))
    rms_ref = float(np.sqrt(np.mean(ref ** 2))) + 1e-6
    assert rms_err <= 0.06 * rms_ref, (name, rms_err, rms_ref)


if __name__ == "__main__":
    key = jax.random.PRNGKey(0)
    kp1, kp2, kp3, kx1, kx2, kx3 = jax.random.split(key, 6)
    N, H, W = 2, 16, 16

    # Case 1: stride=2 with downsample branch (inplanes=16, planes=8 -> 32 out ch).
    params1, ds1 = init_params(kp1, 16, 8, 2)
    x1 = jax.random.normal(kx1, (N, 16, H, W), jnp.float32)
    _check("stride2_downsample",
           run_bottleneck(x1, params1, 2, ds1),
           bottleneck_reference(x1, params1, 2, ds1))

    # Case 2: stride=1, pure identity shortcut (inplanes == planes*4 == 32).
    params2, ds2 = init_params(kp2, 32, 8, 1)
    x2 = jax.random.normal(kx2, (N, 32, H, W), jnp.float32)
    _check("stride1_identity",
           run_bottleneck(x2, params2, 1, ds2),
           bottleneck_reference(x2, params2, 1, ds2))

    # Case 3: stride=1 with projection downsample (inplanes=16 != 32).
    params3, ds3 = init_params(kp3, 16, 8, 1)
    x3 = jax.random.normal(kx3, (N, 16, H, W), jnp.float32)
    _check("stride1_projection",
           run_bottleneck(x3, params3, 1, ds3),
           bottleneck_reference(x3, params3, 1, ds3))

    print("KERNEL_OK")
</pallas_src>

<mosaic_0001>
module attributes {stable_mosaic.version = 11 : i64} {
  func.func @_bottleneck_kernel(%arg0: i32, %arg1: memref<1x8x2x16x16xbf16, #tpu.memory_space<vmem>>, %arg2: memref<16x8xbf16, #tpu.memory_space<vmem>>, %arg3: memref<1x8xf32, #tpu.memory_space<vmem>>, %arg4: memref<3x24x8xbf16, #tpu.memory_space<vmem>>, %arg5: memref<1x8xf32, #tpu.memory_space<vmem>>, %arg6: memref<8x32xbf16, #tpu.memory_space<vmem>>, %arg7: memref<1x32xf32, #tpu.memory_space<vmem>>, %arg8: memref<16x32xbf16, #tpu.memory_space<vmem>>, %arg9: memref<1x32xf32, #tpu.memory_space<vmem>>, %arg10: memref<1x64x32xf32, #tpu.memory_space<vmem>>, %arg11: memref<304x8xf32, #tpu.memory_space<vmem>>, %arg12: memref<8x2x16x8xf32, #tpu.memory_space<vmem>>) attributes {dimension_semantics = [#tpu.dimension_semantics<parallel>], iteration_bounds = array<i64: 2>, scalar_prefetch = 0 : i64, scratch_operands = 2 : i64, tpu.core_type = #tpu.core_type<tc>, window_params = [{transform_indices = @transform_0, window_bounds = array<i64: 1, 8, 2, 16, 16>}, {pipeline_mode = #tpu.pipeline_mode<synchronous>, transform_indices = @transform_1, window_bounds = array<i64: 16, 8>}, {pipeline_mode = #tpu.pipeline_mode<synchronous>, transform_indices = @transform_2, window_bounds = array<i64: 1, 8>}, {pipeline_mode = #tpu.pipeline_mode<synchronous>, transform_indices = @transform_3, window_bounds = array<i64: 3, 24, 8>}, {pipeline_mode = #tpu.pipeline_mode<synchronous>, transform_indices = @transform_4, window_bounds = array<i64: 1, 8>}, {pipeline_mode = #tpu.pipeline_mode<synchronous>, transform_indices = @transform_5, window_bounds = array<i64: 8, 32>}, {pipeline_mode = #tpu.pipeline_mode<synchronous>, transform_indices = @transform_6, window_bounds = array<i64: 1, 32>}, {pipeline_mode = #tpu.pipeline_mode<synchronous>, transform_indices = @transform_7, window_bounds = array<i64: 16, 32>}, {pipeline_mode = #tpu.pipeline_mode<synchronous>, transform_indices = @transform_8, window_bounds = array<i64: 1, 32>}, {transform_indices = @transform_9, window_bounds = array<i64: 1, 64, 32>}]} {
    %c0 = arith.constant 0 : index
    %c0_0 = arith.constant 0 : index
    %c0_1 = arith.constant 0 : index
    %c0_2 = arith.constant 0 : index
    %c0_3 = arith.constant 0 : index
    %0 = vector.load %arg1[%c0, %c0_0, %c0_1, %c0_2, %c0_3] : memref<1x8x2x16x16xbf16, #tpu.memory_space<vmem>>, vector<1x8x2x16x16xbf16>
    %1 = vector.shape_cast %0 : vector<1x8x2x16x16xbf16> to vector<8x2x16x16xbf16>
    %2 = vector.shape_cast %1 : vector<8x2x16x16xbf16> to vector<256x16xbf16>
    %c0_4 = arith.constant 0 : index
    %c0_5 = arith.constant 0 : index
    %3 = vector.load %arg2[%c0_4, %c0_5] : memref<16x8xbf16, #tpu.memory_space<vmem>>, vector<16x8xbf16>
    %cst = arith.constant dense<0.000000e+00> : vector<256x8xf32>
    %4 = tpu.matmul %2, %3, %cst {dimension_numbers = #tpu.dot_dimension_numbers<[1], [0], [0], [1], [0, 0, 1, 1], [], []>} : vector<256x16xbf16>, vector<16x8xbf16>, vector<256x8xf32> -> vector<256x8xf32>
    %c0_6 = arith.constant 0 : index
    %c0_7 = arith.constant 0 : index
    %5 = vector.load %arg3[%c0_6, %c0_7] : memref<1x8xf32, #tpu.memory_space<vmem>>, vector<1x8xf32>
    %6 = vector.broadcast %5 : vector<1x8xf32> to vector<256x8xf32>
    %7 = arith.addf %4, %6 : vector<256x8xf32>
    %cst_8 = arith.constant 0.000000e+00 : f32
    %8 = vector.broadcast %cst_8 : f32 to vector<256x8xf32>
    %9 = arith.maximumf %7, %8 : vector<256x8xf32>
    %10 = arith.truncf %9 : vector<256x8xf32> to vector<256x8xbf16>
    %cst_9 = arith.constant 0.000000e+00 : f32
    %11 = vector.broadcast %cst_9 : f32 to vector<24x8xf32>
    %c0_10 = arith.constant 0 : index
    %c0_11 = arith.constant 0 : index
    %12 = vector.load %arg11[%c0_10, %c0_11] : memref<304x8xf32, #tpu.memory_space<vmem>>, vector<24x8xf32>
    tpu.vector_store %arg11[%c0_10, %c0_11], %11 {strides = array<i32>} : memref<304x8xf32, #tpu.memory_space<vmem>>, vector<24x8xf32>,
    %cst_12 = arith.constant 0.000000e+00 : f32
    %13 = vector.broadcast %cst_12 : f32 to vector<24x8xf32>
    %c280 = arith.constant 280 : index
    %c0_13 = arith.constant 0 : index
    %14 = vector.load %arg11[%c280, %c0_13] : memref<304x8xf32, #tpu.memory_space<vmem>>, vector<24x8xf32>
    tpu.vector_store %arg11[%c280, %c0_13], %13 {strides = array<i32>} : memref<304x8xf32, #tpu.memory_space<vmem>>, vector<24x8xf32>,
    %c24 = arith.constant 24 : index
    %c0_14 = arith.constant 0 : index
    %15 = vector.load %arg11[%c24, %c0_14] : memref<304x8xf32, #tpu.memory_space<vmem>>, vector<256x8xf32>
    tpu.vector_store %arg11[%c24, %c0_14], %9 {strides = array<i32>} : memref<304x8xf32, #tpu.memory_space<vmem>>, vector<256x8xf32>,
    %16 = tpu.iota {dimensions = array<i32: 0>} : vector<256x1xi32>
    %c16_i32 = arith.constant 16 : i32
    %c0_i32 = arith.constant 0 : i32
    %17 = arith.cmpi eq, %c16_i32, %c0_i32 : i32
    %c1_i32 = arith.constant 1 : i32
    %18 = arith.select %17, %c1_i32, %c16_i32 : i32
    %19 = vector.broadcast %18 : i32 to vector<256x1xi32>
    %20 = arith.remsi %16, %19 : vector<256x1xi32>
    %c0_i32_15 = arith.constant 0 : i32
    %21 = vector.broadcast %c0_i32_15 : i32 to vector<256x1xi32>
    %22 = arith.cmpi ne, %20, %21 : vector<256x1xi32>
    %c0_i32_16 = arith.constant 0 : i32
    %23 = vector.broadcast %c0_i32_16 : i32 to vector<256x1xi32>
    %24 = arith.cmpi slt, %20, %23 : vector<256x1xi32>
    %c0_i32_17 = arith.constant 0 : i32
    %25 = arith.cmpi slt, %18, %c0_i32_17 : i32
    %26 = vector.broadcast %25 : i1 to vector<256x1xi1>
    %27 = vector.broadcast %26 : vector<256x1xi1> to vector<256x1xi1>
    %28 = arith.xori %24, %27 : vector<256x1xi1>
    %29 = arith.andi %28, %22 : vector<256x1xi1>
    %30 = vector.broadcast %18 : i32 to vector<256x1xi32>
    %31 = arith.addi %20, %30 : vector<256x1xi32>
    %32 = arith.select %29, %31, %20 : vector<256x1xi1>, vector<256x1xi32>
    %c1_i32_18 = arith.constant 1 : i32
    %33 = vector.broadcast %c1_i32_18 : i32 to vector<256x1xi32>
    %34 = arith.cmpi sge, %32, %33 : vector<256x1xi32>
    %c15_i32 = arith.constant 15 : i32
    %35 = vector.broadcast %c15_i32 : i32 to vector<256x1xi32>
    %36 = arith.cmpi slt, %32, %35 : vector<256x1xi32>
    %cst_19 = arith.constant 0.000000e+00 : f32
    %37 = vector.broadcast %cst_19 : f32 to vector<256x8xf32>
    %c8 = arith.constant 8 : index
    %c0_20 = arith.constant 0 : index
    %38 = vector.load %arg11[%c8, %c0_20] : memref<304x8xf32, #tpu.memory_space<vmem>>, vector<256x8xf32>
    %c7 = arith.constant 7 : index
    %c0_21 = arith.constant 0 : index
    %39 = vector.load %arg11[%c7, %c0_21] : memref<304x8xf32, #tpu.memory_space<vmem>>, vector<256x8xf32>
    %c9 = arith.constant 9 : index
    %c0_22 = arith.constant 0 : index
    %40 = vector.load %arg11[%c9, %c0_22] : memref<304x8xf32, #tpu.memory_space<vmem>>, vector<256x8xf32>
    %cst_23 = arith.constant 0.000000e+00 : f32
    %41 = vector.shape_cast %34 : vector<256x1xi1> to vector<256x1xi1>
    %42 = vector.broadcast %41 : vector<256x1xi1> to vector<256x8xi1>
    %43 = vector.broadcast %cst_23 : f32 to vector<256x8xf32>
    %44 = arith.select %42, %39, %43 : vector<256x8xi1>, vector<256x8xf32>
    %45 = arith.truncf %44 : vector<256x8xf32> to vector<256x8xbf16>
    %cst_24 = arith.constant 0.000000e+00 : f32
    %46 = vector.shape_cast %36 : vector<256x1xi1> to vector<256x1xi1>
    %47 = vector.broadcast %46 : vector<256x1xi1> to vector<256x8xi1>
    %48 = vector.broadcast %cst_24 : f32 to vector<256x8xf32>
    %49 = arith.select %47, %40, %48 : vector<256x8xi1>, vector<256x8xf32>
    %50 = arith.truncf %49 : vector<256x8xf32> to vector<256x8xbf16>
    %51 = arith.truncf %38 : vector<256x8xf32> to vector<256x8xbf16>
    %52 = tpu.concatenate %45, %51, %50 in 1 : vector<256x8xbf16>, vector<256x8xbf16>, vector<256x8xbf16> -> vector<256x24xbf16>
    %c0_25 = arith.constant 0 : index
    %c0_26 = arith.constant 0 : index
    %c0_27 = arith.constant 0 : index
    %53 = vector.load %arg4[%c0_25, %c0_26, %c0_27] : memref<3x24x8xbf16, #tpu.memory_space<vmem>>, vector<1x24x8xbf16>
    %54 = vector.shape_cast %53 : vector<1x24x8xbf16> to vector<24x8xbf16>
    %cst_28 = arith.constant dense<0.000000e+00> : vector<256x8xf32>
    %55 = tpu.matmul %52, %54, %cst_28 {dimension_numbers = #tpu.dot_dimension_numbers<[1], [0], [0], [1], [0, 0, 1, 1], [], []>} : vector<256x24xbf16>, vector<24x8xbf16>, vector<256x8xf32> -> vector<256x8xf32>
    %56 = arith.addf %37, %55 : vector<256x8xf32>
    %c23 = arith.constant 23 : index
    %c0_29 = arith.constant 0 : index
    %57 = vector.load %arg11[%c23, %c0_29] : memref<304x8xf32, #tpu.memory_space<vmem>>, vector<256x8xf32>
    %c25 = arith.constant 25 : index
    %c0_30 = arith.constant 0 : index
    %58 = vector.load %arg11[%c25, %c0_30] : memref<304x8xf32, #tpu.memory_space<vmem>>, vector<256x8xf32>
    %cst_31 = arith.constant 0.000000e+00 : f32
    %59 = vector.shape_cast %34 : vector<256x1xi1> to vector<256x1xi1>
    %60 = vector.broadcast %59 : vector<256x1xi1> to vector<256x8xi1>
    %61 = vector.broadcast %cst_31 : f32 to vector<256x8xf32>
    %62 = arith.select %60, %57, %61 : vector<256x8xi1>, vector<256x8xf32>
    %63 = arith.truncf %62 : vector<256x8xf32> to vector<256x8xbf16>
    %cst_32 = arith.constant 0.000000e+00 : f32
    %64 = vector.shape_cast %36 : vector<256x1xi1> to vector<256x1xi1>
    %65 = vector.broadcast %64 : vector<256x1xi1> to vector<256x8xi1>
    %66 = vector.broadcast %cst_32 : f32 to vector<256x8xf32>
    %67 = arith.select %65, %58, %66 : vector<256x8xi1>, vector<256x8xf32>
    %68 = arith.truncf %67 : vector<256x8xf32> to vector<256x8xbf16>
    %69 = tpu.concatenate %63, %10, %68 in 1 : vector<256x8xbf16>, vector<256x8xbf16>, vector<256x8xbf16> -> vector<256x24xbf16>
    %c1 = arith.constant 1 : index
    %c0_33 = arith.constant 0 : index
    %c0_34 = arith.constant 0 : index
    %70 = vector.load %arg4[%c1, %c0_33, %c0_34] : memref<3x24x8xbf16, #tpu.memory_space<vmem>>, vector<1x24x8xbf16>
    %71 = vector.shape_cast %70 : vector<1x24x8xbf16> to vector<24x8xbf16>
    %cst_35 = arith.constant dense<0.000000e+00> : vector<256x8xf32>
    %72 = tpu.matmul %69, %71, %cst_35 {dimension_numbers = #tpu.dot_dimension_numbers<[1], [0], [0], [1], [0, 0, 1, 1], [], []>} : vector<256x24xbf16>, vector<24x8xbf16>, vector<256x8xf32> -> vector<256x8xf32>
    %73 = arith.addf %56, %72 : vector<256x8xf32>
    %c40 = arith.constant 40 : index
    %c0_36 = arith.constant 0 : index
    %74 = vector.load %arg11[%c40, %c0_36] : memref<304x8xf32, #tpu.memory_space<vmem>>, vector<256x8xf32>
    %c39 = arith.constant 39 : index
    %c0_37 = arith.constant 0 : index
    %75 = vector.load %arg11[%c39, %c0_37] : memref<304x8xf32, #tpu.memory_space<vmem>>, vector<256x8xf32>
    %c41 = arith.constant 41 : index
    %c0_38 = arith.constant 0 : index
    %76 = vector.load %arg11[%c41, %c0_38] : memref<304x8xf32, #tpu.memory_space<vmem>>, vector<256x8xf32>
    %cst_39 = arith.constant 0.000000e+00 : f32
    %77 = vector.shape_cast %34 : vector<256x1xi1> to vector<256x1xi1>
    %78 = vector.broadcast %77 : vector<256x1xi1> to vector<256x8xi1>
    %79 = vector.broadcast %cst_39 : f32 to vector<256x8xf32>
    %80 = arith.select %78, %75, %79 : vector<256x8xi1>, vector<256x8xf32>
    %81 = arith.truncf %80 : vector<256x8xf32> to vector<256x8xbf16>
    %cst_40 = arith.constant 0.000000e+00 : f32
    %82 = vector.shape_cast %36 : vector<256x1xi1> to vector<256x1xi1>
    %83 = vector.broadcast %82 : vector<256x1xi1> to vector<256x8xi1>
    %84 = vector.broadcast %cst_40 : f32 to vector<256x8xf32>
    %85 = arith.select %83, %76, %84 : vector<256x8xi1>, vector<256x8xf32>
    %86 = arith.truncf %85 : vector<256x8xf32> to vector<256x8xbf16>
    %87 = arith.truncf %74 : vector<256x8xf32> to vector<256x8xbf16>
    %88 = tpu.concatenate %81, %87, %86 in 1 : vector<256x8xbf16>, vector<256x8xbf16>, vector<256x8xbf16> -> vector<256x24xbf16>
    %c2 = arith.constant 2 : index
    %c0_41 = arith.constant 0 : index
    %c0_42 = arith.constant 0 : index
    %89 = vector.load %arg4[%c2, %c0_41, %c0_42] : memref<3x24x8xbf16, #tpu.memory_space<vmem>>, vector<1x24x8xbf16>
    %90 = vector.shape_cast %89 : vector<1x24x8xbf16> to vector<24x8xbf16>
    %cst_43 = arith.constant dense<0.000000e+00> : vector<256x8xf32>
    %91 = tpu.matmul %88, %90, %cst_43 {dimension_numbers = #tpu.dot_dimension_numbers<[1], [0], [0], [1], [0, 0, 1, 1], [], []>} : vector<256x24xbf16>, vector<24x8xbf16>, vector<256x8xf32> -> vector<256x8xf32>
    %92 = arith.addf %73, %91 : vector<256x8xf32>
    %c0_44 = arith.constant 0 : index
    %c0_45 = arith.constant 0 : index
    %93 = vector.load %arg5[%c0_44, %c0_45] : memref<1x8xf32, #tpu.memory_space<vmem>>, vector<1x8xf32>
    %94 = vector.broadcast %93 : vector<1x8xf32> to vector<256x8xf32>
    %95 = arith.addf %92, %94 : vector<256x8xf32>
    %cst_46 = arith.constant 0.000000e+00 : f32
    %96 = vector.broadcast %cst_46 : f32 to vector<256x8xf32>
    %97 = arith.maximumf %95, %96 : vector<256x8xf32>
    %98 = vector.shape_cast %97 : vector<256x8xf32> to vector<8x2x16x8xf32>
    %c0_47 = arith.constant 0 : index
    %c0_48 = arith.constant 0 : index
    %c0_49 = arith.constant 0 : index
    %c0_50 = arith.constant 0 : index
    %99 = vector.load %arg12[%c0_47, %c0_48, %c0_49, %c0_50] : memref<8x2x16x8xf32, #tpu.memory_space<vmem>>, vector<8x2x16x8xf32>
    tpu.vector_store %arg12[%c0_47, %c0_48, %c0_49, %c0_50], %98 {strides = array<i32>} : memref<8x2x16x8xf32, #tpu.memory_space<vmem>>, vector<8x2x16x8xf32>,
    %cst_51 = arith.constant 0.000000e+00 : f32
    %100 = vector.broadcast %cst_51 : f32 to vector<8x8x8xf32>
    %c0_52 = arith.constant 0 : index
    %c0_53 = arith.constant 0 : index
    %c0_54 = arith.constant 0 : index
    %c0_55 = arith.constant 0 : index
    %101 = tpu.strided_load %arg12[%c0_52, %c0_53, %c0_54, %c0_55] {strides = array<i32: 1, 1, 2, 1>} : memref<8x2x16x8xf32, #tpu.memory_space<vmem>>, vector<8x1x8x8xf32>
    %102 = vector.shape_cast %101 : vector<8x1x8x8xf32> to vector<8x8x8xf32>
    %103 = arith.addf %100, %102 : vector<8x8x8xf32>
    %c0_56 = arith.constant 0 : index
    %c0_57 = arith.constant 0 : index
    %c1_58 = arith.constant 1 : index
    %c0_59 = arith.constant 0 : index
    %104 = tpu.strided_load %arg12[%c0_56, %c0_57, %c1_58, %c0_59] {strides = array<i32: 1, 1, 2, 1>} : memref<8x2x16x8xf32, #tpu.memory_space<vmem>>, vector<8x1x8x8xf32>
    %105 = vector.shape_cast %104 : vector<8x1x8x8xf32> to vector<8x8x8xf32>
    %106 = arith.addf %103, %105 : vector<8x8x8xf32>
    %c0_60 = arith.constant 0 : index
    %c1_61 = arith.constant 1 : index
    %c0_62 = arith.constant 0 : index
    %c0_63 = arith.constant 0 : index
    %107 = tpu.strided_load %arg12[%c0_60, %c1_61, %c0_62, %c0_63] {strides = array<i32: 1, 1, 2, 1>} : memref<8x2x16x8xf32, #tpu.memory_space<vmem>>, vector<8x1x8x8xf32>
    %108 = vector.shape_cast %107 : vector<8x1x8x8xf32> to vector<8x8x8xf32>
    %109 = arith.addf %106, %108 : vector<8x8x8xf32>
    %c0_64 = arith.constant 0 : index
    %c1_65 = arith.constant 1 : index
    %c1_66 = arith.constant 1 : index
    %c0_67 = arith.constant 0 : index
    %110 = tpu.strided_load %arg12[%c0_64, %c1_65, %c1_66, %c0_67] {strides = array<i32: 1, 1, 2, 1>} : memref<8x2x16x8xf32, #tpu.memory_space<vmem>>, vector<8x1x8x8xf32>
    %111 = vector.shape_cast %110 : vector<8x1x8x8xf32> to vector<8x8x8xf32>
    %112 = arith.addf %109, %111 : vector<8x8x8xf32>
    %cst_68 = arith.constant 2.500000e-01 : f32
    %113 = vector.broadcast %cst_68 : f32 to vector<8x8x8xf32>
    %114 = arith.mulf %112, %113 : vector<8x8x8xf32>
    %115 = vector.shape_cast %114 : vector<8x8x8xf32> to vector<64x8xf32>
    %116 = arith.truncf %115 : vector<64x8xf32> to vector<64x8xbf16>
    %c0_69 = arith.constant 0 : index
    %c0_70 = arith.constant 0 : index
    %117 = vector.load %arg6[%c0_69, %c0_70] : memref<8x32xbf16, #tpu.memory_space<vmem>>, vector<8x32xbf16>
    %cst_71 = arith.constant dense<0.000000e+00> : vector<64x32xf32>
    %118 = tpu.matmul %116, %117, %cst_71 {dimension_numbers = #tpu.dot_dimension_numbers<[1], [0], [0], [1], [0, 0, 1, 1], [], []>} : vector<64x8xbf16>, vector<8x32xbf16>, vector<64x32xf32> -> vector<64x32xf32>
    %c0_72 = arith.constant 0 : index
    %c0_73 = arith.constant 0 : index
    %119 = vector.load %arg7[%c0_72, %c0_73] : memref<1x32xf32, #tpu.memory_space<vmem>>, vector<1x32xf32>
    %120 = vector.broadcast %119 : vector<1x32xf32> to vector<64x32xf32>
    %121 = arith.addf %118, %120 : vector<64x32xf32>
    %cst_74 = arith.constant 0.000000e+00 : f32
    %122 = vector.broadcast %cst_74 : f32 to vector<8x8x16xf32>
    %c0_75 = arith.constant 0 : index
    %c0_76 = arith.constant 0 : index
    %c0_77 = arith.constant 0 : index
    %c0_78 = arith.constant 0 : index
    %c0_79 = arith.constant 0 : index
    %123 = tpu.strided_load %arg1[%c0_75, %c0_76, %c0_77, %c0_78, %c0_79] {strides = array<i32: 1, 1, 1, 2, 1>} : memref<1x8x2x16x16xbf16, #tpu.memory_space<vmem>>, vector<1x8x1x8x16xbf16>
    %124 = vector.shape_cast %123 : vector<1x8x1x8x16xbf16> to vector<8x8x16xbf16>
    %125 = arith.extf %124 : vector<8x8x16xbf16> to vector<8x8x16xf32>
    %126 = arith.addf %122, %125 : vector<8x8x16xf32>
    %c0_80 = arith.constant 0 : index
    %c0_81 = arith.constant 0 : index
    %c0_82 = arith.constant 0 : index
    %c1_83 = arith.constant 1 : index
    %c0_84 = arith.constant 0 : index
    %127 = tpu.strided_load %arg1[%c0_80, %c0_81, %c0_82, %c1_83, %c0_84] {strides = array<i32: 1, 1, 1, 2, 1>} : memref<1x8x2x16x16xbf16, #tpu.memory_space<vmem>>, vector<1x8x1x8x16xbf16>
    %128 = vector.shape_cast %127 : vector<1x8x1x8x16xbf16> to vector<8x8x16xbf16>
    %129 = arith.extf %128 : vector<8x8x16xbf16> to vector<8x8x16xf32>
    %130 = arith.addf %126, %129 : vector<8x8x16xf32>
    %c0_85 = arith.constant 0 : index
    %c0_86 = arith.constant 0 : index
    %c1_87 = arith.constant 1 : index
    %c0_88 = arith.constant 0 : index
    %c0_89 = arith.constant 0 : index
    %131 = tpu.strided_load %arg1[%c0_85, %c0_86, %c1_87, %c0_88, %c0_89] {strides = array<i32: 1, 1, 1, 2, 1>} : memref<1x8x2x16x16xbf16, #tpu.memory_space<vmem>>, vector<1x8x1x8x16xbf16>
    %132 = vector.shape_cast %131 : vector<1x8x1x8x16xbf16> to vector<8x8x16xbf16>
    %133 = arith.extf %132 : vector<8x8x16xbf16> to vector<8x8x16xf32>
    %134 = arith.addf %130, %133 : vector<8x8x16xf32>
    %c0_90 = arith.constant 0 : index
    %c0_91 = arith.constant 0 : index
    %c1_92 = arith.constant 1 : index
    %c1_93 = arith.constant 1 : index
    %c0_94 = arith.constant 0 : index
    %135 = tpu.strided_load %arg1[%c0_90, %c0_91, %c1_92, %c1_93, %c0_94] {strides = array<i32: 1, 1, 1, 2, 1>} : memref<1x8x2x16x16xbf16, #tpu.memory_space<vmem>>, vector<1x8x1x8x16xbf16>
    %136 = vector.shape_cast %135 : vector<1x8x1x8x16xbf16> to vector<8x8x16xbf16>
    %137 = arith.extf %136 : vector<8x8x16xbf16> to vector<8x8x16xf32>
    %138 = arith.addf %134, %137 : vector<8x8x16xf32>
    %cst_95 = arith.constant 2.500000e-01 : f32
    %139 = vector.broadcast %cst_95 : f32 to vector<8x8x16xf32>
    %140 = arith.mulf %138, %139 : vector<8x8x16xf32>
    %141 = vector.shape_cast %140 : vector<8x8x16xf32> to vector<64x16xf32>
    %142 = arith.truncf %141 : vector<64x16xf32> to vector<64x16xbf16>
    %c0_96 = arith.constant 0 : index
    %c0_97 = arith.constant 0 : index
    %143 = vector.load %arg8[%c0_96, %c0_97] : memref<16x32xbf16, #tpu.memory_space<vmem>>, vector<16x32xbf16>
    %cst_98 = arith.constant dense<0.000000e+00> : vector<64x32xf32>
    %144 = tpu.matmul %142, %143, %cst_98 {dimension_numbers = #tpu.dot_dimension_numbers<[1], [0], [0], [1], [0, 0, 1, 1], [], []>} : vector<64x16xbf16>, vector<16x32xbf16>, vector<64x32xf32> -> vector<64x32xf32>
    %c0_99 = arith.constant 0 : index
    %c0_100 = arith.constant 0 : index
    %145 = vector.load %arg9[%c0_99, %c0_100] : memref<1x32xf32, #tpu.memory_space<vmem>>, vector<1x32xf32>
    %146 = vector.broadcast %145 : vector<1x32xf32> to vector<64x32xf32>
    %147 = arith.addf %144, %146 : vector<64x32xf32>
    %148 = arith.addf %121, %147 : vector<64x32xf32>
    %cst_101 = arith.constant 0.000000e+00 : f32
    %149 = vector.broadcast %cst_101 : f32 to vector<64x32xf32>
    %150 = arith.maximumf %148, %149 : vector<64x32xf32>
    %c0_102 = arith.constant 0 : index
    %c0_103 = arith.constant 0 : index
    %c0_104 = arith.constant 0 : index
    %151 = vector.load %arg10[%c0_102, %c0_103, %c0_104] : memref<1x64x32xf32, #tpu.memory_space<vmem>>, vector<1x64x32xf32>
    %152 = vector.shape_cast %151 : vector<1x64x32xf32> to vector<64x32xf32>
    %153 = vector.shape_cast %150 : vector<64x32xf32> to vector<1x64x32xf32>
    tpu.vector_store %arg10[%c0_102, %c0_103, %c0_104], %153 {strides = array<i32>} : memref<1x64x32xf32, #tpu.memory_space<vmem>>, vector<1x64x32xf32>,
    return
  }
  func.func @transform_0(%arg0: i32) -> (i32, i32, i32, i32, i32) {
    %c0_i32 = arith.constant 0 : i32
    %c0_i32_0 = arith.constant 0 : i32
    %c0_i32_1 = arith.constant 0 : i32
    %c0_i32_2 = arith.constant 0 : i32
    %c0_i32_3 = arith.constant 0 : i32
    return %arg0, %c0_i32, %c0_i32_0, %c0_i32_1, %c0_i32_2 : i32, i32, i32, i32, i32
  }
  func.func @transform_1(%arg0: i32) -> (i32, i32) {
    %c0_i32 = arith.constant 0 : i32
    %c0_i32_0 = arith.constant 0 : i32
    %c0_i32_1 = arith.constant 0 : i32
    return %c0_i32, %c0_i32_0 : i32, i32
  }
  func.func @transform_2(%arg0: i32) -> (i32, i32) {
    %c0_i32 = arith.constant 0 : i32
    %c0_i32_0 = arith.constant 0 : i32
    %c0_i32_1 = arith.constant 0 : i32
    return %c0_i32, %c0_i32_0 : i32, i32
  }
  func.func @transform_3(%arg0: i32) -> (i32, i32, i32) {
    %c0_i32 = arith.constant 0 : i32
    %c0_i32_0 = arith.constant 0 : i32
    %c0_i32_1 = arith.constant 0 : i32
    %c0_i32_2 = arith.constant 0 : i32
    return %c0_i32, %c0_i32_0, %c0_i32_1 : i32, i32, i32
  }
  func.func @transform_4(%arg0: i32) -> (i32, i32) {
    %c0_i32 = arith.constant 0 : i32
    %c0_i32_0 = arith.constant 0 : i32
    %c0_i32_1 = arith.constant 0 : i32
    return %c0_i32, %c0_i32_0 : i32, i32
  }
  func.func @transform_5(%arg0: i32) -> (i32, i32) {
    %c0_i32 = arith.constant 0 : i32
    %c0_i32_0 = arith.constant 0 : i32
    %c0_i32_1 = arith.constant 0 : i32
    return %c0_i32, %c0_i32_0 : i32, i32
  }
  func.func @transform_6(%arg0: i32) -> (i32, i32) {
    %c0_i32 = arith.constant 0 : i32
    %c0_i32_0 = arith.constant 0 : i32
    %c0_i32_1 = arith.constant 0 : i32
    return %c0_i32, %c0_i32_0 : i32, i32
  }
  func.func @transform_7(%arg0: i32) -> (i32, i32) {
    %c0_i32 = arith.constant 0 : i32
    %c0_i32_0 = arith.constant 0 : i32
    %c0_i32_1 = arith.constant 0 : i32
    return %c0_i32, %c0_i32_0 : i32, i32
  }
  func.func @transform_8(%arg0: i32) -> (i32, i32) {
    %c0_i32 = arith.constant 0 : i32
    %c0_i32_0 = arith.constant 0 : i32
    %c0_i32_1 = arith.constant 0 : i32
    return %c0_i32, %c0_i32_0 : i32, i32
  }
  func.func @transform_9(%arg0: i32) -> (i32, i32, i32) {
    %c0_i32 = arith.constant 0 : i32
    %c0_i32_0 = arith.constant 0 : i32
    %c0_i32_1 = arith.constant 0 : i32
    return %arg0, %c0_i32, %c0_i32_0 : i32, i32, i32
  }
}

module attributes {stable_mosaic.version = 11 : i64} {
  func.func @_bottleneck_kernel(%arg0: i32, %arg1: memref<1x8x2x16x16xbf16, #tpu.memory_space<vmem>>, %arg2: memref<16x8xbf16, #tpu.memory_space<vmem>>, %arg3: memref<1x8xf32, #tpu.memory_space<vmem>>, %arg4: memref<3x24x8xbf16, #tpu.memory_space<vmem>>, %arg5: memref<1x8xf32, #tpu.memory_space<vmem>>, %arg6: memref<8x32xbf16, #tpu.memory_space<vmem>>, %arg7: memref<1x32xf32, #tpu.memory_space<vmem>>, %arg8: memref<16x32xbf16, #tpu.memory_space<vmem>>, %arg9: memref<1x32xf32, #tpu.memory_space<vmem>>, %arg10: memref<1x64x32xf32, #tpu.memory_space<vmem>>, %arg11: memref<304x8xf32, #tpu.memory_space<vmem>>, %arg12: memref<8x2x16x8xf32, #tpu.memory_space<vmem>>) attributes {dimension_semantics = [#tpu.dimension_semantics<parallel>], iteration_bounds = array<i64: 2>, scalar_prefetch = 0 : i64, scratch_operands = 2 : i64, tpu.core_type = #tpu.core_type<tc>, window_params = [{transform_indices = @transform_0, window_bounds = array<i64: 1, 8, 2, 16, 16>}, {pipeline_mode = #tpu.pipeline_mode<synchronous>, transform_indices = @transform_1, window_bounds = array<i64: 16, 8>}, {pipeline_mode = #tpu.pipeline_mode<synchronous>, transform_indices = @transform_2, window_bounds = array<i64: 1, 8>}, {pipeline_mode = #tpu.pipeline_mode<synchronous>, transform_indices = @transform_3, window_bounds = array<i64: 3, 24, 8>}, {pipeline_mode = #tpu.pipeline_mode<synchronous>, transform_indices = @transform_4, window_bounds = array<i64: 1, 8>}, {pipeline_mode = #tpu.pipeline_mode<synchronous>, transform_indices = @transform_5, window_bounds = array<i64: 8, 32>}, {pipeline_mode = #tpu.pipeline_mode<synchronous>, transform_indices = @transform_6, window_bounds = array<i64: 1, 32>}, {pipeline_mode = #tpu.pipeline_mode<synchronous>, transform_indices = @transform_7, window_bounds = array<i64: 16, 32>}, {pipeline_mode = #tpu.pipeline_mode<synchronous>, transform_indices = @transform_8, window_bounds = array<i64: 1, 32>}, {transform_indices = @transform_9, window_bounds = array<i64: 1, 64, 32>}]} {
    %c0 = arith.constant 0 : index
    %c0_0 = arith.constant 0 : index
    %c0_1 = arith.constant 0 : index
    %c0_2 = arith.constant 0 : index
    %c0_3 = arith.constant 0 : index
    %0 = vector.load %arg1[%c0, %c0_0, %c0_1, %c0_2, %c0_3] : memref<1x8x2x16x16xbf16, #tpu.memory_space<vmem>>, vector<1x8x2x16x16xbf16>
    %1 = vector.shape_cast %0 : vector<1x8x2x16x16xbf16> to vector<8x2x16x16xbf16>
    %2 = vector.shape_cast %1 : vector<8x2x16x16xbf16> to vector<256x16xbf16>
    %c0_4 = arith.constant 0 : index
    %c0_5 = arith.constant 0 : index
    %3 = vector.load %arg2[%c0_4, %c0_5] : memref<16x8xbf16, #tpu.memory_space<vmem>>, vector<16x8xbf16>
    %cst = arith.constant dense<0.000000e+00> : vector<256x8xf32>
    %4 = tpu.matmul %2, %3, %cst {dimension_numbers = #tpu.dot_dimension_numbers<[1], [0], [0], [1], [0, 0, 1, 1], [], []>} : vector<256x16xbf16>, vector<16x8xbf16>, vector<256x8xf32> -> vector<256x8xf32>
    %c0_6 = arith.constant 0 : index
    %c0_7 = arith.constant 0 : index
    %5 = vector.load %arg3[%c0_6, %c0_7] : memref<1x8xf32, #tpu.memory_space<vmem>>, vector<1x8xf32>
    %6 = vector.broadcast %5 : vector<1x8xf32> to vector<256x8xf32>
    %7 = arith.addf %4, %6 : vector<256x8xf32>
    %cst_8 = arith.constant 0.000000e+00 : f32
    %8 = vector.broadcast %cst_8 : f32 to vector<256x8xf32>
    %9 = arith.maximumf %7, %8 : vector<256x8xf32>
    %10 = arith.truncf %9 : vector<256x8xf32> to vector<256x8xbf16>
    %cst_9 = arith.constant 0.000000e+00 : f32
    %11 = vector.broadcast %cst_9 : f32 to vector<24x8xf32>
    %c0_10 = arith.constant 0 : index
    %c0_11 = arith.constant 0 : index
    %12 = vector.load %arg11[%c0_10, %c0_11] : memref<304x8xf32, #tpu.memory_space<vmem>>, vector<24x8xf32>
    tpu.vector_store %arg11[%c0_10, %c0_11], %11 {strides = array<i32>} : memref<304x8xf32, #tpu.memory_space<vmem>>, vector<24x8xf32>,
    %cst_12 = arith.constant 0.000000e+00 : f32
    %13 = vector.broadcast %cst_12 : f32 to vector<24x8xf32>
    %c280 = arith.constant 280 : index
    %c0_13 = arith.constant 0 : index
    %14 = vector.load %arg11[%c280, %c0_13] : memref<304x8xf32, #tpu.memory_space<vmem>>, vector<24x8xf32>
    tpu.vector_store %arg11[%c280, %c0_13], %13 {strides = array<i32>} : memref<304x8xf32, #tpu.memory_space<vmem>>, vector<24x8xf32>,
    %c24 = arith.constant 24 : index
    %c0_14 = arith.constant 0 : index
    %15 = vector.load %arg11[%c24, %c0_14] : memref<304x8xf32, #tpu.memory_space<vmem>>, vector<256x8xf32>
    tpu.vector_store %arg11[%c24, %c0_14], %9 {strides = array<i32>} : memref<304x8xf32, #tpu.memory_space<vmem>>, vector<256x8xf32>,
    %16 = tpu.iota {dimensions = array<i32: 0>} : vector<256x1xi32>
    %c16_i32 = arith.constant 16 : i32
    %c0_i32 = arith.constant 0 : i32
    %17 = arith.cmpi eq, %c16_i32, %c0_i32 : i32
    %c1_i32 = arith.constant 1 : i32
    %18 = arith.select %17, %c1_i32, %c16_i32 : i32
    %19 = vector.broadcast %18 : i32 to vector<256x1xi32>
    %20 = arith.remsi %16, %19 : vector<256x1xi32>
    %c0_i32_15 = arith.constant 0 : i32
    %21 = vector.broadcast %c0_i32_15 : i32 to vector<256x1xi32>
    %22 = arith.cmpi ne, %20, %21 : vector<256x1xi32>
    %c0_i32_16 = arith.constant 0 : i32
    %23 = vector.broadcast %c0_i32_16 : i32 to vector<256x1xi32>
    %24 = arith.cmpi slt, %20, %23 : vector<256x1xi32>
    %c0_i32_17 = arith.constant 0 : i32
    %25 = arith.cmpi slt, %18, %c0_i32_17 : i32
    %26 = vector.broadcast %25 : i1 to vector<256x1xi1>
    %27 = vector.broadcast %26 : vector<256x1xi1> to vector<256x1xi1>
    %28 = arith.xori %24, %27 : vector<256x1xi1>
    %29 = arith.andi %28, %22 : vector<256x1xi1>
    %30 = vector.broadcast %18 : i32 to vector<256x1xi32>
    %31 = arith.addi %20, %30 : vector<256x1xi32>
    %32 = arith.select %29, %31, %20 : vector<256x1xi1>, vector<256x1xi32>
    %c1_i32_18 = arith.constant 1 : i32
    %33 = vector.broadcast %c1_i32_18 : i32 to vector<256x1xi32>
    %34 = arith.cmpi sge, %32, %33 : vector<256x1xi32>
    %c15_i32 = arith.constant 15 : i32
    %35 = vector.broadcast %c15_i32 : i32 to vector<256x1xi32>
    %36 = arith.cmpi slt, %32, %35 : vector<256x1xi32>
    %cst_19 = arith.constant 0.000000e+00 : f32
    %37 = vector.broadcast %cst_19 : f32 to vector<256x8xf32>
    %c8 = arith.constant 8 : index
    %c0_20 = arith.constant 0 : index
    %38 = vector.load %arg11[%c8, %c0_20] : memref<304x8xf32, #tpu.memory_space<vmem>>, vector<256x8xf32>
    %c7 = arith.constant 7 : index
    %c0_21 = arith.constant 0 : index
    %39 = vector.load %arg11[%c7, %c0_21] : memref<304x8xf32, #tpu.memory_space<vmem>>, vector<256x8xf32>
    %c9 = arith.constant 9 : index
    %c0_22 = arith.constant 0 : index
    %40 = vector.load %arg11[%c9, %c0_22] : memref<304x8xf32, #tpu.memory_space<vmem>>, vector<256x8xf32>
    %cst_23 = arith.constant 0.000000e+00 : f32
    %41 = vector.shape_cast %34 : vector<256x1xi1> to vector<256x1xi1>
    %42 = vector.broadcast %41 : vector<256x1xi1> to vector<256x8xi1>
    %43 = vector.broadcast %cst_23 : f32 to vector<256x8xf32>
    %44 = arith.select %42, %39, %43 : vector<256x8xi1>, vector<256x8xf32>
    %45 = arith.truncf %44 : vector<256x8xf32> to vector<256x8xbf16>
    %cst_24 = arith.constant 0.000000e+00 : f32
    %46 = vector.shape_cast %36 : vector<256x1xi1> to vector<256x1xi1>
    %47 = vector.broadcast %46 : vector<256x1xi1> to vector<256x8xi1>
    %48 = vector.broadcast %cst_24 : f32 to vector<256x8xf32>
    %49 = arith.select %47, %40, %48 : vector<256x8xi1>, vector<256x8xf32>
    %50 = arith.truncf %49 : vector<256x8xf32> to vector<256x8xbf16>
    %51 = arith.truncf %38 : vector<256x8xf32> to vector<256x8xbf16>
    %52 = tpu.concatenate %45, %51, %50 in 1 : vector<256x8xbf16>, vector<256x8xbf16>, vector<256x8xbf16> -> vector<256x24xbf16>
    %c0_25 = arith.constant 0 : index
    %c0_26 = arith.constant 0 : index
    %c0_27 = arith.constant 0 : index
    %53 = vector.load %arg4[%c0_25, %c0_26, %c0_27] : memref<3x24x8xbf16, #tpu.memory_space<vmem>>, vector<1x24x8xbf16>
    %54 = vector.shape_cast %53 : vector<1x24x8xbf16> to vector<24x8xbf16>
    %cst_28 = arith.constant dense<0.000000e+00> : vector<256x8xf32>
    %55 = tpu.matmul %52, %54, %cst_28 {dimension_numbers = #tpu.dot_dimension_numbers<[1], [0], [0], [1], [0, 0, 1, 1], [], []>} : vector<256x24xbf16>, vector<24x8xbf16>, vector<256x8xf32> -> vector<256x8xf32>
    %56 = arith.addf %37, %55 : vector<256x8xf32>
    %c23 = arith.constant 23 : index
    %c0_29 = arith.constant 0 : index
    %57 = vector.load %arg11[%c23, %c0_29] : memref<304x8xf32, #tpu.memory_space<vmem>>, vector<256x8xf32>
    %c25 = arith.constant 25 : index
    %c0_30 = arith.constant 0 : index
    %58 = vector.load %arg11[%c25, %c0_30] : memref<304x8xf32, #tpu.memory_space<vmem>>, vector<256x8xf32>
    %cst_31 = arith.constant 0.000000e+00 : f32
    %59 = vector.shape_cast %34 : vector<256x1xi1> to vector<256x1xi1>
    %60 = vector.broadcast %59 : vector<256x1xi1> to vector<256x8xi1>
    %61 = vector.broadcast %cst_31 : f32 to vector<256x8xf32>
    %62 = arith.select %60, %57, %61 : vector<256x8xi1>, vector<256x8xf32>
    %63 = arith.truncf %62 : vector<256x8xf32> to vector<256x8xbf16>
    %cst_32 = arith.constant 0.000000e+00 : f32
    %64 = vector.shape_cast %36 : vector<256x1xi1> to vector<256x1xi1>
    %65 = vector.broadcast %64 : vector<256x1xi1> to vector<256x8xi1>
    %66 = vector.broadcast %cst_32 : f32 to vector<256x8xf32>
    %67 = arith.select %65, %58, %66 : vector<256x8xi1>, vector<256x8xf32>
    %68 = arith.truncf %67 : vector<256x8xf32> to vector<256x8xbf16>
    %69 = tpu.concatenate %63, %10, %68 in 1 : vector<256x8xbf16>, vector<256x8xbf16>, vector<256x8xbf16> -> vector<256x24xbf16>
    %c1 = arith.constant 1 : index
    %c0_33 = arith.constant 0 : index
    %c0_34 = arith.constant 0 : index
    %70 = vector.load %arg4[%c1, %c0_33, %c0_34] : memref<3x24x8xbf16, #tpu.memory_space<vmem>>, vector<1x24x8xbf16>
    %71 = vector.shape_cast %70 : vector<1x24x8xbf16> to vector<24x8xbf16>
    %cst_35 = arith.constant dense<0.000000e+00> : vector<256x8xf32>
    %72 = tpu.matmul %69, %71, %cst_35 {dimension_numbers = #tpu.dot_dimension_numbers<[1], [0], [0], [1], [0, 0, 1, 1], [], []>} : vector<256x24xbf16>, vector<24x8xbf16>, vector<256x8xf32> -> vector<256x8xf32>
    %73 = arith.addf %56, %72 : vector<256x8xf32>
    %c40 = arith.constant 40 : index
    %c0_36 = arith.constant 0 : index
    %74 = vector.load %arg11[%c40, %c0_36] : memref<304x8xf32, #tpu.memory_space<vmem>>, vector<256x8xf32>
    %c39 = arith.constant 39 : index
    %c0_37 = arith.constant 0 : index
    %75 = vector.load %arg11[%c39, %c0_37] : memref<304x8xf32, #tpu.memory_space<vmem>>, vector<256x8xf32>
    %c41 = arith.constant 41 : index
    %c0_38 = arith.constant 0 : index
    %76 = vector.load %arg11[%c41, %c0_38] : memref<304x8xf32, #tpu.memory_space<vmem>>, vector<256x8xf32>
    %cst_39 = arith.constant 0.000000e+00 : f32
    %77 = vector.shape_cast %34 : vector<256x1xi1> to vector<256x1xi1>
    %78 = vector.broadcast %77 : vector<256x1xi1> to vector<256x8xi1>
    %79 = vector.broadcast %cst_39 : f32 to vector<256x8xf32>
    %80 = arith.select %78, %75, %79 : vector<256x8xi1>, vector<256x8xf32>
    %81 = arith.truncf %80 : vector<256x8xf32> to vector<256x8xbf16>
    %cst_40 = arith.constant 0.000000e+00 : f32
    %82 = vector.shape_cast %36 : vector<256x1xi1> to vector<256x1xi1>
    %83 = vector.broadcast %82 : vector<256x1xi1> to vector<256x8xi1>
    %84 = vector.broadcast %cst_40 : f32 to vector<256x8xf32>
    %85 = arith.select %83, %76, %84 : vector<256x8xi1>, vector<256x8xf32>
    %86 = arith.truncf %85 : vector<256x8xf32> to vector<256x8xbf16>
    %87 = arith.truncf %74 : vector<256x8xf32> to vector<256x8xbf16>
    %88 = tpu.concatenate %81, %87, %86 in 1 : vector<256x8xbf16>, vector<256x8xbf16>, vector<256x8xbf16> -> vector<256x24xbf16>
    %c2 = arith.constant 2 : index
    %c0_41 = arith.constant 0 : index
    %c0_42 = arith.constant 0 : index
    %89 = vector.load %arg4[%c2, %c0_41, %c0_42] : memref<3x24x8xbf16, #tpu.memory_space<vmem>>, vector<1x24x8xbf16>
    %90 = vector.shape_cast %89 : vector<1x24x8xbf16> to vector<24x8xbf16>
    %cst_43 = arith.constant dense<0.000000e+00> : vector<256x8xf32>
    %91 = tpu.matmul %88, %90, %cst_43 {dimension_numbers = #tpu.dot_dimension_numbers<[1], [0], [0], [1], [0, 0, 1, 1], [], []>} : vector<256x24xbf16>, vector<24x8xbf16>, vector<256x8xf32> -> vector<256x8xf32>
    %92 = arith.addf %73, %91 : vector<256x8xf32>
    %c0_44 = arith.constant 0 : index
    %c0_45 = arith.constant 0 : index
    %93 = vector.load %arg5[%c0_44, %c0_45] : memref<1x8xf32, #tpu.memory_space<vmem>>, vector<1x8xf32>
    %94 = vector.broadcast %93 : vector<1x8xf32> to vector<256x8xf32>
    %95 = arith.addf %92, %94 : vector<256x8xf32>
    %cst_46 = arith.constant 0.000000e+00 : f32
    %96 = vector.broadcast %cst_46 : f32 to vector<256x8xf32>
    %97 = arith.maximumf %95, %96 : vector<256x8xf32>
    %98 = vector.shape_cast %97 : vector<256x8xf32> to vector<8x2x16x8xf32>
    %c0_47 = arith.constant 0 : index
    %c0_48 = arith.constant 0 : index
    %c0_49 = arith.constant 0 : index
    %c0_50 = arith.constant 0 : index
    %99 = vector.load %arg12[%c0_47, %c0_48, %c0_49, %c0_50] : memref<8x2x16x8xf32, #tpu.memory_space<vmem>>, vector<8x2x16x8xf32>
    tpu.vector_store %arg12[%c0_47, %c0_48, %c0_49, %c0_50], %98 {strides = array<i32>} : memref<8x2x16x8xf32, #tpu.memory_space<vmem>>, vector<8x2x16x8xf32>,
    %cst_51 = arith.constant 0.000000e+00 : f32
    %100 = vector.broadcast %cst_51 : f32 to vector<8x8x8xf32>
    %c0_52 = arith.constant 0 : index
    %c0_53 = arith.constant 0 : index
    %c0_54 = arith.constant 0 : index
    %c0_55 = arith.constant 0 : index
    %101 = tpu.strided_load %arg12[%c0_52, %c0_53, %c0_54, %c0_55] {strides = array<i32: 1, 1, 2, 1>} : memref<8x2x16x8xf32, #tpu.memory_space<vmem>>, vector<8x1x8x8xf32>
    %102 = vector.shape_cast %101 : vector<8x1x8x8xf32> to vector<8x8x8xf32>
    %103 = arith.addf %100, %102 : vector<8x8x8xf32>
    %c0_56 = arith.constant 0 : index
    %c0_57 = arith.constant 0 : index
    %c1_58 = arith.constant 1 : index
    %c0_59 = arith.constant 0 : index
    %104 = tpu.strided_load %arg12[%c0_56, %c0_57, %c1_58, %c0_59] {strides = array<i32: 1, 1, 2, 1>} : memref<8x2x16x8xf32, #tpu.memory_space<vmem>>, vector<8x1x8x8xf32>
    %105 = vector.shape_cast %104 : vector<8x1x8x8xf32> to vector<8x8x8xf32>
    %106 = arith.addf %103, %105 : vector<8x8x8xf32>
    %c0_60 = arith.constant 0 : index
    %c1_61 = arith.constant 1 : index
    %c0_62 = arith.constant 0 : index
    %c0_63 = arith.constant 0 : index
    %107 = tpu.strided_load %arg12[%c0_60, %c1_61, %c0_62, %c0_63] {strides = array<i32: 1, 1, 2, 1>} : memref<8x2x16x8xf32, #tpu.memory_space<vmem>>, vector<8x1x8x8xf32>
    %108 = vector.shape_cast %107 : vector<8x1x8x8xf32> to vector<8x8x8xf32>
    %109 = arith.addf %106, %108 : vector<8x8x8xf32>
    %c0_64 = arith.constant 0 : index
    %c1_65 = arith.constant 1 : index
    %c1_66 = arith.constant 1 : index
    %c0_67 = arith.constant 0 : index
    %110 = tpu.strided_load %arg12[%c0_64, %c1_65, %c1_66, %c0_67] {strides = array<i32: 1, 1, 2, 1>} : memref<8x2x16x8xf32, #tpu.memory_space<vmem>>, vector<8x1x8x8xf32>
    %111 = vector.shape_cast %110 : vector<8x1x8x8xf32> to vector<8x8x8xf32>
    %112 = arith.addf %109, %111 : vector<8x8x8xf32>
    %cst_68 = arith.constant 2.500000e-01 : f32
    %113 = vector.broadcast %cst_68 : f32 to vector<8x8x8xf32>
    %114 = arith.mulf %112, %113 : vector<8x8x8xf32>
    %115 = vector.shape_cast %114 : vector<8x8x8xf32> to vector<64x8xf32>
    %116 = arith.truncf %115 : vector<64x8xf32> to vector<64x8xbf16>
    %c0_69 = arith.constant 0 : index
    %c0_70 = arith.constant 0 : index
    %117 = vector.load %arg6[%c0_69, %c0_70] : memref<8x32xbf16, #tpu.memory_space<vmem>>, vector<8x32xbf16>
    %cst_71 = arith.constant dense<0.000000e+00> : vector<64x32xf32>
    %118 = tpu.matmul %116, %117, %cst_71 {dimension_numbers = #tpu.dot_dimension_numbers<[1], [0], [0], [1], [0, 0, 1, 1], [], []>} : vector<64x8xbf16>, vector<8x32xbf16>, vector<64x32xf32> -> vector<64x32xf32>
    %c0_72 = arith.constant 0 : index
    %c0_73 = arith.constant 0 : index
    %119 = vector.load %arg7[%c0_72, %c0_73] : memref<1x32xf32, #tpu.memory_space<vmem>>, vector<1x32xf32>
    %120 = vector.broadcast %119 : vector<1x32xf32> to vector<64x32xf32>
    %121 = arith.addf %118, %120 : vector<64x32xf32>
    %cst_74 = arith.constant 0.000000e+00 : f32
    %122 = vector.broadcast %cst_74 : f32 to vector<8x8x16xf32>
    %c0_75 = arith.constant 0 : index
    %c0_76 = arith.constant 0 : index
    %c0_77 = arith.constant 0 : index
    %c0_78 = arith.constant 0 : index
    %c0_79 = arith.constant 0 : index
    %123 = tpu.strided_load %arg1[%c0_75, %c0_76, %c0_77, %c0_78, %c0_79] {strides = array<i32: 1, 1, 1, 2, 1>} : memref<1x8x2x16x16xbf16, #tpu.memory_space<vmem>>, vector<1x8x1x8x16xbf16>
    %124 = vector.shape_cast %123 : vector<1x8x1x8x16xbf16> to vector<8x8x16xbf16>
    %125 = arith.extf %124 : vector<8x8x16xbf16> to vector<8x8x16xf32>
    %126 = arith.addf %122, %125 : vector<8x8x16xf32>
    %c0_80 = arith.constant 0 : index
    %c0_81 = arith.constant 0 : index
    %c0_82 = arith.constant 0 : index
    %c1_83 = arith.constant 1 : index
    %c0_84 = arith.constant 0 : index
    %127 = tpu.strided_load %arg1[%c0_80, %c0_81, %c0_82, %c1_83, %c0_84] {strides = array<i32: 1, 1, 1, 2, 1>} : memref<1x8x2x16x16xbf16, #tpu.memory_space<vmem>>, vector<1x8x1x8x16xbf16>
    %128 = vector.shape_cast %127 : vector<1x8x1x8x16xbf16> to vector<8x8x16xbf16>
    %129 = arith.extf %128 : vector<8x8x16xbf16> to vector<8x8x16xf32>
    %130 = arith.addf %126, %129 : vector<8x8x16xf32>
    %c0_85 = arith.constant 0 : index
    %c0_86 = arith.constant 0 : index
    %c1_87 = arith.constant 1 : index
    %c0_88 = arith.constant 0 : index
    %c0_89 = arith.constant 0 : index
    %131 = tpu.strided_load %arg1[%c0_85, %c0_86, %c1_87, %c0_88, %c0_89] {strides = array<i32: 1, 1, 1, 2, 1>} : memref<1x8x2x16x16xbf16, #tpu.memory_space<vmem>>, vector<1x8x1x8x16xbf16>
    %132 = vector.shape_cast %131 : vector<1x8x1x8x16xbf16> to vector<8x8x16xbf16>
    %133 = arith.extf %132 : vector<8x8x16xbf16> to vector<8x8x16xf32>
    %134 = arith.addf %130, %133 : vector<8x8x16xf32>
    %c0_90 = arith.constant 0 : index
    %c0_91 = arith.constant 0 : index
    %c1_92 = arith.constant 1 : index
    %c1_93 = arith.constant 1 : index
    %c0_94 = arith.constant 0 : index
    %135 = tpu.strided_load %arg1[%c0_90, %c0_91, %c1_92, %c1_93, %c0_94] {strides = array<i32: 1, 1, 1, 2, 1>} : memref<1x8x2x16x16xbf16, #tpu.memory_space<vmem>>, vector<1x8x1x8x16xbf16>
    %136 = vector.shape_cast %135 : vector<1x8x1x8x16xbf16> to vector<8x8x16xbf16>
    %137 = arith.extf %136 : vector<8x8x16xbf16> to vector<8x8x16xf32>
    %138 = arith.addf %134, %137 : vector<8x8x16xf32>
    %cst_95 = arith.constant 2.500000e-01 : f32
    %139 = vector.broadcast %cst_95 : f32 to vector<8x8x16xf32>
    %140 = arith.mulf %138, %139 : vector<8x8x16xf32>
    %141 = vector.shape_cast %140 : vector<8x8x16xf32> to vector<64x16xf32>
    %142 = arith.truncf %141 : vector<64x16xf32> to vector<64x16xbf16>
    %c0_96 = arith.constant 0 : index
    %c0_97 = arith.constant 0 : index
    %143 = vector.load %arg8[%c0_96, %c0_97] : memref<16x32xbf16, #tpu.memory_space<vmem>>, vector<16x32xbf16>
    %cst_98 = arith.constant dense<0.000000e+00> : vector<64x32xf32>
    %144 = tpu.matmul %142, %143, %cst_98 {dimension_numbers = #tpu.dot_dimension_numbers<[1], [0], [0], [1], [0, 0, 1, 1], [], []>} : vector<64x16xbf16>, vector<16x32xbf16>, vector<64x32xf32> -> vector<64x32xf32>
    %c0_99 = arith.constant 0 : index
    %c0_100 = arith.constant 0 : index
    %145 = vector.load %arg9[%c0_99, %c0_100] : memref<1x32xf32, #tpu.memory_space<vmem>>, vector<1x32xf32>
    %146 = vector.broadcast %145 : vector<1x32xf32> to vector<64x32xf32>
    %147 = arith.addf %144, %146 : vector<64x32xf32>
    %148 = arith.addf %121, %147 : vector<64x32xf32>
    %cst_101 = arith.constant 0.000000e+00 : f32
    %149 = vector.broadcast %cst_101 : f32 to vector<64x32xf32>
    %150 = arith.maximumf %148, %149 : vector<64x32xf32>
    %c0_102 = arith.constant 0 : index
    %c0_103 = arith.constant 0 : index
    %c0_104 = arith.constant 0 : index
    %151 = vector.load %arg10[%c0_102, %c0_103, %c0_104] : memref<1x64x32xf32, #tpu.memory_space<vmem>>, vector<1x64x32xf32>
    %152 = vector.shape_cast %151 : vector<1x64x32xf32> to vector<64x32xf32>
    %153 = vector.shape_cast %150 : vector<64x32xf32> to vector<1x64x32xf32>
    tpu.vector_store %arg10[%c0_102, %c0_103, %c0_104], %153 {strides = array<i32>} : memref<1x64x32xf32, #tpu.memory_space<vmem>>, vector<1x64x32xf32>,
    return
  }
  func.func @transform_0(%arg0: i32) -> (i32, i32, i32, i32, i32) {
    %c0_i32 = arith.constant 0 : i32
    %c0_i32_0 = arith.constant 0 : i32
    %c0_i32_1 = arith.constant 0 : i32
    %c0_i32_2 = arith.constant 0 : i32
    %c0_i32_3 = arith.constant 0 : i32
    return %arg0, %c0_i32, %c0_i32_0, %c0_i32_1, %c0_i32_2 : i32, i32, i32, i32, i32
  }
  func.func @transform_1(%arg0: i32) -> (i32, i32) {
    %c0_i32 = arith.constant 0 : i32
    %c0_i32_0 = arith.constant 0 : i32
    %c0_i32_1 = arith.constant 0 : i32
    return %c0_i32, %c0_i32_0 : i32, i32
  }
  func.func @transform_2(%arg0: i32) -> (i32, i32) {
    %c0_i32 = arith.constant 0 : i32
    %c0_i32_0 = arith.constant 0 : i32
    %c0_i32_1 = arith.constant 0 : i32
    return %c0_i32, %c0_i32_0 : i32, i32
  }
  func.func @transform_3(%arg0: i32) -> (i32, i32, i32) {
    %c0_i32 = arith.constant 0 : i32
    %c0_i32_0 = arith.constant 0 : i32
    %c0_i32_1 = arith.constant 0 : i32
    %c0_i32_2 = arith.constant 0 : i32
    return %c0_i32, %c0_i32_0, %c0_i32_1 : i32, i32, i32
  }
  func.func @transform_4(%arg0: i32) -> (i32, i32) {
    %c0_i32 = arith.constant 0 : i32
    %c0_i32_0 = arith.constant 0 : i32
    %c0_i32_1 = arith.constant 0 : i32
    return %c0_i32, %c0_i32_0 : i32, i32
  }
  func.func @transform_5(%arg0: i32) -> (i32, i32) {
    %c0_i32 = arith.constant 0 : i32
    %c0_i32_0 = arith.constant 0 : i32
    %c0_i32_1 = arith.constant 0 : i32
    return %c0_i32, %c0_i32_0 : i32, i32
  }
  func.func @transform_6(%arg0: i32) -> (i32, i32) {
    %c0_i32 = arith.constant 0 : i32
    %c0_i32_0 = arith.constant 0 : i32
    %c0_i32_1 = arith.constant 0 : i32
    return %c0_i32, %c0_i32_0 : i32, i32
  }
  func.func @transform_7(%arg0: i32) -> (i32, i32) {
    %c0_i32 = arith.constant 0 : i32
    %c0_i32_0 = arith.constant 0 : i32
    %c0_i32_1 = arith.constant 0 : i32
    return %c0_i32, %c0_i32_0 : i32, i32
  }
  func.func @transform_8(%arg0: i32) -> (i32, i32) {
    %c0_i32 = arith.constant 0 : i32
    %c0_i32_0 = arith.constant 0 : i32
    %c0_i32_1 = arith.constant 0 : i32
    return %c0_i32, %c0_i32_0 : i32, i32
  }
  func.func @transform_9(%arg0: i32) -> (i32, i32, i32) {
    %c0_i32 = arith.constant 0 : i32
    %c0_i32_0 = arith.constant 0 : i32
    %c0_i32_1 = arith.constant 0 : i32
    return %arg0, %c0_i32, %c0_i32_0 : i32, i32, i32
  }
}

module attributes {stable_mosaic.version = 11 : i64} {
  func.func @_bottleneck_kernel(%arg0: i32, %arg1: memref<1x8x2x16x16xbf16, #tpu.memory_space<vmem>>, %arg2: memref<16x8xbf16, #tpu.memory_space<vmem>>, %arg3: memref<1x8xf32, #tpu.memory_space<vmem>>, %arg4: memref<3x24x8xbf16, #tpu.memory_space<vmem>>, %arg5: memref<1x8xf32, #tpu.memory_space<vmem>>, %arg6: memref<8x32xbf16, #tpu.memory_space<vmem>>, %arg7: memref<1x32xf32, #tpu.memory_space<vmem>>, %arg8: memref<16x32xbf16, #tpu.memory_space<vmem>>, %arg9: memref<1x32xf32, #tpu.memory_space<vmem>>, %arg10: memref<64x256xf32, #tpu.memory_space<vmem>>, %arg11: memref<1x64x32xf32, #tpu.memory_space<vmem>>, %arg12: memref<304x8xf32, #tpu.memory_space<vmem>>) attributes {dimension_semantics = [#tpu.dimension_semantics<parallel>], iteration_bounds = array<i64: 2>, scalar_prefetch = 0 : i64, scratch_operands = 1 : i64, tpu.core_type = #tpu.core_type<tc>, window_params = [{transform_indices = @transform_0, window_bounds = array<i64: 1, 8, 2, 16, 16>}, {pipeline_mode = #tpu.pipeline_mode<synchronous>, transform_indices = @transform_1, window_bounds = array<i64: 16, 8>}, {pipeline_mode = #tpu.pipeline_mode<synchronous>, transform_indices = @transform_2, window_bounds = array<i64: 1, 8>}, {pipeline_mode = #tpu.pipeline_mode<synchronous>, transform_indices = @transform_3, window_bounds = array<i64: 3, 24, 8>}, {pipeline_mode = #tpu.pipeline_mode<synchronous>, transform_indices = @transform_4, window_bounds = array<i64: 1, 8>}, {pipeline_mode = #tpu.pipeline_mode<synchronous>, transform_indices = @transform_5, window_bounds = array<i64: 8, 32>}, {pipeline_mode = #tpu.pipeline_mode<synchronous>, transform_indices = @transform_6, window_bounds = array<i64: 1, 32>}, {pipeline_mode = #tpu.pipeline_mode<synchronous>, transform_indices = @transform_7, window_bounds = array<i64: 16, 32>}, {pipeline_mode = #tpu.pipeline_mode<synchronous>, transform_indices = @transform_8, window_bounds = array<i64: 1, 32>}, {pipeline_mode = #tpu.pipeline_mode<synchronous>, transform_indices = @transform_9, window_bounds = array<i64: 64, 256>}, {transform_indices = @transform_10, window_bounds = array<i64: 1, 64, 32>}]} {
    %c0 = arith.constant 0 : index
    %c0_0 = arith.constant 0 : index
    %c0_1 = arith.constant 0 : index
    %c0_2 = arith.constant 0 : index
    %c0_3 = arith.constant 0 : index
    %0 = vector.load %arg1[%c0, %c0_0, %c0_1, %c0_2, %c0_3] : memref<1x8x2x16x16xbf16, #tpu.memory_space<vmem>>, vector<1x8x2x16x16xbf16>
    %1 = vector.shape_cast %0 : vector<1x8x2x16x16xbf16> to vector<8x2x16x16xbf16>
    %2 = vector.shape_cast %1 : vector<8x2x16x16xbf16> to vector<256x16xbf16>
    %c0_4 = arith.constant 0 : index
    %c0_5 = arith.constant 0 : index
    %3 = vector.load %arg2[%c0_4, %c0_5] : memref<16x8xbf16, #tpu.memory_space<vmem>>, vector<16x8xbf16>
    %cst = arith.constant dense<0.000000e+00> : vector<256x8xf32>
    %4 = tpu.matmul %2, %3, %cst {dimension_numbers = #tpu.dot_dimension_numbers<[1], [0], [0], [1], [0, 0, 1, 1], [], []>} : vector<256x16xbf16>, vector<16x8xbf16>, vector<256x8xf32> -> vector<256x8xf32>
    %c0_6 = arith.constant 0 : index
    %c0_7 = arith.constant 0 : index
    %5 = vector.load %arg3[%c0_6, %c0_7] : memref<1x8xf32, #tpu.memory_space<vmem>>, vector<1x8xf32>
    %6 = vector.broadcast %5 : vector<1x8xf32> to vector<256x8xf32>
    %7 = arith.addf %4, %6 : vector<256x8xf32>
    %cst_8 = arith.constant 0.000000e+00 : f32
    %8 = vector.broadcast %cst_8 : f32 to vector<256x8xf32>
    %9 = arith.maximumf %7, %8 : vector<256x8xf32>
    %10 = arith.truncf %9 : vector<256x8xf32> to vector<256x8xbf16>
    %cst_9 = arith.constant 0.000000e+00 : f32
    %11 = vector.broadcast %cst_9 : f32 to vector<24x8xf32>
    %c0_10 = arith.constant 0 : index
    %c0_11 = arith.constant 0 : index
    %12 = vector.load %arg12[%c0_10, %c0_11] : memref<304x8xf32, #tpu.memory_space<vmem>>, vector<24x8xf32>
    tpu.vector_store %arg12[%c0_10, %c0_11], %11 {strides = array<i32>} : memref<304x8xf32, #tpu.memory_space<vmem>>, vector<24x8xf32>,
    %cst_12 = arith.constant 0.000000e+00 : f32
    %13 = vector.broadcast %cst_12 : f32 to vector<24x8xf32>
    %c280 = arith.constant 280 : index
    %c0_13 = arith.constant 0 : index
    %14 = vector.load %arg12[%c280, %c0_13] : memref<304x8xf32, #tpu.memory_space<vmem>>, vector<24x8xf32>
    tpu.vector_store %arg12[%c280, %c0_13], %13 {strides = array<i32>} : memref<304x8xf32, #tpu.memory_space<vmem>>, vector<24x8xf32>,
    %c24 = arith.constant 24 : index
    %c0_14 = arith.constant 0 : index
    %15 = vector.load %arg12[%c24, %c0_14] : memref<304x8xf32, #tpu.memory_space<vmem>>, vector<256x8xf32>
    tpu.vector_store %arg12[%c24, %c0_14], %9 {strides = array<i32>} : memref<304x8xf32, #tpu.memory_space<vmem>>, vector<256x8xf32>,
    %16 = tpu.iota {dimensions = array<i32: 0>} : vector<256x1xi32>
    %c16_i32 = arith.constant 16 : i32
    %c0_i32 = arith.constant 0 : i32
    %17 = arith.cmpi eq, %c16_i32, %c0_i32 : i32
    %c1_i32 = arith.constant 1 : i32
    %18 = arith.select %17, %c1_i32, %c16_i32 : i32
    %19 = vector.broadcast %18 : i32 to vector<256x1xi32>
    %20 = arith.remsi %16, %19 : vector<256x1xi32>
    %c0_i32_15 = arith.constant 0 : i32
    %21 = vector.broadcast %c0_i32_15 : i32 to vector<256x1xi32>
    %22 = arith.cmpi ne, %20, %21 : vector<256x1xi32>
    %c0_i32_16 = arith.constant 0 : i32
    %23 = vector.broadcast %c0_i32_16 : i32 to vector<256x1xi32>
    %24 = arith.cmpi slt, %20, %23 : vector<256x1xi32>
    %c0_i32_17 = arith.constant 0 : i32
    %25 = arith.cmpi slt, %18, %c0_i32_17 : i32
    %26 = vector.broadcast %25 : i1 to vector<256x1xi1>
    %27 = vector.broadcast %26 : vector<256x1xi1> to vector<256x1xi1>
    %28 = arith.xori %24, %27 : vector<256x1xi1>
    %29 = arith.andi %28, %22 : vector<256x1xi1>
    %30 = vector.broadcast %18 : i32 to vector<256x1xi32>
    %31 = arith.addi %20, %30 : vector<256x1xi32>
    %32 = arith.select %29, %31, %20 : vector<256x1xi1>, vector<256x1xi32>
    %c1_i32_18 = arith.constant 1 : i32
    %33 = vector.broadcast %c1_i32_18 : i32 to vector<256x1xi32>
    %34 = arith.cmpi sge, %32, %33 : vector<256x1xi32>
    %c15_i32 = arith.constant 15 : i32
    %35 = vector.broadcast %c15_i32 : i32 to vector<256x1xi32>
    %36 = arith.cmpi slt, %32, %35 : vector<256x1xi32>
    %cst_19 = arith.constant 0.000000e+00 : f32
    %37 = vector.broadcast %cst_19 : f32 to vector<256x8xf32>
    %c8 = arith.constant 8 : index
    %c0_20 = arith.constant 0 : index
    %38 = vector.load %arg12[%c8, %c0_20] : memref<304x8xf32, #tpu.memory_space<vmem>>, vector<256x8xf32>
    %c7 = arith.constant 7 : index
    %c0_21 = arith.constant 0 : index
    %39 = vector.load %arg12[%c7, %c0_21] : memref<304x8xf32, #tpu.memory_space<vmem>>, vector<256x8xf32>
    %c9 = arith.constant 9 : index
    %c0_22 = arith.constant 0 : index
    %40 = vector.load %arg12[%c9, %c0_22] : memref<304x8xf32, #tpu.memory_space<vmem>>, vector<256x8xf32>
    %cst_23 = arith.constant 0.000000e+00 : f32
    %41 = vector.shape_cast %34 : vector<256x1xi1> to vector<256x1xi1>
    %42 = vector.broadcast %41 : vector<256x1xi1> to vector<256x8xi1>
    %43 = vector.broadcast %cst_23 : f32 to vector<256x8xf32>
    %44 = arith.select %42, %39, %43 : vector<256x8xi1>, vector<256x8xf32>
    %45 = arith.truncf %44 : vector<256x8xf32> to vector<256x8xbf16>
    %cst_24 = arith.constant 0.000000e+00 : f32
    %46 = vector.shape_cast %36 : vector<256x1xi1> to vector<256x1xi1>
    %47 = vector.broadcast %46 : vector<256x1xi1> to vector<256x8xi1>
    %48 = vector.broadcast %cst_24 : f32 to vector<256x8xf32>
    %49 = arith.select %47, %40, %48 : vector<256x8xi1>, vector<256x8xf32>
    %50 = arith.truncf %49 : vector<256x8xf32> to vector<256x8xbf16>
    %51 = arith.truncf %38 : vector<256x8xf32> to vector<256x8xbf16>
    %c0_25 = arith.constant 0 : index
    %c0_26 = arith.constant 0 : index
    %c0_27 = arith.constant 0 : index
    %52 = vector.load %arg4[%c0_25, %c0_26, %c0_27] : memref<3x24x8xbf16, #tpu.memory_space<vmem>>, vector<1x24x8xbf16>
    %53 = vector.shape_cast %52 : vector<1x24x8xbf16> to vector<24x8xbf16>
    %54 = vector.extract_strided_slice %53 {offsets = [0, 0], sizes = [8, 8], strides = [1, 1]} : vector<24x8xbf16> to vector<8x8xbf16>
    %cst_28 = arith.constant dense<0.000000e+00> : vector<256x8xf32>
    %55 = tpu.matmul %45, %54, %cst_28 {dimension_numbers = #tpu.dot_dimension_numbers<[1], [0], [0], [1], [0, 0, 1, 1], [], []>} : vector<256x8xbf16>, vector<8x8xbf16>, vector<256x8xf32> -> vector<256x8xf32>
    %56 = arith.addf %37, %55 : vector<256x8xf32>
    %57 = vector.extract_strided_slice %53 {offsets = [8, 0], sizes = [8, 8], strides = [1, 1]} : vector<24x8xbf16> to vector<8x8xbf16>
    %cst_29 = arith.constant dense<0.000000e+00> : vector<256x8xf32>
    %58 = tpu.matmul %51, %57, %cst_29 {dimension_numbers = #tpu.dot_dimension_numbers<[1], [0], [0], [1], [0, 0, 1, 1], [], []>} : vector<256x8xbf16>, vector<8x8xbf16>, vector<256x8xf32> -> vector<256x8xf32>
    %59 = arith.addf %56, %58 : vector<256x8xf32>
    %60 = vector.extract_strided_slice %53 {offsets = [16, 0], sizes = [8, 8], strides = [1, 1]} : vector<24x8xbf16> to vector<8x8xbf16>
    %cst_30 = arith.constant dense<0.000000e+00> : vector<256x8xf32>
    %61 = tpu.matmul %50, %60, %cst_30 {dimension_numbers = #tpu.dot_dimension_numbers<[1], [0], [0], [1], [0, 0, 1, 1], [], []>} : vector<256x8xbf16>, vector<8x8xbf16>, vector<256x8xf32> -> vector<256x8xf32>
    %62 = arith.addf %59, %61 : vector<256x8xf32>
    %c23 = arith.constant 23 : index
    %c0_31 = arith.constant 0 : index
    %63 = vector.load %arg12[%c23, %c0_31] : memref<304x8xf32, #tpu.memory_space<vmem>>, vector<256x8xf32>
    %c25 = arith.constant 25 : index
    %c0_32 = arith.constant 0 : index
    %64 = vector.load %arg12[%c25, %c0_32] : memref<304x8xf32, #tpu.memory_space<vmem>>, vector<256x8xf32>
    %cst_33 = arith.constant 0.000000e+00 : f32
    %65 = vector.shape_cast %34 : vector<256x1xi1> to vector<256x1xi1>
    %66 = vector.broadcast %65 : vector<256x1xi1> to vector<256x8xi1>
    %67 = vector.broadcast %cst_33 : f32 to vector<256x8xf32>
    %68 = arith.select %66, %63, %67 : vector<256x8xi1>, vector<256x8xf32>
    %69 = arith.truncf %68 : vector<256x8xf32> to vector<256x8xbf16>
    %cst_34 = arith.constant 0.000000e+00 : f32
    %70 = vector.shape_cast %36 : vector<256x1xi1> to vector<256x1xi1>
    %71 = vector.broadcast %70 : vector<256x1xi1> to vector<256x8xi1>
    %72 = vector.broadcast %cst_34 : f32 to vector<256x8xf32>
    %73 = arith.select %71, %64, %72 : vector<256x8xi1>, vector<256x8xf32>
    %74 = arith.truncf %73 : vector<256x8xf32> to vector<256x8xbf16>
    %c1 = arith.constant 1 : index
    %c0_35 = arith.constant 0 : index
    %c0_36 = arith.constant 0 : index
    %75 = vector.load %arg4[%c1, %c0_35, %c0_36] : memref<3x24x8xbf16, #tpu.memory_space<vmem>>, vector<1x24x8xbf16>
    %76 = vector.shape_cast %75 : vector<1x24x8xbf16> to vector<24x8xbf16>
    %77 = vector.extract_strided_slice %76 {offsets = [0, 0], sizes = [8, 8], strides = [1, 1]} : vector<24x8xbf16> to vector<8x8xbf16>
    %cst_37 = arith.constant dense<0.000000e+00> : vector<256x8xf32>
    %78 = tpu.matmul %69, %77, %cst_37 {dimension_numbers = #tpu.dot_dimension_numbers<[1], [0], [0], [1], [0, 0, 1, 1], [], []>} : vector<256x8xbf16>, vector<8x8xbf16>, vector<256x8xf32> -> vector<256x8xf32>
    %79 = arith.addf %62, %78 : vector<256x8xf32>
    %80 = vector.extract_strided_slice %76 {offsets = [8, 0], sizes = [8, 8], strides = [1, 1]} : vector<24x8xbf16> to vector<8x8xbf16>
    %cst_38 = arith.constant dense<0.000000e+00> : vector<256x8xf32>
    %81 = tpu.matmul %10, %80, %cst_38 {dimension_numbers = #tpu.dot_dimension_numbers<[1], [0], [0], [1], [0, 0, 1, 1], [], []>} : vector<256x8xbf16>, vector<8x8xbf16>, vector<256x8xf32> -> vector<256x8xf32>
    %82 = arith.addf %79, %81 : vector<256x8xf32>
    %83 = vector.extract_strided_slice %76 {offsets = [16, 0], sizes = [8, 8], strides = [1, 1]} : vector<24x8xbf16> to vector<8x8xbf16>
    %cst_39 = arith.constant dense<0.000000e+00> : vector<256x8xf32>
    %84 = tpu.matmul %74, %83, %cst_39 {dimension_numbers = #tpu.dot_dimension_numbers<[1], [0], [0], [1], [0, 0, 1, 1], [], []>} : vector<256x8xbf16>, vector<8x8xbf16>, vector<256x8xf32> -> vector<256x8xf32>
    %85 = arith.addf %82, %84 : vector<256x8xf32>
    %c40 = arith.constant 40 : index
    %c0_40 = arith.constant 0 : index
    %86 = vector.load %arg12[%c40, %c0_40] : memref<304x8xf32, #tpu.memory_space<vmem>>, vector<256x8xf32>
    %c39 = arith.constant 39 : index
    %c0_41 = arith.constant 0 : index
    %87 = vector.load %arg12[%c39, %c0_41] : memref<304x8xf32, #tpu.memory_space<vmem>>, vector<256x8xf32>
    %c41 = arith.constant 41 : index
    %c0_42 = arith.constant 0 : index
    %88 = vector.load %arg12[%c41, %c0_42] : memref<304x8xf32, #tpu.memory_space<vmem>>, vector<256x8xf32>
    %cst_43 = arith.constant 0.000000e+00 : f32
    %89 = vector.shape_cast %34 : vector<256x1xi1> to vector<256x1xi1>
    %90 = vector.broadcast %89 : vector<256x1xi1> to vector<256x8xi1>
    %91 = vector.broadcast %cst_43 : f32 to vector<256x8xf32>
    %92 = arith.select %90, %87, %91 : vector<256x8xi1>, vector<256x8xf32>
    %93 = arith.truncf %92 : vector<256x8xf32> to vector<256x8xbf16>
    %cst_44 = arith.constant 0.000000e+00 : f32
    %94 = vector.shape_cast %36 : vector<256x1xi1> to vector<256x1xi1>
    %95 = vector.broadcast %94 : vector<256x1xi1> to vector<256x8xi1>
    %96 = vector.broadcast %cst_44 : f32 to vector<256x8xf32>
    %97 = arith.select %95, %88, %96 : vector<256x8xi1>, vector<256x8xf32>
    %98 = arith.truncf %97 : vector<256x8xf32> to vector<256x8xbf16>
    %99 = arith.truncf %86 : vector<256x8xf32> to vector<256x8xbf16>
    %c2 = arith.constant 2 : index
    %c0_45 = arith.constant 0 : index
    %c0_46 = arith.constant 0 : index
    %100 = vector.load %arg4[%c2, %c0_45, %c0_46] : memref<3x24x8xbf16, #tpu.memory_space<vmem>>, vector<1x24x8xbf16>
    %101 = vector.shape_cast %100 : vector<1x24x8xbf16> to vector<24x8xbf16>
    %102 = vector.extract_strided_slice %101 {offsets = [0, 0], sizes = [8, 8], strides = [1, 1]} : vector<24x8xbf16> to vector<8x8xbf16>
    %cst_47 = arith.constant dense<0.000000e+00> : vector<256x8xf32>
    %103 = tpu.matmul %93, %102, %cst_47 {dimension_numbers = #tpu.dot_dimension_numbers<[1], [0], [0], [1], [0, 0, 1, 1], [], []>} : vector<256x8xbf16>, vector<8x8xbf16>, vector<256x8xf32> -> vector<256x8xf32>
    %104 = arith.addf %85, %103 : vector<256x8xf32>
    %105 = vector.extract_strided_slice %101 {offsets = [8, 0], sizes = [8, 8], strides = [1, 1]} : vector<24x8xbf16> to vector<8x8xbf16>
    %cst_48 = arith.constant dense<0.000000e+00> : vector<256x8xf32>
    %106 = tpu.matmul %99, %105, %cst_48 {dimension_numbers = #tpu.dot_dimension_numbers<[1], [0], [0], [1], [0, 0, 1, 1], [], []>} : vector<256x8xbf16>, vector<8x8xbf16>, vector<256x8xf32> -> vector<256x8xf32>
    %107 = arith.addf %104, %106 : vector<256x8xf32>
    %108 = vector.extract_strided_slice %101 {offsets = [16, 0], sizes = [8, 8], strides = [1, 1]} : vector<24x8xbf16> to vector<8x8xbf16>
    %cst_49 = arith.constant dense<0.000000e+00> : vector<256x8xf32>
    %109 = tpu.matmul %98, %108, %cst_49 {dimension_numbers = #tpu.dot_dimension_numbers<[1], [0], [0], [1], [0, 0, 1, 1], [], []>} : vector<256x8xbf16>, vector<8x8xbf16>, vector<256x8xf32> -> vector<256x8xf32>
    %110 = arith.addf %107, %109 : vector<256x8xf32>
    %c0_50 = arith.constant 0 : index
    %c0_51 = arith.constant 0 : index
    %111 = vector.load %arg5[%c0_50, %c0_51] : memref<1x8xf32, #tpu.memory_space<vmem>>, vector<1x8xf32>
    %112 = vector.broadcast %111 : vector<1x8xf32> to vector<256x8xf32>
    %113 = arith.addf %110, %112 : vector<256x8xf32>
    %cst_52 = arith.constant 0.000000e+00 : f32
    %114 = vector.broadcast %cst_52 : f32 to vector<256x8xf32>
    %115 = arith.maximumf %113, %114 : vector<256x8xf32>
    %c0_53 = arith.constant 0 : index
    %c0_54 = arith.constant 0 : index
    %116 = vector.load %arg10[%c0_53, %c0_54] : memref<64x256xf32, #tpu.memory_space<vmem>>, vector<64x256xf32>
    %cst_55 = arith.constant dense<0.000000e+00> : vector<64x8xf32>
    %117 = tpu.matmul %116, %115, %cst_55 {dimension_numbers = #tpu.dot_dimension_numbers<[1], [0], [0], [1], [0, 0, 1, 1], [], []>} : vector<64x256xf32>, vector<256x8xf32>, vector<64x8xf32> -> vector<64x8xf32>
    %118 = arith.truncf %117 : vector<64x8xf32> to vector<64x8xbf16>
    %c0_56 = arith.constant 0 : index
    %c0_57 = arith.constant 0 : index
    %119 = vector.load %arg6[%c0_56, %c0_57] : memref<8x32xbf16, #tpu.memory_space<vmem>>, vector<8x32xbf16>
    %cst_58 = arith.constant dense<0.000000e+00> : vector<64x32xf32>
    %120 = tpu.matmul %118, %119, %cst_58 {dimension_numbers = #tpu.dot_dimension_numbers<[1], [0], [0], [1], [0, 0, 1, 1], [], []>} : vector<64x8xbf16>, vector<8x32xbf16>, vector<64x32xf32> -> vector<64x32xf32>
    %c0_59 = arith.constant 0 : index
    %c0_60 = arith.constant 0 : index
    %121 = vector.load %arg7[%c0_59, %c0_60] : memref<1x32xf32, #tpu.memory_space<vmem>>, vector<1x32xf32>
    %122 = vector.broadcast %121 : vector<1x32xf32> to vector<64x32xf32>
    %123 = arith.addf %120, %122 : vector<64x32xf32>
    %c0_61 = arith.constant 0 : index
    %c0_62 = arith.constant 0 : index
    %124 = vector.load %arg10[%c0_61, %c0_62] : memref<64x256xf32, #tpu.memory_space<vmem>>, vector<64x256xf32>
    %125 = arith.extf %2 : vector<256x16xbf16> to vector<256x16xf32>
    %cst_63 = arith.constant dense<0.000000e+00> : vector<64x16xf32>
    %126 = tpu.matmul %124, %125, %cst_63 {dimension_numbers = #tpu.dot_dimension_numbers<[1], [0], [0], [1], [0, 0, 1, 1], [], []>} : vector<64x256xf32>, vector<256x16xf32>, vector<64x16xf32> -> vector<64x16xf32>
    %127 = arith.truncf %126 : vector<64x16xf32> to vector<64x16xbf16>
    %c0_64 = arith.constant 0 : index
    %c0_65 = arith.constant 0 : index
    %128 = vector.load %arg8[%c0_64, %c0_65] : memref<16x32xbf16, #tpu.memory_space<vmem>>, vector<16x32xbf16>
    %cst_66 = arith.constant dense<0.000000e+00> : vector<64x32xf32>
    %129 = tpu.matmul %127, %128, %cst_66 {dimension_numbers = #tpu.dot_dimension_numbers<[1], [0], [0], [1], [0, 0, 1, 1], [], []>} : vector<64x16xbf16>, vector<16x32xbf16>, vector<64x32xf32> -> vector<64x32xf32>
    %c0_67 = arith.constant 0 : index
    %c0_68 = arith.constant 0 : index
    %130 = vector.load %arg9[%c0_67, %c0_68] : memref<1x32xf32, #tpu.memory_space<vmem>>, vector<1x32xf32>
    %131 = vector.broadcast %130 : vector<1x32xf32> to vector<64x32xf32>
    %132 = arith.addf %129, %131 : vector<64x32xf32>
    %133 = arith.addf %123, %132 : vector<64x32xf32>
    %cst_69 = arith.constant 0.000000e+00 : f32
    %134 = vector.broadcast %cst_69 : f32 to vector<64x32xf32>
    %135 = arith.maximumf %133, %134 : vector<64x32xf32>
    %c0_70 = arith.constant 0 : index
    %c0_71 = arith.constant 0 : index
    %c0_72 = arith.constant 0 : index
    %136 = vector.load %arg11[%c0_70, %c0_71, %c0_72] : memref<1x64x32xf32, #tpu.memory_space<vmem>>, vector<1x64x32xf32>
    %137 = vector.shape_cast %136 : vector<1x64x32xf32> to vector<64x32xf32>
    %138 = vector.shape_cast %135 : vector<64x32xf32> to vector<1x64x32xf32>
    tpu.vector_store %arg11[%c0_70, %c0_71, %c0_72], %138 {strides = array<i32>} : memref<1x64x32xf32, #tpu.memory_space<vmem>>, vector<1x64x32xf32>,
    return
  }
  func.func @transform_0(%arg0: i32) -> (i32, i32, i32, i32, i32) {
    %c0_i32 = arith.constant 0 : i32
    %c0_i32_0 = arith.constant 0 : i32
    %c0_i32_1 = arith.constant 0 : i32
    %c0_i32_2 = arith.constant 0 : i32
    %c0_i32_3 = arith.constant 0 : i32
    return %arg0, %c0_i32, %c0_i32_0, %c0_i32_1, %c0_i32_2 : i32, i32, i32, i32, i32
  }
  func.func @transform_1(%arg0: i32) -> (i32, i32) {
    %c0_i32 = arith.constant 0 : i32
    %c0_i32_0 = arith.constant 0 : i32
    %c0_i32_1 = arith.constant 0 : i32
    return %c0_i32, %c0_i32_0 : i32, i32
  }
  func.func @transform_2(%arg0: i32) -> (i32, i32) {
    %c0_i32 = arith.constant 0 : i32
    %c0_i32_0 = arith.constant 0 : i32
    %c0_i32_1 = arith.constant 0 : i32
    return %c0_i32, %c0_i32_0 : i32, i32
  }
  func.func @transform_3(%arg0: i32) -> (i32, i32, i32) {
    %c0_i32 = arith.constant 0 : i32
    %c0_i32_0 = arith.constant 0 : i32
    %c0_i32_1 = arith.constant 0 : i32
    %c0_i32_2 = arith.constant 0 : i32
    return %c0_i32, %c0_i32_0, %c0_i32_1 : i32, i32, i32
  }
  func.func @transform_4(%arg0: i32) -> (i32, i32) {
    %c0_i32 = arith.constant 0 : i32
    %c0_i32_0 = arith.constant 0 : i32
    %c0_i32_1 = arith.constant 0 : i32
    return %c0_i32, %c0_i32_0 : i32, i32
  }
  func.func @transform_5(%arg0: i32) -> (i32, i32) {
    %c0_i32 = arith.constant 0 : i32
    %c0_i32_0 = arith.constant 0 : i32
    %c0_i32_1 = arith.constant 0 : i32
    return %c0_i32, %c0_i32_0 : i32, i32
  }
  func.func @transform_6(%arg0: i32) -> (i32, i32) {
    %c0_i32 = arith.constant 0 : i32
    %c0_i32_0 = arith.constant 0 : i32
    %c0_i32_1 = arith.constant 0 : i32
    return %c0_i32, %c0_i32_0 : i32, i32
  }
  func.func @transform_7(%arg0: i32) -> (i32, i32) {
    %c0_i32 = arith.constant 0 : i32
    %c0_i32_0 = arith.constant 0 : i32
    %c0_i32_1 = arith.constant 0 : i32
    return %c0_i32, %c0_i32_0 : i32, i32
  }
  func.func @transform_8(%arg0: i32) -> (i32, i32) {
    %c0_i32 = arith.constant 0 : i32
    %c0_i32_0 = arith.constant 0 : i32
    %c0_i32_1 = arith.constant 0 : i32
    return %c0_i32, %c0_i32_0 : i32, i32
  }
  func.func @transform_9(%arg0: i32) -> (i32, i32) {
    %c0_i32 = arith.constant 0 : i32
    %c0_i32_0 = arith.constant 0 : i32
    %c0_i32_1 = arith.constant 0 : i32
    return %c0_i32, %c0_i32_0 : i32, i32
  }
  func.func @transform_10(%arg0: i32) -> (i32, i32, i32) {
    %c0_i32 = arith.constant 0 : i32
    %c0_i32_0 = arith.constant 0 : i32
    %c0_i32_1 = arith.constant 0 : i32
    return %arg0, %c0_i32, %c0_i32_0 : i32, i32, i32
  }
}

</mosaic_0001>

<llo_original>
// kernel: tpu_custom_call.1
$region0: #{tpu_custom_call.1}
  #allocation0 [shape = 'u32[]', space=smem, size = 0x4, offset = 0x4, fixed_abs, tag = 'smem constant byte address 0x4 - core index']
  #allocation1 [shape = 'u32[144,128]{1,0:T(1,128)}', space=vmem, size = 0x12000, scoped, tag = 'internal scratch']
  #allocation2 [shape = 'f32[304,8]{1,0:T(8,128)}', space=vmem, size = 0x26000, scoped, tag = 'scratch operand']
  %s0 = inlined_call_operand.hbm [shape: bf16[2,8,2,16,16], index: 0, kind: input, shape index: {}]
  %s1 = inlined_call_operand.vmem [shape: bf16[16,8], index: 1, kind: input, shape index: {}]
  %s2 = inlined_call_operand.vmem [shape: f32[1,8], index: 2, kind: input, shape index: {}]
  %s3 = inlined_call_operand.vmem [shape: bf16[3,24,8], index: 3, kind: input, shape index: {}]
  %s4 = inlined_call_operand.vmem [shape: f32[1,8], index: 4, kind: input, shape index: {}]
  %s5 = inlined_call_operand.vmem [shape: bf16[8,32], index: 5, kind: input, shape index: {}]
  %s6 = inlined_call_operand.vmem [shape: f32[1,32], index: 6, kind: input, shape index: {}]
  %s7 = inlined_call_operand.vmem [shape: bf16[16,32], index: 7, kind: input, shape index: {}]
  %s8 = inlined_call_operand.vmem [shape: f32[1,32], index: 8, kind: input, shape index: {}]
  %s9 = inlined_call_operand.hbm [shape: f32[64,256], index: 9, kind: input, shape index: {}]
  %s10 = inlined_call_operand.vmem [shape: f32[2,64,32], index: 10, kind: output, shape index: {}]
  %s11 = sld [smem:[#allocation0]]
  $region81: #{tpu_custom_call.1} parent=0
    _
  %s13 = ssub.s32 1, %s11
  %s14 = scalar_select 0, %s13, %s11
  $region1: #{tpu_custom_call.1} parent=0
    #allocation3 [shape = 'u8[131072]{0}', space=vmem, size = 0x20000, scoped, tag = 'input window, operand 0']
    #allocation4 [shape = 's32[2]{0}', space=sflag, size = 0x8, scoped, tag = 'scoped memory for tpu_custom_call.1']
    #allocation5 [shape = 'u8[65536]{0}', space=vmem, size = 0x10000, scoped, tag = 'input window, operand 9, single buffered']
    #allocation6 [shape = 's32[1]{0}', space=sflag, size = 0x4, scoped, tag = 'scoped memory for tpu_custom_call.1']
    %15 = vsyncpa [#allocation4], 0
    %s16 = scalar_lea.sflag [#allocation4], 1
    %17 = vsyncpa %s16, 0
    %18 = vsyncpa [#allocation6], 0
    loop: start=0, step=1, limit=4
    $region2: #{tpu_custom_call.1} parent=1 // loop_pre_header
      _
    $region3: #{tpu_custom_call.1} parent=1 // loop_header
      %s20 = sphi 0, %s24
      %p21 = scmp.ge.s32.totalorder %s20, 4
      %s30 = sphi 0, %s32
      %s33 = sphi 0, %s30
      %s34 = sphi 0, %s33
      %s50 = sphi 0, %s34
      %s54 = sphi 0, %s54
      %s56 = sphi 0, %s54
      %s57 = sphi 0, %s56
      %s71 = sphi 0, %s57
      %s75 = sphi 0, %s75
      %s77 = sphi 0, %s75
      %s78 = sphi 0, %s77
      %s92 = sphi 0, %s78
      %s96 = sphi 0, %s96
      %s98 = sphi 0, %s96
      %s99 = sphi 0, %s98
      %s113 = sphi 0, %s99
      %s117 = sphi 0, %s117
      %s119 = sphi 0, %s117
      %s120 = sphi 0, %s119
      %s134 = sphi 0, %s120
      %s138 = sphi 0, %s138
      %s140 = sphi 0, %s138
      %s141 = sphi 0, %s140
      %s155 = sphi 0, %s141
      %s159 = sphi 0, %s159
      %s161 = sphi 0, %s159
      %s162 = sphi 0, %s161
      %s176 = sphi 0, %s162
      %s180 = sphi 0, %s180
      %s182 = sphi 0, %s180
      %s183 = sphi 0, %s182
      %s197 = sphi 0, %s183
      %s201 = sphi 0, %s201
      %s203 = sphi 0, %s201
      %s204 = sphi 0, %s203
      %s218 = sphi 0, %s204
      %s222 = sphi 0, %s222
      %s224 = sphi 0, %s222
      %s225 = sphi 0, %s224
      %s239 = sphi 0, %s225
      %s245 = sphi 0, %s247
      %s248 = sphi 0, %s245
      %s249 = sphi 0, %s248
      %s265 = sphi 0, %s249
    $region4: #{tpu_custom_call.1} parent=1 // loop_header_branch
      %23 = sbr.rel (%p21) target = $region8
    $region5: #{tpu_custom_call.1} parent=1 // loop_body
      %s25 = ssub.s32 %s20, 1
      %s26 = ssub.s32 %s20, 2
      %s27 = sadd.s32 %s20, 1
      %s28 = ssub.s32 %s20, %s27
      %p29 = scmp.eq.s32.totalorder %s28, 0
      %s31 = sadd.s32 %s30, 1
      %s32 = scalar_select %p29, %s30, %s31
      %p35 = pneg %p29
      %p36 = scmp.eq.s32.totalorder %s20, 1
      %p37 = por %p35, %p36
      %p38 = scmp.ne.s32.totalorder %s30, %s33
      %p39 = scmp.eq.s32.totalorder %s20, 0
      %p40 = por %p38, %p39
      %p41 = scmp.ne.s32.totalorder %s30, %s33
      %p42 = scmp.eq.s32.totalorder %s25, 1
      %p43 = por %p41, %p42
      %p44 = scmp.ne.s32.totalorder %s33, %s34
      %p45 = scmp.eq.s32.totalorder %s25, 0
      %p46 = por %p44, %p45
      %p47 = scmp.ne.s32.totalorder %s33, %s34
      %p48 = scmp.eq.s32.totalorder %s26, 1
      %p49 = por %p47, %p48
      %p51 = scmp.ne.s32.totalorder %s34, %s50
      %p52 = scmp.eq.s32.totalorder %s26, 0
      %p53 = por %p51, %p52
      %s55 = sadd.s32 %s54, 1
      %p58 = scmp.eq.s32.totalorder %s20, 1
      %p59 = scmp.ne.s32.totalorder %s54, %s56
      %p60 = scmp.eq.s32.totalorder %s20, 0
      %p61 = por %p59, %p60
      %p62 = scmp.ne.s32.totalorder %s54, %s56
      %p63 = scmp.eq.s32.totalorder %s25, 1
      %p64 = por %p62, %p63
      %p65 = scmp.ne.s32.totalorder %s56, %s57
      %p66 = scmp.eq.s32.totalorder %s25, 0
      %p67 = por %p65, %p66
      %p68 = scmp.ne.s32.totalorder %s56, %s57
      %p69 = scmp.eq.s32.totalorder %s26, 1
      %p70 = por %p68, %p69
      %p72 = scmp.ne.s32.totalorder %s57, %s71
      %p73 = scmp.eq.s32.totalorder %s26, 0
      %p74 = por %p72, %p73
      %s76 = sadd.s32 %s75, 1
      %p79 = scmp.eq.s32.totalorder %s20, 1
      %p80 = scmp.ne.s32.totalorder %s75, %s77
      %p81 = scmp.eq.s32.totalorder %s20, 0
      %p82 = por %p80, %p81
      %p83 = scmp.ne.s32.totalorder %s75, %s77
      %p84 = scmp.eq.s32.totalorder %s25, 1
      %p85 = por %p83, %p84
      %p86 = scmp.ne.s32.totalorder %s77, %s78
      %p87 = scmp.eq.s32.totalorder %s25, 0
      %p88 = por %p86, %p87
      %p89 = scmp.ne.s32.totalorder %s77, %s78
      %p90 = scmp.eq.s32.totalorder %s26, 1
      %p91 = por %p89, %p90
      %p93 = scmp.ne.s32.totalorder %s78, %s92
      %p94 = scmp.eq.s32.totalorder %s26, 0
      %p95 = por %p93, %p94
      %s97 = sadd.s32 %s96, 1
      %p100 = scmp.eq.s32.totalorder %s20, 1
      %p101 = scmp.ne.s32.totalorder %s96, %s98
      %p102 = scmp.eq.s32.totalorder %s20, 0
      %p103 = por %p101, %p102
      %p104 = scmp.ne.s32.totalorder %s96, %s98
      %p105 = scmp.eq.s32.totalorder %s25, 1
      %p106 = por %p104, %p105
      %p107 = scmp.ne.s32.totalorder %s98, %s99
      %p108 = scmp.eq.s32.totalorder %s25, 0
      %p109 = por %p107, %p108
      %p110 = scmp.ne.s32.totalorder %s98, %s99
      %p111 = scmp.eq.s32.totalorder %s26, 1
      %p112 = por %p110, %p111
      %p114 = scmp.ne.s32.totalorder %s99, %s113
      %p115 = scmp.eq.s32.totalorder %s26, 0
      %p116 = por %p114, %p115
      %s118 = sadd.s32 %s117, 1
      %p121 = scmp.eq.s32.totalorder %s20, 1
      %p122 = scmp.ne.s32.totalorder %s117, %s119
      %p123 = scmp.eq.s32.totalorder %s20, 0
      %p124 = por %p122, %p123
      %p125 = scmp.ne.s32.totalorder %s117, %s119
      %p126 = scmp.eq.s32.totalorder %s25, 1
      %p127 = por %p125, %p126
      %p128 = scmp.ne.s32.totalorder %s119, %s120
      %p129 = scmp.eq.s32.totalorder %s25, 0
      %p130 = por %p128, %p129
      %p131 = scmp.ne.s32.totalorder %s119, %s120
      %p132 = scmp.eq.s32.totalorder %s26, 1
      %p133 = por %p131, %p132
      %p135 = scmp.ne.s32.totalorder %s120, %s134
      %p136 = scmp.eq.s32.totalorder %s26, 0
      %p137 = por %p135, %p136
      %s139 = sadd.s32 %s138, 1
      %p142 = scmp.eq.s32.totalorder %s20, 1
      %p143 = scmp.ne.s32.totalorder %s138, %s140
      %p144 = scmp.eq.s32.totalorder %s20, 0
      %p145 = por %p143, %p144
      %p146 = scmp.ne.s32.totalorder %s138, %s140
      %p147 = scmp.eq.s32.totalorder %s25, 1
      %p148 = por %p146, %p147
      %p149 = scmp.ne.s32.totalorder %s140, %s141
      %p150 = scmp.eq.s32.totalorder %s25, 0
      %p151 = por %p149, %p150
      %p152 = scmp.ne.s32.totalorder %s140, %s141
      %p153 = scmp.eq.s32.totalorder %s26, 1
      %p154 = por %p152, %p153
      %p156 = scmp.ne.s32.totalorder %s141, %s155
      %p157 = scmp.eq.s32.totalorder %s26, 0
      %p158 = por %p156, %p157
      %s160 = sadd.s32 %s159, 1
      %p163 = scmp.eq.s32.totalorder %s20, 1
      %p164 = scmp.ne.s32.totalorder %s159, %s161
      %p165 = scmp.eq.s32.totalorder %s20, 0
      %p166 = por %p164, %p165
      %p167 = scmp.ne.s32.totalorder %s159, %s161
      %p168 = scmp.eq.s32.totalorder %s25, 1
      %p169 = por %p167, %p168
      %p170 = scmp.ne.s32.totalorder %s161, %s162
      %p171 = scmp.eq.s32.totalorder %s25, 0
      %p172 = por %p170, %p171
      %p173 = scmp.ne.s32.totalorder %s161, %s162
      %p174 = scmp.eq.s32.totalorder %s26, 1
      %p175 = por %p173, %p174
      %p177 = scmp.ne.s32.totalorder %s162, %s176
      %p178 = scmp.eq.s32.totalorder %s26, 0
      %p179 = por %p177, %p178
      %s181 = sadd.s32 %s180, 1
      %p184 = scmp.eq.s32.totalorder %s20, 1
      %p185 = scmp.ne.s32.totalorder %s180, %s182
      %p186 = scmp.eq.s32.totalorder %s20, 0
      %p187 = por %p185, %p186
      %p188 = scmp.ne.s32.totalorder %s180, %s182
      %p189 = scmp.eq.s32.totalorder %s25, 1
      %p190 = por %p188, %p189
      %p191 = scmp.ne.s32.totalorder %s182, %s183
      %p192 = scmp.eq.s32.totalorder %s25, 0
      %p193 = por %p191, %p192
      %p194 = scmp.ne.s32.totalorder %s182, %s183
      %p195 = scmp.eq.s32.totalorder %s26, 1
      %p196 = por %p194, %p195
      %p198 = scmp.ne.s32.totalorder %s183, %s197
      %p199 = scmp.eq.s32.totalorder %s26, 0
      %p200 = por %p198, %p199
      %s202 = sadd.s32 %s201, 1
      %p205 = scmp.eq.s32.totalorder %s20, 1
      %p206 = scmp.ne.s32.totalorder %s201, %s203
      %p207 = scmp.eq.s32.totalorder %s20, 0
      %p208 = por %p206, %p207
      %p209 = scmp.ne.s32.totalorder %s201, %s203
      %p210 = scmp.eq.s32.totalorder %s25, 1
      %p211 = por %p209, %p210
      %p212 = scmp.ne.s32.totalorder %s203, %s204
      %p213 = scmp.eq.s32.totalorder %s25, 0
      %p214 = por %p212, %p213
      %p215 = scmp.ne.s32.totalorder %s203, %s204
      %p216 = scmp.eq.s32.totalorder %s26, 1
      %p217 = por %p215, %p216
      %p219 = scmp.ne.s32.totalorder %s204, %s218
      %p220 = scmp.eq.s32.totalorder %s26, 0
      %p221 = por %p219, %p220
      %s223 = sadd.s32 %s222, 1
      %p226 = scmp.eq.s32.totalorder %s20, 1
      %p227 = scmp.ne.s32.totalorder %s222, %s224
      %p228 = scmp.eq.s32.totalorder %s20, 0
      %p229 = por %p227, %p228
      %p230 = scmp.ne.s32.totalorder %s222, %s224
      %p231 = scmp.eq.s32.totalorder %s25, 1
      %p232 = por %p230, %p231
      %p233 = scmp.ne.s32.totalorder %s224, %s225
      %p234 = scmp.eq.s32.totalorder %s25, 0
      %p235 = por %p233, %p234
      %p236 = scmp.ne.s32.totalorder %s224, %s225
      %p237 = scmp.eq.s32.totalorder %s26, 1
      %p238 = por %p236, %p237
      %p240 = scmp.ne.s32.totalorder %s225, %s239
      %p241 = scmp.eq.s32.totalorder %s26, 0
      %p242 = por %p240, %p241
      %s243 = ssub.s32 %s20, %s27
      %p244 = scmp.eq.s32.totalorder %s243, 0
      %s246 = sadd.s32 %s245, 1
      %s247 = scalar_select %p244, %s245, %s246
      %p250 = pneg %p244
      %p251 = scmp.eq.s32.totalorder %s20, 1
      %p252 = por %p250, %p251
      %p253 = scmp.ne.s32.totalorder %s245, %s248
      %p254 = scmp.eq.s32.totalorder %s20, 0
      %p255 = por %p253, %p254
      %p256 = scmp.ne.s32.totalorder %s245, %s248
      %p257 = scmp.eq.s32.totalorder %s25, 1
      %p258 = por %p256, %p257
      %p259 = scmp.ne.s32.totalorder %s248, %s249
      %p260 = scmp.eq.s32.totalorder %s25, 0
      %p261 = por %p259, %p260
      %p262 = scmp.ne.s32.totalorder %s248, %s249
      %p263 = scmp.eq.s32.totalorder %s26, 1
      %p264 = por %p262, %p263
      %p266 = scmp.ne.s32.totalorder %s249, %s265
      %p267 = scmp.eq.s32.totalorder %s26, 0
      %p268 = por %p266, %p267
      %p269 = scmp.le.s32.totalorder 1, %s20
      %p270 = scmp.lt.s32.totalorder %s20, 3
      %p271 = pnand %p269, %p270
      %p272 = pneg %p271
      // Predicated region
      $region9: #{tpu_custom_call.1} parent=5 // pred_check
        _
      $region10: #{tpu_custom_call.1} parent=5 // pred_check_branch
        %274 = sbr.rel (%p271) target = $region12
      $region11: #{tpu_custom_call.1} parent=5 // pred_region
        %s275 = ssub.s32 %s20, 1
        // Predicated region
        $region13: #{tpu_custom_call.1} parent=11 // pred_check
          %p276 = pneg %p67
        $region14: #{tpu_custom_call.1} parent=11 // pred_check_branch
          %278 = sbr.rel (%p276) target = $region16
        $region15: #{tpu_custom_call.1} parent=11 // pred_region
          _
        $region16: #{tpu_custom_call.1} parent=11 // pred_fallthru
          _
        // Predicated region
        $region17: #{tpu_custom_call.1} parent=11 // pred_check
          %p279 = pneg %p88
        $region18: #{tpu_custom_call.1} parent=11 // pred_check_branch
          %281 = sbr.rel (%p279) target = $region20
        $region19: #{tpu_custom_call.1} parent=11 // pred_region
          _
        $region20: #{tpu_custom_call.1} parent=11 // pred_fallthru
          _
        // Predicated region
        $region21: #{tpu_custom_call.1} parent=11 // pred_check
          %p282 = pneg %p109
        $region22: #{tpu_custom_call.1} parent=11 // pred_check_branch
          %284 = sbr.rel (%p282) target = $region24
        $region23: #{tpu_custom_call.1} parent=11 // pred_region
          _
        $region24: #{tpu_custom_call.1} parent=11 // pred_fallthru
          _
        // Predicated region
        $region25: #{tpu_custom_call.1} parent=11 // pred_check
          %p285 = pneg %p130
        $region26: #{tpu_custom_call.1} parent=11 // pred_check_branch
          %287 = sbr.rel (%p285) target = $region28
        $region27: #{tpu_custom_call.1} parent=11 // pred_region
          _
        $region28: #{tpu_custom_call.1} parent=11 // pred_fallthru
          _
        // Predicated region
        $region29: #{tpu_custom_call.1} parent=11 // pred_check
          %p288 = pneg %p151
        $region30: #{tpu_custom_call.1} parent=11 // pred_check_branch
          %290 = sbr.rel (%p288) target = $region32
        $region31: #{tpu_custom_call.1} parent=11 // pred_region
          _
        $region32: #{tpu_custom_call.1} parent=11 // pred_fallthru
          _
        // Predicated region
        $region33: #{tpu_custom_call.1} parent=11 // pred_check
          %p291 = pneg %p172
        $region34: #{tpu_custom_call.1} parent=11 // pred_check_branch
          %293 = sbr.rel (%p291) target = $region36
        $region35: #{tpu_custom_call.1} parent=11 // pred_region
          _
        $region36: #{tpu_custom_call.1} parent=11 // pred_fallthru
          _
        // Predicated region
        $region37: #{tpu_custom_call.1} parent=11 // pred_check
          %p294 = pneg %p193
        $region38: #{tpu_custom_call.1} parent=11 // pred_check_branch
          %296 = sbr.rel (%p294) target = $region40
        $region39: #{tpu_custom_call.1} parent=11 // pred_region
          _
        $region40: #{tpu_custom_call.1} parent=11 // pred_fallthru
          _
        // Predicated region
        $region41: #{tpu_custom_call.1} parent=11 // pred_check
          %p297 = pneg %p214
        $region42: #{tpu_custom_call.1} parent=11 // pred_check_branch
          %299 = sbr.rel (%p297) target = $region44
        $region43: #{tpu_custom_call.1} parent=11 // pred_region
          _
        $region44: #{tpu_custom_call.1} parent=11 // pred_fallthru
          _
        // Predicated region
        $region45: #{tpu_custom_call.1} parent=11 // pred_check
          %p300 = pneg %p235
        $region46: #{tpu_custom_call.1} parent=11 // pred_check_branch
          %302 = sbr.rel (%p300) target = $region48
        $region47: #{tpu_custom_call.1} parent=11 // pred_region
          %s304 = ssub.s32 2048, 2048
          %305 = vsyncadd [#allocation6], %s304
          %s306 = sshll.u32 [#allocation5], 4
          %s307 = int_to_ptr.vmem [resolvable:$true] %s306
          %312 = dma.hbm_to_vmem [thread:$0]  %s9, 2048, %s307, [#allocation6], 256, 256, 16
        $region48: #{tpu_custom_call.1} parent=11 // pred_fallthru
          _
      $region12: #{tpu_custom_call.1} parent=5 // pred_fallthru
        _
      %p313 = scmp.lt.s32.totalorder %s20, 2
      // Predicated region
      $region49: #{tpu_custom_call.1} parent=5 // pred_check
        %p314 = pneg %p313
      $region50: #{tpu_custom_call.1} parent=5 // pred_check_branch
        %316 = sbr.rel (%p314) target = $region52
      $region51: #{tpu_custom_call.1} parent=5 // pred_region
        // Predicated region
        $region53: #{tpu_custom_call.1} parent=51 // pred_check
          %p317 = pneg %p40
        $region54: #{tpu_custom_call.1} parent=51 // pred_check_branch
          %319 = sbr.rel (%p317) target = $region56
        $region55: #{tpu_custom_call.1} parent=51 // pred_region
          %s320 = sand.u32 %s30, 1
          %s321 = scalar_lea.sflag [#allocation4], %s320
          %s322 = sand.u32 %s30, 1
          %s323 = smul.addr %s322, 128
          %s324 = scalar_lea.vmem [#allocation3], %s323
          %s326 = ssub.s32 2048, 2048
          %327 = vsyncadd %s321, %s326
          %s328 = smul.addr %s20, 32
          %s329 = smul.addr %s328, 64
          %s330 = scalar_lea.hbm %s0, %s329
          %s331 = sshll.u32 %s324, 4
          %s332 = int_to_ptr.vmem [resolvable:$true] %s331
          %337 = dma.hbm_to_vmem [thread:$0]  %s330, 2048, %s332, %s321, 64, 64, 4
        $region56: #{tpu_custom_call.1} parent=51 // pred_fallthru
          _
      $region52: #{tpu_custom_call.1} parent=5 // pred_fallthru
        _
      %p338 = scmp.le.s32.totalorder 1, %s20
      %p339 = scmp.lt.s32.totalorder %s20, 3
      %p340 = pnand %p338, %p339
      %p341 = pneg %p340
      // Predicated region
      $region57: #{tpu_custom_call.1} parent=5 // pred_check
        _
      $region58: #{tpu_custom_call.1} parent=5 // pred_check_branch
        %343 = sbr.rel (%p340) target = $region60
      $region59: #{tpu_custom_call.1} parent=5 // pred_region
        %s344 = ssub.s32 %s20, 1
        %s345 = sand.u32 %s33, 1
        %s346 = scalar_lea.sflag [#allocation4], %s345
        %s347 = sand.u32 %s33, 1
        %s348 = smul.addr %s347, 128
        %s349 = scalar_lea.vmem [#allocation3], %s348
        // Predicated region
        $region61: #{tpu_custom_call.1} parent=59 // pred_check
          %p350 = pneg %p46
        $region62: #{tpu_custom_call.1} parent=59 // pred_check_branch
          %352 = sbr.rel (%p350) target = $region64
        $region63: #{tpu_custom_call.1} parent=59 // pred_region
          %353 = dma.done %s346, 2048
        $region64: #{tpu_custom_call.1} parent=59 // pred_fallthru
          _
        // Predicated region
        $region65: #{tpu_custom_call.1} parent=59 // pred_check
          %p354 = pneg %p235
        $region66: #{tpu_custom_call.1} parent=59 // pred_check_branch
          %356 = sbr.rel (%p354) target = $region68
        $region67: #{tpu_custom_call.1} parent=59 // pred_region
          %357 = dma.done [#allocation6], 2048
        $region68: #{tpu_custom_call.1} parent=59 // pred_fallthru
          _
        %s358 = sand.u32 %s33, 1
        %s359 = scalar_lea.sflag [#allocation4], %s358
        %s360 = sand.u32 %s33, 1
        %s361 = smul.addr %s360, 128
        %s362 = scalar_lea.vmem [#allocation3], %s361
        %p363 = pneg %p46
        %p364 = pneg %p43
        %p365 = pneg %p67
        %p366 = pneg %p64
        %p367 = pneg %p88
        %p368 = pneg %p85
        %p369 = pneg %p109
        %p370 = pneg %p106
        %p371 = pneg %p130
        %p372 = pneg %p127
        %p373 = pneg %p151
        %p374 = pneg %p148
        %p375 = pneg %p172
        %p376 = pneg %p169
        %p377 = pneg %p193
        %p378 = pneg %p190
        %p379 = pneg %p214
        %p380 = pneg %p211
        %p381 = pneg %p235
        %p382 = pneg %p232
        %p383 = pneg %p261
        %p384 = pneg %p258
        %p385 = scmp.lt.s32.totalorder %s25, 1
        %s386 = scalar_select %p385, %s25, 1
        %s387 = smul.addr %s386, 8
        %s388 = smul.addr %s387, 8
        %s389 = scalar_lea.vmem %s10, %s388
        %p390 = scmp.lt.s32.totalorder %s25, 1
        %s391 = scalar_select %p390, %s25, 1
        %s392 = smul.addr %s391, 8
        %s393 = smul.addr %s392, 8
        %s394 = scalar_lea.vmem %s10, %s393
        %v396 = vld [vmem:[%s349] sm:$0xf]
        %v397 = vld [vmem:[%s349 + $0x4] sm:$0xf]
        %v398 = vld [vmem:[%s349 + $0x8] sm:$0xf]
        %v399 = vld [vmem:[%s349 + $0xc] sm:$0xf]
        %v400 = vld [vmem:[%s349 + $0x10] sm:$0xf]
        %v401 = vld [vmem:[%s349 + $0x14] sm:$0xf]
        %v402 = vld [vmem:[%s349 + $0x18] sm:$0xf]
        %v403 = vld [vmem:[%s349 + $0x1c] sm:$0xf]
        %v404 = vld [vmem:[%s349 + $0x20] sm:$0xf]
        %v405 = vld [vmem:[%s349 + $0x24] sm:$0xf]
        %v406 = vld [vmem:[%s349 + $0x28] sm:$0xf]
        %v407 = vld [vmem:[%s349 + $0x2c] sm:$0xf]
        %v408 = vld [vmem:[%s349 + $0x30] sm:$0xf]
        %v409 = vld [vmem:[%s349 + $0x34] sm:$0xf]
        %v410 = vld [vmem:[%s349 + $0x38] sm:$0xf]
        %v411 = vld [vmem:[%s349 + $0x3c] sm:$0xf]
        %v412 = vld [vmem:[%s349 + $0x40] sm:$0xf]
        %v413 = vld [vmem:[%s349 + $0x44] sm:$0xf]
        %v414 = vld [vmem:[%s349 + $0x48] sm:$0xf]
        %v415 = vld [vmem:[%s349 + $0x4c] sm:$0xf]
        %v416 = vld [vmem:[%s349 + $0x50] sm:$0xf]
        %v417 = vld [vmem:[%s349 + $0x54] sm:$0xf]
        %v418 = vld [vmem:[%s349 + $0x58] sm:$0xf]
        %v419 = vld [vmem:[%s349 + $0x5c] sm:$0xf]
        %v420 = vld [vmem:[%s349 + $0x60] sm:$0xf]
        %v421 = vld [vmem:[%s349 + $0x64] sm:$0xf]
        %v422 = vld [vmem:[%s349 + $0x68] sm:$0xf]
        %v423 = vld [vmem:[%s349 + $0x6c] sm:$0xf]
        %v424 = vld [vmem:[%s349 + $0x70] sm:$0xf]
        %v425 = vld [vmem:[%s349 + $0x74] sm:$0xf]
        %v426 = vld [vmem:[%s349 + $0x78] sm:$0xf]
        %v427 = vld [vmem:[%s349 + $0x7c] sm:$0xf]
        %v428 = vld [vmem:[%s1] sm:$0xf]
        %v429 = vld [vmem:[%s1 + $0x4] sm:$0xf]
        %v430 = vld [vmem:[%s2] sm:$0x1]
        %v432 = vlaneseq
        %v433 = vshrl.u32 %v432, 7
        %v434 = vsub.s32 0, %v433
        %v435 = vrot.slane %v430, %v434
        %v469 = vunpack.c.l.b16 %v396
        %v470 = vunpack.c.l.b16 %v397
        %v471 = vunpack.c.l.b16 %v398
        %v472 = vunpack.c.l.b16 %v399
        %v473 = vunpack.c.l.b16 %v400
        %v474 = vunpack.c.l.b16 %v401
        %v475 = vunpack.c.l.b16 %v402
        %v476 = vunpack.c.l.b16 %v403
        %v477 = vunpack.c.l.b16 %v404
        %v478 = vunpack.c.l.b16 %v405
        %v479 = vunpack.c.l.b16 %v406
        %v480 = vunpack.c.l.b16 %v407
        %v481 = vunpack.c.l.b16 %v408
        %v482 = vunpack.c.l.b16 %v409
        %v483 = vunpack.c.l.b16 %v410
        %v484 = vunpack.c.l.b16 %v411
        %v485 = vunpack.c.l.b16 %v412
        %v486 = vunpack.c.l.b16 %v413
        %v487 = vunpack.c.l.b16 %v414
        %v488 = vunpack.c.l.b16 %v415
        %v489 = vunpack.c.l.b16 %v416
        %v490 = vunpack.c.l.b16 %v417
        %v491 = vunpack.c.l.b16 %v418
        %v492 = vunpack.c.l.b16 %v419
        %v493 = vunpack.c.l.b16 %v420
        %v494 = vunpack.c.l.b16 %v421
        %v495 = vunpack.c.l.b16 %v422
        %v496 = vunpack.c.l.b16 %v423
        %v497 = vunpack.c.l.b16 %v424
        %v498 = vunpack.c.l.b16 %v425
        %v499 = vunpack.c.l.b16 %v426
        %v500 = vunpack.c.l.b16 %v427
        %v501 = vpack.c.b16 %v470, %v469
        %v502 = vpack.c.b16 %v472, %v471
        %v503 = vpack.c.b16 %v474, %v473
        %v504 = vpack.c.b16 %v476, %v475
        %v505 = vpack.c.b16 %v478, %v477
        %v506 = vpack.c.b16 %v480, %v479
        %v507 = vpack.c.b16 %v482, %v481
        %v508 = vpack.c.b16 %v484, %v483
        %v509 = vpack.c.b16 %v486, %v485
        %v510 = vpack.c.b16 %v488, %v487
        %v511 = vpack.c.b16 %v490, %v489
        %v512 = vpack.c.b16 %v492, %v491
        %v513 = vpack.c.b16 %v494, %v493
        %v514 = vpack.c.b16 %v496, %v495
        %v515 = vpack.c.b16 %v498, %v497
        %v516 = vpack.c.b16 %v500, %v499
        %v519 = vunpack.c.l.b16 %v428
        %v520 = vunpack.c.l.b16 %v429
        %v521 = vpack.c.b16 %v520, %v519
        %vm523 = vcmask 130048
        %v525 = vsel %vm523, %v501, 0
        %v528 = vsel %vm523, %v502, 0
        %v531 = vsel %vm523, %v503, 0
        %v534 = vsel %vm523, %v504, 0
        %v537 = vsel %vm523, %v505, 0
        %v540 = vsel %vm523, %v506, 0
        %v543 = vsel %vm523, %v507, 0
        %v546 = vsel %vm523, %v508, 0
        %v549 = vsel %vm523, %v509, 0
        %v552 = vsel %vm523, %v510, 0
        %v555 = vsel %vm523, %v511, 0
        %v558 = vsel %vm523, %v512, 0
        %v561 = vsel %vm523, %v513, 0
        %v564 = vsel %vm523, %v514, 0
        %v567 = vsel %vm523, %v515, 0
        %v570 = vsel %vm523, %v516, 0
        %572 = vmatprep.subr.bf16.mxu0 0
        %573 = vmatpush1.bf16.msra.mxu0 0
        %574 = vmatprep.subr.bf16.mxu0 0
        %575 = vmatpush1.bf16.msra.mxu0 0
        %576 = vmatprep.subr.bf16.mxu0 0
        %577 = vmatpush1.bf16.msra.mxu0 0
        %578 = vmatprep.subr.bf16.mxu0 0
        %579 = vmatpush1.bf16.msra.mxu0 0
        %580 = vmatprep.subr.bf16.mxu0 0
        %581 = vmatpush1.bf16.msra.mxu0 0
        %582 = vmatprep.subr.bf16.mxu0 0
        %583 = vmatpush1.bf16.msra.mxu0 0
        %584 = vmatprep.subr.bf16.mxu0 0
        %585 = vmatpush1.bf16.msra.mxu0 0
        %586 = vmatprep.subr.bf16.mxu0 0
        %587 = vmatpush1.bf16.msra.mxu0 %v521
        %588 = vmatprep.subr.bf16.mxu0 0
        %589 = vmatpush2.bf16.msra.mxu0 0
        %590 = vmatprep.subr.bf16.mxu0 0
        %591 = vmatpush2.bf16.msra.mxu0 0
        %592 = vmatprep.subr.bf16.mxu0 0
        %593 = vmatpush2.bf16.msra.mxu0 0
        %594 = vmatprep.subr.bf16.mxu0 0
        %595 = vmatpush2.bf16.msra.mxu0 0
        %596 = vmatprep.subr.bf16.mxu0 0
        %597 = vmatpush2.bf16.msra.mxu0 0
        %598 = vmatprep.subr.bf16.mxu0 0
        %599 = vmatpush2.bf16.msra.mxu0 0
        %600 = vmatprep.subr.bf16.mxu0 0
        %601 = vmatpush2.bf16.msra.mxu0 0
        %602 = vmatprep.subr.bf16.mxu0 0
        %603 = vmatpush2.bf16.msra.mxu0 0
        %604 = vmatprep.mubr.bf16.mxu0 0
        %605 = vmatmul.mubr.bf16.gmra.mxu0 %v525
        %v606 = vpop.f32.mrf.mxu0
        %v607 = vadd.f32 %v435, %v606
        %v608 = vpop.f32.mrf.mxu0
        %v609 = vpop.f32.mrf.mxu0
        %v610 = vadd.f32 %v435, %v609
        %v611 = vpop.f32.mrf.mxu0
        %612 = vmatprep.mubr.bf16.mxu0 0
        %613 = vmatmul.mubr.bf16.gmra.mxu0 %v528
        %v614 = vpop.f32.mrf.mxu0
        %v615 = vadd.f32 %v435, %v614
        %v616 = vpop.f32.mrf.mxu0
        %v617 = vpop.f32.mrf.mxu0
        %v618 = vadd.f32 %v435, %v617
        %v619 = vpop.f32.mrf.mxu0
        %620 = vmatprep.mubr.bf16.mxu0 0
        %621 = vmatmul.mubr.bf16.gmra.mxu0 %v531
        %v622 = vpop.f32.mrf.mxu0
        %v623 = vadd.f32 %v435, %v622
        %v624 = vpop.f32.mrf.mxu0
        %v625 = vpop.f32.mrf.mxu0
        %v626 = vadd.f32 %v435, %v625
        %v627 = vpop.f32.mrf.mxu0
        %628 = vmatprep.mubr.bf16.mxu0 0
        %629 = vmatmul.mubr.bf16.gmra.mxu0 %v534
        %v630 = vpop.f32.mrf.mxu0
        %v631 = vadd.f32 %v435, %v630
        %v632 = vpop.f32.mrf.mxu0
        %v633 = vpop.f32.mrf.mxu0
        %v634 = vadd.f32 %v435, %v633
        %v635 = vpop.f32.mrf.mxu0
        %636 = vmatprep.mubr.bf16.mxu0 0
        %637 = vmatmul.mubr.bf16.gmra.mxu0 %v537
        %v638 = vpop.f32.mrf.mxu0
        %v639 = vadd.f32 %v435, %v638
        %v640 = vpop.f32.mrf.mxu0
        %v641 = vpop.f32.mrf.mxu0
        %v642 = vadd.f32 %v435, %v641
        %v643 = vpop.f32.mrf.mxu0
        %644 = vmatprep.mubr.bf16.mxu0 0
        %645 = vmatmul.mubr.bf16.gmra.mxu0 %v540
        %v646 = vpop.f32.mrf.mxu0
        %v647 = vadd.f32 %v435, %v646
        %v648 = vpop.f32.mrf.mxu0
        %v649 = vpop.f32.mrf.mxu0
        %v650 = vadd.f32 %v435, %v649
        %v651 = vpop.f32.mrf.mxu0
        %652 = vmatprep.mubr.bf16.mxu0 0
        %653 = vmatmul.mubr.bf16.gmra.mxu0 %v543
        %v654 = vpop.f32.mrf.mxu0
        %v655 = vadd.f32 %v435, %v654
        %v656 = vpop.f32.mrf.mxu0
        %v657 = vpop.f32.mrf.mxu0
        %v658 = vadd.f32 %v435, %v657
        %v659 = vpop.f32.mrf.mxu0
        %660 = vmatprep.mubr.bf16.mxu0 0
        %661 = vmatmul.mubr.bf16.gmra.mxu0 %v546
        %v662 = vpop.f32.mrf.mxu0
        %v663 = vadd.f32 %v435, %v662
        %v664 = vpop.f32.mrf.mxu0
        %v665 = vpop.f32.mrf.mxu0
        %v666 = vadd.f32 %v435, %v665
        %v667 = vpop.f32.mrf.mxu0
        %668 = vmatprep.mubr.bf16.mxu0 0
        %669 = vmatmul.mubr.bf16.gmra.mxu0 %v549
        %v670 = vpop.f32.mrf.mxu0
        %v671 = vadd.f32 %v435, %v670
        %v672 = vpop.f32.mrf.mxu0
        %v673 = vpop.f32.mrf.mxu0
        %v674 = vadd.f32 %v435, %v673
        %v675 = vpop.f32.mrf.mxu0
        %676 = vmatprep.mubr.bf16.mxu0 0
        %677 = vmatmul.mubr.bf16.gmra.mxu0 %v552
        %v678 = vpop.f32.mrf.mxu0
        %v679 = vadd.f32 %v435, %v678
        %v680 = vpop.f32.mrf.mxu0
        %v681 = vpop.f32.mrf.mxu0
        %v682 = vadd.f32 %v435, %v681
        %v683 = vpop.f32.mrf.mxu0
        %684 = vmatprep.mubr.bf16.mxu0 0
        %685 = vmatmul.mubr.bf16.gmra.mxu0 %v555
        %v686 = vpop.f32.mrf.mxu0
        %v687 = vadd.f32 %v435, %v686
        %v688 = vpop.f32.mrf.mxu0
        %v689 = vpop.f32.mrf.mxu0
        %v690 = vadd.f32 %v435, %v689
        %v691 = vpop.f32.mrf.mxu0
        %692 = vmatprep.mubr.bf16.mxu0 0
        %693 = vmatmul.mubr.bf16.gmra.mxu0 %v558
        %v694 = vpop.f32.mrf.mxu0
        %v695 = vadd.f32 %v435, %v694
        %v696 = vpop.f32.mrf.mxu0
        %v697 = vpop.f32.mrf.mxu0
        %v698 = vadd.f32 %v435, %v697
        %v699 = vpop.f32.mrf.mxu0
        %700 = vmatprep.mubr.bf16.mxu0 0
        %701 = vmatmul.mubr.bf16.gmra.mxu0 %v561
        %v702 = vpop.f32.mrf.mxu0
        %v703 = vadd.f32 %v435, %v702
        %v704 = vpop.f32.mrf.mxu0
        %v705 = vpop.f32.mrf.mxu0
        %v706 = vadd.f32 %v435, %v705
        %v707 = vpop.f32.mrf.mxu0
        %708 = vmatprep.mubr.bf16.mxu0 0
        %709 = vmatmul.mubr.bf16.gmra.mxu0 %v564
        %v710 = vpop.f32.mrf.mxu0
        %v711 = vadd.f32 %v435, %v710
        %v712 = vpop.f32.mrf.mxu0
        %v713 = vpop.f32.mrf.mxu0
        %v714 = vadd.f32 %v435, %v713
        %v715 = vpop.f32.mrf.mxu0
        %716 = vmatprep.mubr.bf16.mxu0 0
        %717 = vmatmul.mubr.bf16.gmra.mxu0 %v567
        %v718 = vpop.f32.mrf.mxu0
        %v719 = vadd.f32 %v435, %v718
        %v720 = vpop.f32.mrf.mxu0
        %v721 = vpop.f32.mrf.mxu0
        %v722 = vadd.f32 %v435, %v721
        %v723 = vpop.f32.mrf.mxu0
        %724 = vmatprep.mubr.bf16.mxu0 0
        %725 = vmatmul.mubr.bf16.gmra.mxu0 %v570
        %v726 = vpop.f32.mrf.mxu0
        %v727 = vadd.f32 %v435, %v726
        %v728 = vpop.f32.mrf.mxu0
        %v729 = vpop.f32.mrf.mxu0
        %v730 = vadd.f32 %v435, %v729
        %v731 = vpop.f32.mrf.mxu0
        %732 = vdwg.mxu0
        %v733 = vmax.f32 %v607, 0.0
        %v734 = vmax.f32 %v610, 0.0
        %v735 = vmax.f32 %v615, 0.0
        %v736 = vmax.f32 %v618, 0.0
        %v737 = vmax.f32 %v623, 0.0
        %v738 = vmax.f32 %v626, 0.0
        %v739 = vmax.f32 %v631, 0.0
        %v740 = vmax.f32 %v634, 0.0
        %v741 = vmax.f32 %v639, 0.0
        %v742 = vmax.f32 %v642, 0.0
        %v743 = vmax.f32 %v647, 0.0
        %v744 = vmax.f32 %v650, 0.0
        %v745 = vmax.f32 %v655, 0.0
        %v746 = vmax.f32 %v658, 0.0
        %v747 = vmax.f32 %v663, 0.0
        %v748 = vmax.f32 %v666, 0.0
        %v749 = vmax.f32 %v671, 0.0
        %v750 = vmax.f32 %v674, 0.0
        %v751 = vmax.f32 %v679, 0.0
        %v752 = vmax.f32 %v682, 0.0
        %v753 = vmax.f32 %v687, 0.0
        %v754 = vmax.f32 %v690, 0.0
        %v755 = vmax.f32 %v695, 0.0
        %v756 = vmax.f32 %v698, 0.0
        %v757 = vmax.f32 %v703, 0.0
        %v758 = vmax.f32 %v706, 0.0
        %v759 = vmax.f32 %v711, 0.0
        %v760 = vmax.f32 %v714, 0.0
        %v761 = vmax.f32 %v719, 0.0
        %v762 = vmax.f32 %v722, 0.0
        %v763 = vmax.f32 %v727, 0.0
        %v764 = vmax.f32 %v730, 0.0
        %v765 = vpack.c.bf16 %v734, %v733
        %v766 = vpack.c.bf16 %v736, %v735
        %v767 = vpack.c.bf16 %v738, %v737
        %v768 = vpack.c.bf16 %v740, %v739
        %v769 = vpack.c.bf16 %v742, %v741
        %v770 = vpack.c.bf16 %v744, %v743
        %v771 = vpack.c.bf16 %v746, %v745
        %v772 = vpack.c.bf16 %v748, %v747
        %v773 = vpack.c.bf16 %v750, %v749
        %v774 = vpack.c.bf16 %v752, %v751
        %v775 = vpack.c.bf16 %v754, %v753
        %v776 = vpack.c.bf16 %v756, %v755
        %v777 = vpack.c.bf16 %v758, %v757
        %v778 = vpack.c.bf16 %v760, %v759
        %v779 = vpack.c.bf16 %v762, %v761
        %v780 = vpack.c.bf16 %v764, %v763
        %vm781 = vcmask 64512
        %782 = vst.msk [vmem:[#allocation2] sm:$0xff] %vm781, 0.0
        %783 = vst.msk [vmem:[#allocation2 + $0x8] sm:$0xff] %vm781, 0.0
        %784 = vst.msk [vmem:[#allocation2 + $0x10] sm:$0xff] %vm781, 0.0
        %785 = vst.msk [vmem:[#allocation2 + $0x118] sm:$0xff] %vm781, 0.0
        %786 = vst.msk [vmem:[#allocation2 + $0x120] sm:$0xff] %vm781, 0.0
        %787 = vst.msk [vmem:[#allocation2 + $0x128] sm:$0xff] %vm781, 0.0
        %788 = vst.msk [vmem:[#allocation2 + $0x18] sm:$0xff] %vm781, %v733
        %789 = vst.msk [vmem:[#allocation2 + $0x20] sm:$0xff] %vm781, %v734
        %790 = vst.msk [vmem:[#allocation2 + $0x28] sm:$0xff] %vm781, %v735
        %791 = vst.msk [vmem:[#allocation2 + $0x30] sm:$0xff] %vm781, %v736
        %792 = vst.msk [vmem:[#allocation2 + $0x38] sm:$0xff] %vm781, %v737
        %793 = vst.msk [vmem:[#allocation2 + $0x40] sm:$0xff] %vm781, %v738
        %794 = vst.msk [vmem:[#allocation2 + $0x48] sm:$0xff] %vm781, %v739
        %795 = vst.msk [vmem:[#allocation2 + $0x50] sm:$0xff] %vm781, %v740
        %796 = vst.msk [vmem:[#allocation2 + $0x58] sm:$0xff] %vm781, %v741
        %797 = vst.msk [vmem:[#allocation2 + $0x60] sm:$0xff] %vm781, %v742
        %798 = vst.msk [vmem:[#allocation2 + $0x68] sm:$0xff] %vm781, %v743
        %799 = vst.msk [vmem:[#allocation2 + $0x70] sm:$0xff] %vm781, %v744
        %800 = vst.msk [vmem:[#allocation2 + $0x78] sm:$0xff] %vm781, %v745
        %801 = vst.msk [vmem:[#allocation2 + $0x80] sm:$0xff] %vm781, %v746
        %802 = vst.msk [vmem:[#allocation2 + $0x88] sm:$0xff] %vm781, %v747
        %803 = vst.msk [vmem:[#allocation2 + $0x90] sm:$0xff] %vm781, %v748
        %804 = vst.msk [vmem:[#allocation2 + $0x98] sm:$0xff] %vm781, %v749
        %805 = vst.msk [vmem:[#allocation2 + $0xa0] sm:$0xff] %vm781, %v750
        %806 = vst.msk [vmem:[#allocation2 + $0xa8] sm:$0xff] %vm781, %v751
        %807 = vst.msk [vmem:[#allocation2 + $0xb0] sm:$0xff] %vm781, %v752
        %808 = vst.msk [vmem:[#allocation2 + $0xb8] sm:$0xff] %vm781, %v753
        %809 = vst.msk [vmem:[#allocation2 + $0xc0] sm:$0xff] %vm781, %v754
        %810 = vst.msk [vmem:[#allocation2 + $0xc8] sm:$0xff] %vm781, %v755
        %811 = vst.msk [vmem:[#allocation2 + $0xd0] sm:$0xff] %vm781, %v756
        %812 = vst.msk [vmem:[#allocation2 + $0xd8] sm:$0xff] %vm781, %v757
        %813 = vst.msk [vmem:[#allocation2 + $0xe0] sm:$0xff] %vm781, %v758
        %814 = vst.msk [vmem:[#allocation2 + $0xe8] sm:$0xff] %vm781, %v759
        %815 = vst.msk [vmem:[#allocation2 + $0xf0] sm:$0xff] %vm781, %v760
        %816 = vst.msk [vmem:[#allocation2 + $0xf8] sm:$0xff] %vm781, %v761
        %817 = vst.msk [vmem:[#allocation2 + $0x100] sm:$0xff] %vm781, %v762
        %818 = vst.msk [vmem:[#allocation2 + $0x108] sm:$0xff] %vm781, %v763
        %819 = vst.msk [vmem:[#allocation2 + $0x110] sm:$0xff] %vm781, %v764
        %v820 = vlaneseq
        %v821 = vshrl.u32 %v820, 7
        %v822 = vadd.s32 %v821, 8
        %v823 = vadd.s32 %v821, 16
        %v824 = vadd.s32 %v821, 24
        %v825 = vadd.s32 %v821, 32
        %v826 = vadd.s32 %v821, 40
        %v827 = vadd.s32 %v821, 48
        %v828 = vadd.s32 %v821, 56
        %v829 = vadd.s32 %v821, 64
        %v830 = vadd.s32 %v821, 72
        %v831 = vadd.s32 %v821, 80
        %v832 = vadd.s32 %v821, 88
        %v833 = vadd.s32 %v821, 96
        %v834 = vadd.s32 %v821, 104
        %v835 = vadd.s32 %v821, 112
        %v836 = vadd.s32 %v821, 120
        %v837 = vadd.s32 %v821, 128
        %v838 = vadd.s32 %v821, 136
        %v839 = vadd.s32 %v821, 144
        %v840 = vadd.s32 %v821, 152
        %v841 = vadd.s32 %v821, 160
        %v842 = vadd.s32 %v821, 168
        %v843 = vadd.s32 %v821, 176
        %v844 = vadd.s32 %v821, 184
        %v845 = vadd.s32 %v821, 192
        %v846 = vadd.s32 %v821, 200
        %v847 = vadd.s32 %v821, 208
        %v848 = vadd.s32 %v821, 216
        %v849 = vadd.s32 %v821, 224
        %v850 = vadd.s32 %v821, 232
        %v851 = vadd.s32 %v821, 240
        %v852 = vadd.s32 %v821, 248
        %vm853 = vcmp.lt.s32.totalorder %v821, 0
        %v854 = vsub.s32 0, %v821
        %v855 = vsel %vm853, %v854, %v821
        %v856 = vshrl.u32 %v855, 4
        %v857 = vand.u32 %v855, 15
        %v858 = vsub.s32 0, %v857
        %v859 = vsel %vm853, %v858, %v857
        %vm860 = vcmp.lt.s32.totalorder %v822, 0
        %v861 = vsub.s32 0, %v822
        %v862 = vsel %vm860, %v861, %v822
        %v863 = vshrl.u32 %v862, 4
        %v864 = vand.u32 %v862, 15
        %v865 = vsub.s32 0, %v864
        %v866 = vsel %vm860, %v865, %v864
        %vm867 = vcmp.lt.s32.totalorder %v823, 0
        %v868 = vsub.s32 0, %v823
        %v869 = vsel %vm867, %v868, %v823
        %v870 = vshrl.u32 %v869, 4
        %v871 = vand.u32 %v869, 15
        %v872 = vsub.s32 0, %v871
        %v873 = vsel %vm867, %v872, %v871
        %vm874 = vcmp.lt.s32.totalorder %v824, 0
        %v875 = vsub.s32 0, %v824
        %v876 = vsel %vm874, %v875, %v824
        %v877 = vshrl.u32 %v876, 4
        %v878 = vand.u32 %v876, 15
        %v879 = vsub.s32 0, %v878
        %v880 = vsel %vm874, %v879, %v878
        %vm881 = vcmp.lt.s32.totalorder %v825, 0
        %v882 = vsub.s32 0, %v825
        %v883 = vsel %vm881, %v882, %v825
        %v884 = vshrl.u32 %v883, 4
        %v885 = vand.u32 %v883, 15
        %v886 = vsub.s32 0, %v885
        %v887 = vsel %vm881, %v886, %v885
        %vm888 = vcmp.lt.s32.totalorder %v826, 0
        %v889 = vsub.s32 0, %v826
        %v890 = vsel %vm888, %v889, %v826
        %v891 = vshrl.u32 %v890, 4
        %v892 = vand.u32 %v890, 15
        %v893 = vsub.s32 0, %v892
        %v894 = vsel %vm888, %v893, %v892
        %vm895 = vcmp.lt.s32.totalorder %v827, 0
        %v896 = vsub.s32 0, %v827
        %v897 = vsel %vm895, %v896, %v827
        %v898 = vshrl.u32 %v897, 4
        %v899 = vand.u32 %v897, 15
        %v900 = vsub.s32 0, %v899
        %v901 = vsel %vm895, %v900, %v899
        %vm902 = vcmp.lt.s32.totalorder %v828, 0
        %v903 = vsub.s32 0, %v828
        %v904 = vsel %vm902, %v903, %v828
        %v905 = vshrl.u32 %v904, 4
        %v906 = vand.u32 %v904, 15
        %v907 = vsub.s32 0, %v906
        %v908 = vsel %vm902, %v907, %v906
        %vm909 = vcmp.lt.s32.totalorder %v829, 0
        %v910 = vsub.s32 0, %v829
        %v911 = vsel %vm909, %v910, %v829
        %v912 = vshrl.u32 %v911, 4
        %v913 = vand.u32 %v911, 15
        %v914 = vsub.s32 0, %v913
        %v915 = vsel %vm909, %v914, %v913
        %vm916 = vcmp.lt.s32.totalorder %v830, 0
        %v917 = vsub.s32 0, %v830
        %v918 = vsel %vm916, %v917, %v830
        %v919 = vshrl.u32 %v918, 4
        %v920 = vand.u32 %v918, 15
        %v921 = vsub.s32 0, %v920
        %v922 = vsel %vm916, %v921, %v920
        %vm923 = vcmp.lt.s32.totalorder %v831, 0
        %v924 = vsub.s32 0, %v831
        %v925 = vsel %vm923, %v924, %v831
        %v926 = vshrl.u32 %v925, 4
        %v927 = vand.u32 %v925, 15
        %v928 = vsub.s32 0, %v927
        %v929 = vsel %vm923, %v928, %v927
        %vm930 = vcmp.lt.s32.totalorder %v832, 0
        %v931 = vsub.s32 0, %v832
        %v932 = vsel %vm930, %v931, %v832
        %v933 = vshrl.u32 %v932, 4
        %v934 = vand.u32 %v932, 15
        %v935 = vsub.s32 0, %v934
        %v936 = vsel %vm930, %v935, %v934
        %vm937 = vcmp.lt.s32.totalorder %v833, 0
        %v938 = vsub.s32 0, %v833
        %v939 = vsel %vm937, %v938, %v833
        %v940 = vshrl.u32 %v939, 4
        %v941 = vand.u32 %v939, 15
        %v942 = vsub.s32 0, %v941
        %v943 = vsel %vm937, %v942, %v941
        %vm944 = vcmp.lt.s32.totalorder %v834, 0
        %v945 = vsub.s32 0, %v834
        %v946 = vsel %vm944, %v945, %v834
        %v947 = vshrl.u32 %v946, 4
        %v948 = vand.u32 %v946, 15
        %v949 = vsub.s32 0, %v948
        %v950 = vsel %vm944, %v949, %v948
        %vm951 = vcmp.lt.s32.totalorder %v835, 0
        %v952 = vsub.s32 0, %v835
        %v953 = vsel %vm951, %v952, %v835
        %v954 = vshrl.u32 %v953, 4
        %v955 = vand.u32 %v953, 15
        %v956 = vsub.s32 0, %v955
        %v957 = vsel %vm951, %v956, %v955
        %vm958 = vcmp.lt.s32.totalorder %v836, 0
        %v959 = vsub.s32 0, %v836
        %v960 = vsel %vm958, %v959, %v836
        %v961 = vshrl.u32 %v960, 4
        %v962 = vand.u32 %v960, 15
        %v963 = vsub.s32 0, %v962
        %v964 = vsel %vm958, %v963, %v962
        %vm965 = vcmp.lt.s32.totalorder %v837, 0
        %v966 = vsub.s32 0, %v837
        %v967 = vsel %vm965, %v966, %v837
        %v968 = vshrl.u32 %v967, 4
        %v969 = vand.u32 %v967, 15
        %v970 = vsub.s32 0, %v969
        %v971 = vsel %vm965, %v970, %v969
        %vm972 = vcmp.lt.s32.totalorder %v838, 0
        %v973 = vsub.s32 0, %v838
        %v974 = vsel %vm972, %v973, %v838
        %v975 = vshrl.u32 %v974, 4
        %v976 = vand.u32 %v974, 15
        %v977 = vsub.s32 0, %v976
        %v978 = vsel %vm972, %v977, %v976
        %vm979 = vcmp.lt.s32.totalorder %v839, 0
        %v980 = vsub.s32 0, %v839
        %v981 = vsel %vm979, %v980, %v839
        %v982 = vshrl.u32 %v981, 4
        %v983 = vand.u32 %v981, 15
        %v984 = vsub.s32 0, %v983
        %v985 = vsel %vm979, %v984, %v983
        %vm986 = vcmp.lt.s32.totalorder %v840, 0
        %v987 = vsub.s32 0, %v840
        %v988 = vsel %vm986, %v987, %v840
        %v989 = vshrl.u32 %v988, 4
        %v990 = vand.u32 %v988, 15
        %v991 = vsub.s32 0, %v990
        %v992 = vsel %vm986, %v991, %v990
        %vm993 = vcmp.lt.s32.totalorder %v841, 0
        %v994 = vsub.s32 0, %v841
        %v995 = vsel %vm993, %v994, %v841
        %v996 = vshrl.u32 %v995, 4
        %v997 = vand.u32 %v995, 15
        %v998 = vsub.s32 0, %v997
        %v999 = vsel %vm993, %v998, %v997
        %vm1000 = vcmp.lt.s32.totalorder %v842, 0
        %v1001 = vsub.s32 0, %v842
        %v1002 = vsel %vm1000, %v1001, %v842
        %v1003 = vshrl.u32 %v1002, 4
        %v1004 = vand.u32 %v1002, 15
        %v1005 = vsub.s32 0, %v1004
        %v1006 = vsel %vm1000, %v1005, %v1004
        %vm1007 = vcmp.lt.s32.totalorder %v843, 0
        %v1008 = vsub.s32 0, %v843
        %v1009 = vsel %vm1007, %v1008, %v843
        %v1010 = vshrl.u32 %v1009, 4
        %v1011 = vand.u32 %v1009, 15
        %v1012 = vsub.s32 0, %v1011
        %v1013 = vsel %vm1007, %v1012, %v1011
        %vm1014 = vcmp.lt.s32.totalorder %v844, 0
        %v1015 = vsub.s32 0, %v844
        %v1016 = vsel %vm1014, %v1015, %v844
        %v1017 = vshrl.u32 %v1016, 4
        %v1018 = vand.u32 %v1016, 15
        %v1019 = vsub.s32 0, %v1018
        %v1020 = vsel %vm1014, %v1019, %v1018
        %vm1021 = vcmp.lt.s32.totalorder %v845, 0
        %v1022 = vsub.s32 0, %v845
        %v1023 = vsel %vm1021, %v1022, %v845
        %v1024 = vshrl.u32 %v1023, 4
        %v1025 = vand.u32 %v1023, 15
        %v1026 = vsub.s32 0, %v1025
        %v1027 = vsel %vm1021, %v1026, %v1025
        %vm1028 = vcmp.lt.s32.totalorder %v846, 0
        %v1029 = vsub.s32 0, %v846
        %v1030 = vsel %vm1028, %v1029, %v846
        %v1031 = vshrl.u32 %v1030, 4
        %v1032 = vand.u32 %v1030, 15
        %v1033 = vsub.s32 0, %v1032
        %v1034 = vsel %vm1028, %v1033, %v1032
        %vm1035 = vcmp.lt.s32.totalorder %v847, 0
        %v1036 = vsub.s32 0, %v847
        %v1037 = vsel %vm1035, %v1036, %v847
        %v1038 = vshrl.u32 %v1037, 4
        %v1039 = vand.u32 %v1037, 15
        %v1040 = vsub.s32 0, %v1039
        %v1041 = vsel %vm1035, %v1040, %v1039
        %vm1042 = vcmp.lt.s32.totalorder %v848, 0
        %v1043 = vsub.s32 0, %v848
        %v1044 = vsel %vm1042, %v1043, %v848
        %v1045 = vshrl.u32 %v1044, 4
        %v1046 = vand.u32 %v1044, 15
        %v1047 = vsub.s32 0, %v1046
        %v1048 = vsel %vm1042, %v1047, %v1046
        %vm1049 = vcmp.lt.s32.totalorder %v849, 0
        %v1050 = vsub.s32 0, %v849
        %v1051 = vsel %vm1049, %v1050, %v849
        %v1052 = vshrl.u32 %v1051, 4
        %v1053 = vand.u32 %v1051, 15
        %v1054 = vsub.s32 0, %v1053
        %v1055 = vsel %vm1049, %v1054, %v1053
        %vm1056 = vcmp.lt.s32.totalorder %v850, 0
        %v1057 = vsub.s32 0, %v850
        %v1058 = vsel %vm1056, %v1057, %v850
        %v1059 = vshrl.u32 %v1058, 4
        %v1060 = vand.u32 %v1058, 15
        %v1061 = vsub.s32 0, %v1060
        %v1062 = vsel %vm1056, %v1061, %v1060
        %vm1063 = vcmp.lt.s32.totalorder %v851, 0
        %v1064 = vsub.s32 0, %v851
        %v1065 = vsel %vm1063, %v1064, %v851
        %v1066 = vshrl.u32 %v1065, 4
        %v1067 = vand.u32 %v1065, 15
        %v1068 = vsub.s32 0, %v1067
        %v1069 = vsel %vm1063, %v1068, %v1067
        %vm1070 = vcmp.lt.s32.totalorder %v852, 0
        %v1071 = vsub.s32 0, %v852
        %v1072 = vsel %vm1070, %v1071, %v852
        %v1073 = vshrl.u32 %v1072, 4
        %v1074 = vand.u32 %v1072, 15
        %v1075 = vsub.s32 0, %v1074
        %v1076 = vsel %vm1070, %v1075, %v1074
        %vm1077 = vcmp.ne.s32.totalorder %v859, 0
        %vm1078 = vcmp.ne.s32.totalorder %v866, 0
        %vm1079 = vcmp.ne.s32.totalorder %v873, 0
        %vm1080 = vcmp.ne.s32.totalorder %v880, 0
        %vm1081 = vcmp.ne.s32.totalorder %v887, 0
        %vm1082 = vcmp.ne.s32.totalorder %v894, 0
        %vm1083 = vcmp.ne.s32.totalorder %v901, 0
        %vm1084 = vcmp.ne.s32.totalorder %v908, 0
        %vm1085 = vcmp.ne.s32.totalorder %v915, 0
        %vm1086 = vcmp.ne.s32.totalorder %v922, 0
        %vm1087 = vcmp.ne.s32.totalorder %v929, 0
        %vm1088 = vcmp.ne.s32.totalorder %v936, 0
        %vm1089 = vcmp.ne.s32.totalorder %v943, 0
        %vm1090 = vcmp.ne.s32.totalorder %v950, 0
        %vm1091 = vcmp.ne.s32.totalorder %v957, 0
        %vm1092 = vcmp.ne.s32.totalorder %v964, 0
        %vm1093 = vcmp.ne.s32.totalorder %v971, 0
        %vm1094 = vcmp.ne.s32.totalorder %v978, 0
        %vm1095 = vcmp.ne.s32.totalorder %v985, 0
        %vm1096 = vcmp.ne.s32.totalorder %v992, 0
        %vm1097 = vcmp.ne.s32.totalorder %v999, 0
        %vm1098 = vcmp.ne.s32.totalorder %v1006, 0
        %vm1099 = vcmp.ne.s32.totalorder %v1013, 0
        %vm1100 = vcmp.ne.s32.totalorder %v1020, 0
        %vm1101 = vcmp.ne.s32.totalorder %v1027, 0
        %vm1102 = vcmp.ne.s32.totalorder %v1034, 0
        %vm1103 = vcmp.ne.s32.totalorder %v1041, 0
        %vm1104 = vcmp.ne.s32.totalorder %v1048, 0
        %vm1105 = vcmp.ne.s32.totalorder %v1055, 0
        %vm1106 = vcmp.ne.s32.totalorder %v1062, 0
        %vm1107 = vcmp.ne.s32.totalorder %v1069, 0
        %vm1108 = vcmp.ne.s32.totalorder %v1076, 0
        %vm1109 = vcmp.lt.s32.totalorder %v859, 0
        %vm1110 = vcmp.lt.s32.totalorder %v866, 0
        %vm1111 = vcmp.lt.s32.totalorder %v873, 0
        %vm1112 = vcmp.lt.s32.totalorder %v880, 0
        %vm1113 = vcmp.lt.s32.totalorder %v887, 0
        %vm1114 = vcmp.lt.s32.totalorder %v894, 0
        %vm1115 = vcmp.lt.s32.totalorder %v901, 0
        %vm1116 = vcmp.lt.s32.totalorder %v908, 0
        %vm1117 = vcmp.lt.s32.totalorder %v915, 0
        %vm1118 = vcmp.lt.s32.totalorder %v922, 0
        %vm1119 = vcmp.lt.s32.totalorder %v929, 0
        %vm1120 = vcmp.lt.s32.totalorder %v936, 0
        %vm1121 = vcmp.lt.s32.totalorder %v943, 0
        %vm1122 = vcmp.lt.s32.totalorder %v950, 0
        %vm1123 = vcmp.lt.s32.totalorder %v957, 0
        %vm1124 = vcmp.lt.s32.totalorder %v964, 0
        %vm1125 = vcmp.lt.s32.totalorder %v971, 0
        %vm1126 = vcmp.lt.s32.totalorder %v978, 0
        %vm1127 = vcmp.lt.s32.totalorder %v985, 0
        %vm1128 = vcmp.lt.s32.totalorder %v992, 0
        %vm1129 = vcmp.lt.s32.totalorder %v999, 0
        %vm1130 = vcmp.lt.s32.totalorder %v1006, 0
        %vm1131 = vcmp.lt.s32.totalorder %v1013, 0
        %vm1132 = vcmp.lt.s32.totalorder %v1020, 0
        %vm1133 = vcmp.lt.s32.totalorder %v1027, 0
        %vm1134 = vcmp.lt.s32.totalorder %v1034, 0
        %vm1135 = vcmp.lt.s32.totalorder %v1041, 0
        %vm1136 = vcmp.lt.s32.totalorder %v1048, 0
        %vm1137 = vcmp.lt.s32.totalorder %v1055, 0
        %vm1138 = vcmp.lt.s32.totalorder %v1062, 0
        %vm1139 = vcmp.lt.s32.totalorder %v1069, 0
        %vm1140 = vcmp.lt.s32.totalorder %v1076, 0
        %vm1141 = vmand %vm1109, %vm1077
        %vm1142 = vmand %vm1110, %vm1078
        %vm1143 = vmand %vm1111, %vm1079
        %vm1144 = vmand %vm1112, %vm1080
        %vm1145 = vmand %vm1113, %vm1081
        %vm1146 = vmand %vm1114, %vm1082
        %vm1147 = vmand %vm1115, %vm1083
        %vm1148 = vmand %vm1116, %vm1084
        %vm1149 = vmand %vm1117, %vm1085
        %vm1150 = vmand %vm1118, %vm1086
        %vm1151 = vmand %vm1119, %vm1087
        %vm1152 = vmand %vm1120, %vm1088
        %vm1153 = vmand %vm1121, %vm1089
        %vm1154 = vmand %vm1122, %vm1090
        %vm1155 = vmand %vm1123, %vm1091
        %vm1156 = vmand %vm1124, %vm1092
        %vm1157 = vmand %vm1125, %vm1093
        %vm1158 = vmand %vm1126, %vm1094
        %vm1159 = vmand %vm1127, %vm1095
        %vm1160 = vmand %vm1128, %vm1096
        %vm1161 = vmand %vm1129, %vm1097
        %vm1162 = vmand %vm1130, %vm1098
        %vm1163 = vmand %vm1131, %vm1099
        %vm1164 = vmand %vm1132, %vm1100
        %vm1165 = vmand %vm1133, %vm1101
        %vm1166 = vmand %vm1134, %vm1102
        %vm1167 = vmand %vm1135, %vm1103
        %vm1168 = vmand %vm1136, %vm1104
        %vm1169 = vmand %vm1137, %vm1105
        %vm1170 = vmand %vm1138, %vm1106
        %vm1171 = vmand %vm1139, %vm1107
        %vm1172 = vmand %vm1140, %vm1108
        %v1173 = vadd.s32 %v859, 16
        %v1174 = vadd.s32 %v866, 16
        %v1175 = vadd.s32 %v873, 16
        %v1176 = vadd.s32 %v880, 16
        %v1177 = vadd.s32 %v887, 16
        %v1178 = vadd.s32 %v894, 16
        %v1179 = vadd.s32 %v901, 16
        %v1180 = vadd.s32 %v908, 16
        %v1181 = vadd.s32 %v915, 16
        %v1182 = vadd.s32 %v922, 16
        %v1183 = vadd.s32 %v929, 16
        %v1184 = vadd.s32 %v936, 16
        %v1185 = vadd.s32 %v943, 16
        %v1186 = vadd.s32 %v950, 16
        %v1187 = vadd.s32 %v957, 16
        %v1188 = vadd.s32 %v964, 16
        %v1189 = vadd.s32 %v971, 16
        %v1190 = vadd.s32 %v978, 16
        %v1191 = vadd.s32 %v985, 16
        %v1192 = vadd.s32 %v992, 16
        %v1193 = vadd.s32 %v999, 16
        %v1194 = vadd.s32 %v1006, 16
        %v1195 = vadd.s32 %v1013, 16
        %v1196 = vadd.s32 %v1020, 16
        %v1197 = vadd.s32 %v1027, 16
        %v1198 = vadd.s32 %v1034, 16
        %v1199 = vadd.s32 %v1041, 16
        %v1200 = vadd.s32 %v1048, 16
        %v1201 = vadd.s32 %v1055, 16
        %v1202 = vadd.s32 %v1062, 16
        %v1203 = vadd.s32 %v1069, 16
        %v1204 = vadd.s32 %v1076, 16
        %v1205 = vsel %vm1141, %v1173, %v859
        %v1206 = vsel %vm1142, %v1174, %v866
        %v1207 = vsel %vm1143, %v1175, %v873
        %v1208 = vsel %vm1144, %v1176, %v880
        %v1209 = vsel %vm1145, %v1177, %v887
        %v1210 = vsel %vm1146, %v1178, %v894
        %v1211 = vsel %vm1147, %v1179, %v901
        %v1212 = vsel %vm1148, %v1180, %v908
        %v1213 = vsel %vm1149, %v1181, %v915
        %v1214 = vsel %vm1150, %v1182, %v922
        %v1215 = vsel %vm1151, %v1183, %v929
        %v1216 = vsel %vm1152, %v1184, %v936
        %v1217 = vsel %vm1153, %v1185, %v943
        %v1218 = vsel %vm1154, %v1186, %v950
        %v1219 = vsel %vm1155, %v1187, %v957
        %v1220 = vsel %vm1156, %v1188, %v964
        %v1221 = vsel %vm1157, %v1189, %v971
        %v1222 = vsel %vm1158, %v1190, %v978
        %v1223 = vsel %vm1159, %v1191, %v985
        %v1224 = vsel %vm1160, %v1192, %v992
        %v1225 = vsel %vm1161, %v1193, %v999
        %v1226 = vsel %vm1162, %v1194, %v1006
        %v1227 = vsel %vm1163, %v1195, %v1013
        %v1228 = vsel %vm1164, %v1196, %v1020
        %v1229 = vsel %vm1165, %v1197, %v1027
        %v1230 = vsel %vm1166, %v1198, %v1034
        %v1231 = vsel %vm1167, %v1199, %v1041
        %v1232 = vsel %vm1168, %v1200, %v1048
        %v1233 = vsel %vm1169, %v1201, %v1055
        %v1234 = vsel %vm1170, %v1202, %v1062
        %v1235 = vsel %vm1171, %v1203, %v1069
        %v1236 = vsel %vm1172, %v1204, %v1076
        %vm1237 = vcmp.ge.s32.totalorder %v1205, 1
        %vm1238 = vcmp.ge.s32.totalorder %v1206, 1
        %vm1239 = vcmp.ge.s32.totalorder %v1207, 1
        %vm1240 = vcmp.ge.s32.totalorder %v1208, 1
        %vm1241 = vcmp.ge.s32.totalorder %v1209, 1
        %vm1242 = vcmp.ge.s32.totalorder %v1210, 1
        %vm1243 = vcmp.ge.s32.totalorder %v1211, 1
        %vm1244 = vcmp.ge.s32.totalorder %v1212, 1
        %vm1245 = vcmp.ge.s32.totalorder %v1213, 1
        %vm1246 = vcmp.ge.s32.totalorder %v1214, 1
        %vm1247 = vcmp.ge.s32.totalorder %v1215, 1
        %vm1248 = vcmp.ge.s32.totalorder %v1216, 1
        %vm1249 = vcmp.ge.s32.totalorder %v1217, 1
        %vm1250 = vcmp.ge.s32.totalorder %v1218, 1
        %vm1251 = vcmp.ge.s32.totalorder %v1219, 1
        %vm1252 = vcmp.ge.s32.totalorder %v1220, 1
        %vm1253 = vcmp.ge.s32.totalorder %v1221, 1
        %vm1254 = vcmp.ge.s32.totalorder %v1222, 1
        %vm1255 = vcmp.ge.s32.totalorder %v1223, 1
        %vm1256 = vcmp.ge.s32.totalorder %v1224, 1
        %vm1257 = vcmp.ge.s32.totalorder %v1225, 1
        %vm1258 = vcmp.ge.s32.totalorder %v1226, 1
        %vm1259 = vcmp.ge.s32.totalorder %v1227, 1
        %vm1260 = vcmp.ge.s32.totalorder %v1228, 1
        %vm1261 = vcmp.ge.s32.totalorder %v1229, 1
        %vm1262 = vcmp.ge.s32.totalorder %v1230, 1
        %vm1263 = vcmp.ge.s32.totalorder %v1231, 1
        %vm1264 = vcmp.ge.s32.totalorder %v1232, 1
        %vm1265 = vcmp.ge.s32.totalorder %v1233, 1
        %vm1266 = vcmp.ge.s32.totalorder %v1234, 1
        %vm1267 = vcmp.ge.s32.totalorder %v1235, 1
        %vm1268 = vcmp.ge.s32.totalorder %v1236, 1
        %vm1269 = vcmp.lt.s32.totalorder %v1205, 15
        %vm1270 = vcmp.lt.s32.totalorder %v1206, 15
        %vm1271 = vcmp.lt.s32.totalorder %v1207, 15
        %vm1272 = vcmp.lt.s32.totalorder %v1208, 15
        %vm1273 = vcmp.lt.s32.totalorder %v1209, 15
        %vm1274 = vcmp.lt.s32.totalorder %v1210, 15
        %vm1275 = vcmp.lt.s32.totalorder %v1211, 15
        %vm1276 = vcmp.lt.s32.totalorder %v1212, 15
        %vm1277 = vcmp.lt.s32.totalorder %v1213, 15
        %vm1278 = vcmp.lt.s32.totalorder %v1214, 15
        %vm1279 = vcmp.lt.s32.totalorder %v1215, 15
        %vm1280 = vcmp.lt.s32.totalorder %v1216, 15
        %vm1281 = vcmp.lt.s32.totalorder %v1217, 15
        %vm1282 = vcmp.lt.s32.totalorder %v1218, 15
        %vm1283 = vcmp.lt.s32.totalorder %v1219, 15
        %vm1284 = vcmp.lt.s32.totalorder %v1220, 15
        %vm1285 = vcmp.lt.s32.totalorder %v1221, 15
        %vm1286 = vcmp.lt.s32.totalorder %v1222, 15
        %vm1287 = vcmp.lt.s32.totalorder %v1223, 15
        %vm1288 = vcmp.lt.s32.totalorder %v1224, 15
        %vm1289 = vcmp.lt.s32.totalorder %v1225, 15
        %vm1290 = vcmp.lt.s32.totalorder %v1226, 15
        %vm1291 = vcmp.lt.s32.totalorder %v1227, 15
        %vm1292 = vcmp.lt.s32.totalorder %v1228, 15
        %vm1293 = vcmp.lt.s32.totalorder %v1229, 15
        %vm1294 = vcmp.lt.s32.totalorder %v1230, 15
        %vm1295 = vcmp.lt.s32.totalorder %v1231, 15
        %vm1296 = vcmp.lt.s32.totalorder %v1232, 15
        %vm1297 = vcmp.lt.s32.totalorder %v1233, 15
        %vm1298 = vcmp.lt.s32.totalorder %v1234, 15
        %vm1299 = vcmp.lt.s32.totalorder %v1235, 15
        %vm1300 = vcmp.lt.s32.totalorder %v1236, 15
        %v1301 = vld [vmem:[#allocation2 + $0x8] sm:$0xff]
        %v1302 = vld [vmem:[#allocation2 + $0x10] sm:$0xff]
        %v1303 = vld [vmem:[#allocation2 + $0x18] sm:$0xff]
        %v1304 = vld [vmem:[#allocation2 + $0x20] sm:$0xff]
        %v1305 = vld [vmem:[#allocation2 + $0x28] sm:$0xff]
        %v1306 = vld [vmem:[#allocation2 + $0x30] sm:$0xff]
        %v1307 = vld [vmem:[#allocation2 + $0x38] sm:$0xff]
        %v1308 = vld [vmem:[#allocation2 + $0x40] sm:$0xff]
        %v1309 = vld [vmem:[#allocation2 + $0x48] sm:$0xff]
        %v1310 = vld [vmem:[#allocation2 + $0x50] sm:$0xff]
        %v1311 = vld [vmem:[#allocation2 + $0x58] sm:$0xff]
        %v1312 = vld [vmem:[#allocation2 + $0x60] sm:$0xff]
        %v1313 = vld [vmem:[#allocation2 + $0x68] sm:$0xff]
        %v1314 = vld [vmem:[#allocation2 + $0x70] sm:$0xff]
        %v1315 = vld [vmem:[#allocation2 + $0x78] sm:$0xff]
        %v1316 = vld [vmem:[#allocation2 + $0x80] sm:$0xff]
        %v1317 = vld [vmem:[#allocation2 + $0x88] sm:$0xff]
        %v1318 = vld [vmem:[#allocation2 + $0x90] sm:$0xff]
        %v1319 = vld [vmem:[#allocation2 + $0x98] sm:$0xff]
        %v1320 = vld [vmem:[#allocation2 + $0xa0] sm:$0xff]
        %v1321 = vld [vmem:[#allocation2 + $0xa8] sm:$0xff]
        %v1322 = vld [vmem:[#allocation2 + $0xb0] sm:$0xff]
        %v1323 = vld [vmem:[#allocation2 + $0xb8] sm:$0xff]
        %v1324 = vld [vmem:[#allocation2 + $0xc0] sm:$0xff]
        %v1325 = vld [vmem:[#allocation2 + $0xc8] sm:$0xff]
        %v1326 = vld [vmem:[#allocation2 + $0xd0] sm:$0xff]
        %v1327 = vld [vmem:[#allocation2 + $0xd8] sm:$0xff]
        %v1328 = vld [vmem:[#allocation2 + $0xe0] sm:$0xff]
        %v1329 = vld [vmem:[#allocation2 + $0xe8] sm:$0xff]
        %v1330 = vld [vmem:[#allocation2 + $0xf0] sm:$0xff]
        %v1331 = vld [vmem:[#allocation2 + $0xf8] sm:$0xff]
        %v1332 = vld [vmem:[#allocation2 + $0x100] sm:$0xff]
        %v1333 = vld [vmem:[#allocation2 + $0x7] sm:$0xff]
        %v1334 = vld [vmem:[#allocation2 + $0xf] sm:$0xff]
        %v1335 = vld [vmem:[#allocation2 + $0x17] sm:$0xff]
        %v1336 = vld [vmem:[#allocation2 + $0x1f] sm:$0xff]
        %v1337 = vld [vmem:[#allocation2 + $0x27] sm:$0xff]
        %v1338 = vld [vmem:[#allocation2 + $0x2f] sm:$0xff]
        %v1339 = vld [vmem:[#allocation2 + $0x37] sm:$0xff]
        %v1340 = vld [vmem:[#allocation2 + $0x3f] sm:$0xff]
        %v1341 = vld [vmem:[#allocation2 + $0x47] sm:$0xff]
        %v1342 = vld [vmem:[#allocation2 + $0x4f] sm:$0xff]
        %v1343 = vld [vmem:[#allocation2 + $0x57] sm:$0xff]
        %v1344 = vld [vmem:[#allocation2 + $0x5f] sm:$0xff]
        %v1345 = vld [vmem:[#allocation2 + $0x67] sm:$0xff]
        %v1346 = vld [vmem:[#allocation2 + $0x6f] sm:$0xff]
        %v1347 = vld [vmem:[#allocation2 + $0x77] sm:$0xff]
        %v1348 = vld [vmem:[#allocation2 + $0x7f] sm:$0xff]
        %v1349 = vld [vmem:[#allocation2 + $0x87] sm:$0xff]
        %v1350 = vld [vmem:[#allocation2 + $0x8f] sm:$0xff]
        %v1351 = vld [vmem:[#allocation2 + $0x97] sm:$0xff]
        %v1352 = vld [vmem:[#allocation2 + $0x9f] sm:$0xff]
        %v1353 = vld [vmem:[#allocation2 + $0xa7] sm:$0xff]
        %v1354 = vld [vmem:[#allocation2 + $0xaf] sm:$0xff]
        %v1355 = vld [vmem:[#allocation2 + $0xb7] sm:$0xff]
        %v1356 = vld [vmem:[#allocation2 + $0xbf] sm:$0xff]
        %v1357 = vld [vmem:[#allocation2 + $0xc7] sm:$0xff]
        %v1358 = vld [vmem:[#allocation2 + $0xcf] sm:$0xff]
        %v1359 = vld [vmem:[#allocation2 + $0xd7] sm:$0xff]
        %v1360 = vld [vmem:[#allocation2 + $0xdf] sm:$0xff]
        %v1361 = vld [vmem:[#allocation2 + $0xe7] sm:$0xff]
        %v1362 = vld [vmem:[#allocation2 + $0xef] sm:$0xff]
        %v1363 = vld [vmem:[#allocation2 + $0xf7] sm:$0xff]
        %v1364 = vld [vmem:[#allocation2 + $0xff] sm:$0xff]
        %v1365 = vld [vmem:[#allocation2 + $0x9] sm:$0xff]
        %v1366 = vld [vmem:[#allocation2 + $0x11] sm:$0xff]
        %v1367 = vld [vmem:[#allocation2 + $0x19] sm:$0xff]
        %v1368 = vld [vmem:[#allocation2 + $0x21] sm:$0xff]
        %v1369 = vld [vmem:[#allocation2 + $0x29] sm:$0xff]
        %v1370 = vld [vmem:[#allocation2 + $0x31] sm:$0xff]
        %v1371 = vld [vmem:[#allocation2 + $0x39] sm:$0xff]
        %v1372 = vld [vmem:[#allocation2 + $0x41] sm:$0xff]
        %v1373 = vld [vmem:[#allocation2 + $0x49] sm:$0xff]
        %v1374 = vld [vmem:[#allocation2 + $0x51] sm:$0xff]
        %v1375 = vld [vmem:[#allocation2 + $0x59] sm:$0xff]
        %v1376 = vld [vmem:[#allocation2 + $0x61] sm:$0xff]
        %v1377 = vld [vmem:[#allocation2 + $0x69] sm:$0xff]
        %v1378 = vld [vmem:[#allocation2 + $0x71] sm:$0xff]
        %v1379 = vld [vmem:[#allocation2 + $0x79] sm:$0xff]
        %v1380 = vld [vmem:[#allocation2 + $0x81] sm:$0xff]
        %v1381 = vld [vmem:[#allocation2 + $0x89] sm:$0xff]
        %v1382 = vld [vmem:[#allocation2 + $0x91] sm:$0xff]
        %v1383 = vld [vmem:[#allocation2 + $0x99] sm:$0xff]
        %v1384 = vld [vmem:[#allocation2 + $0xa1] sm:$0xff]
        %v1385 = vld [vmem:[#allocation2 + $0xa9] sm:$0xff]
        %v1386 = vld [vmem:[#allocation2 + $0xb1] sm:$0xff]
        %v1387 = vld [vmem:[#allocation2 + $0xb9] sm:$0xff]
        %v1388 = vld [vmem:[#allocation2 + $0xc1] sm:$0xff]
        %v1389 = vld [vmem:[#allocation2 + $0xc9] sm:$0xff]
        %v1390 = vld [vmem:[#allocation2 + $0xd1] sm:$0xff]
        %v1391 = vld [vmem:[#allocation2 + $0xd9] sm:$0xff]
        %v1392 = vld [vmem:[#allocation2 + $0xe1] sm:$0xff]
        %v1393 = vld [vmem:[#allocation2 + $0xe9] sm:$0xff]
        %v1394 = vld [vmem:[#allocation2 + $0xf1] sm:$0xff]
        %v1395 = vld [vmem:[#allocation2 + $0xf9] sm:$0xff]
        %v1396 = vld [vmem:[#allocation2 + $0x101] sm:$0xff]
        %v1397 = vsel %vm1237, 1, 0
        %v1398 = vsel %vm1238, 1, 0
        %v1399 = vsel %vm1239, 1, 0
        %v1400 = vsel %vm1240, 1, 0
        %v1401 = vsel %vm1241, 1, 0
        %v1402 = vsel %vm1242, 1, 0
        %v1403 = vsel %vm1243, 1, 0
        %v1404 = vsel %vm1244, 1, 0
        %v1405 = vsel %vm1245, 1, 0
        %v1406 = vsel %vm1246, 1, 0
        %v1407 = vsel %vm1247, 1, 0
        %v1408 = vsel %vm1248, 1, 0
        %v1409 = vsel %vm1249, 1, 0
        %v1410 = vsel %vm1250, 1, 0
        %v1411 = vsel %vm1251, 1, 0
        %v1412 = vsel %vm1252, 1, 0
        %v1413 = vsel %vm1253, 1, 0
        %v1414 = vsel %vm1254, 1, 0
        %v1415 = vsel %vm1255, 1, 0
        %v1416 = vsel %vm1256, 1, 0
        %v1417 = vsel %vm1257, 1, 0
        %v1418 = vsel %vm1258, 1, 0
        %v1419 = vsel %vm1259, 1, 0
        %v1420 = vsel %vm1260, 1, 0
        %v1421 = vsel %vm1261, 1, 0
        %v1422 = vsel %vm1262, 1, 0
        %v1423 = vsel %vm1263, 1, 0
        %v1424 = vsel %vm1264, 1, 0
        %v1425 = vsel %vm1265, 1, 0
        %v1426 = vsel %vm1266, 1, 0
        %v1427 = vsel %vm1267, 1, 0
        %v1428 = vsel %vm1268, 1, 0
        %vm1429 = vcmp.eq.s32.totalorder %v1397, 1
        %vm1430 = vcmp.eq.s32.totalorder %v1398, 1
        %vm1431 = vcmp.eq.s32.totalorder %v1399, 1
        %vm1432 = vcmp.eq.s32.totalorder %v1400, 1
        %vm1433 = vcmp.eq.s32.totalorder %v1401, 1
        %vm1434 = vcmp.eq.s32.totalorder %v1402, 1
        %vm1435 = vcmp.eq.s32.totalorder %v1403, 1
        %vm1436 = vcmp.eq.s32.totalorder %v1404, 1
        %vm1437 = vcmp.eq.s32.totalorder %v1405, 1
        %vm1438 = vcmp.eq.s32.totalorder %v1406, 1
        %vm1439 = vcmp.eq.s32.totalorder %v1407, 1
        %vm1440 = vcmp.eq.s32.totalorder %v1408, 1
        %vm1441 = vcmp.eq.s32.totalorder %v1409, 1
        %vm1442 = vcmp.eq.s32.totalorder %v1410, 1
        %vm1443 = vcmp.eq.s32.totalorder %v1411, 1
        %vm1444 = vcmp.eq.s32.totalorder %v1412, 1
        %vm1445 = vcmp.eq.s32.totalorder %v1413, 1
        %vm1446 = vcmp.eq.s32.totalorder %v1414, 1
        %vm1447 = vcmp.eq.s32.totalorder %v1415, 1
        %vm1448 = vcmp.eq.s32.totalorder %v1416, 1
        %vm1449 = vcmp.eq.s32.totalorder %v1417, 1
        %vm1450 = vcmp.eq.s32.totalorder %v1418, 1
        %vm1451 = vcmp.eq.s32.totalorder %v1419, 1
        %vm1452 = vcmp.eq.s32.totalorder %v1420, 1
        %vm1453 = vcmp.eq.s32.totalorder %v1421, 1
        %vm1454 = vcmp.eq.s32.totalorder %v1422, 1
        %vm1455 = vcmp.eq.s32.totalorder %v1423, 1
        %vm1456 = vcmp.eq.s32.totalorder %v1424, 1
        %vm1457 = vcmp.eq.s32.totalorder %v1425, 1
        %vm1458 = vcmp.eq.s32.totalorder %v1426, 1
        %vm1459 = vcmp.eq.s32.totalorder %v1427, 1
        %vm1460 = vcmp.eq.s32.totalorder %v1428, 1
        %v1461 = vsel %vm1429, %v1333, 0.0
        %v1462 = vsel %vm1430, %v1334, 0.0
        %v1463 = vsel %vm1431, %v1335, 0.0
        %v1464 = vsel %vm1432, %v1336, 0.0
        %v1465 = vsel %vm1433, %v1337, 0.0
        %v1466 = vsel %vm1434, %v1338, 0.0
        %v1467 = vsel %vm1435, %v1339, 0.0
        %v1468 = vsel %vm1436, %v1340, 0.0
        %v1469 = vsel %vm1437, %v1341, 0.0
        %v1470 = vsel %vm1438, %v1342, 0.0
        %v1471 = vsel %vm1439, %v1343, 0.0
        %v1472 = vsel %vm1440, %v1344, 0.0
        %v1473 = vsel %vm1441, %v1345, 0.0
        %v1474 = vsel %vm1442, %v1346, 0.0
        %v1475 = vsel %vm1443, %v1347, 0.0
        %v1476 = vsel %vm1444, %v1348, 0.0
        %v1477 = vsel %vm1445, %v1349, 0.0
        %v1478 = vsel %vm1446, %v1350, 0.0
        %v1479 = vsel %vm1447, %v1351, 0.0
        %v1480 = vsel %vm1448, %v1352, 0.0
        %v1481 = vsel %vm1449, %v1353, 0.0
        %v1482 = vsel %vm1450, %v1354, 0.0
        %v1483 = vsel %vm1451, %v1355, 0.0
        %v1484 = vsel %vm1452, %v1356, 0.0
        %v1485 = vsel %vm1453, %v1357, 0.0
        %v1486 = vsel %vm1454, %v1358, 0.0
        %v1487 = vsel %vm1455, %v1359, 0.0
        %v1488 = vsel %vm1456, %v1360, 0.0
        %v1489 = vsel %vm1457, %v1361, 0.0
        %v1490 = vsel %vm1458, %v1362, 0.0
        %v1491 = vsel %vm1459, %v1363, 0.0
        %v1492 = vsel %vm1460, %v1364, 0.0
        %v1493 = vpack.c.bf16 %v1462, %v1461
        %v1494 = vpack.c.bf16 %v1464, %v1463
        %v1495 = vpack.c.bf16 %v1466, %v1465
        %v1496 = vpack.c.bf16 %v1468, %v1467
        %v1497 = vpack.c.bf16 %v1470, %v1469
        %v1498 = vpack.c.bf16 %v1472, %v1471
        %v1499 = vpack.c.bf16 %v1474, %v1473
        %v1500 = vpack.c.bf16 %v1476, %v1475
        %v1501 = vpack.c.bf16 %v1478, %v1477
        %v1502 = vpack.c.bf16 %v1480, %v1479
        %v1503 = vpack.c.bf16 %v1482, %v1481
        %v1504 = vpack.c.bf16 %v1484, %v1483
        %v1505 = vpack.c.bf16 %v1486, %v1485
        %v1506 = vpack.c.bf16 %v1488, %v1487
        %v1507 = vpack.c.bf16 %v1490, %v1489
        %v1508 = vpack.c.bf16 %v1492, %v1491
        %v1509 = vsel %vm1269, 1, 0
        %v1510 = vsel %vm1270, 1, 0
        %v1511 = vsel %vm1271, 1, 0
        %v1512 = vsel %vm1272, 1, 0
        %v1513 = vsel %vm1273, 1, 0
        %v1514 = vsel %vm1274, 1, 0
        %v1515 = vsel %vm1275, 1, 0
        %v1516 = vsel %vm1276, 1, 0
        %v1517 = vsel %vm1277, 1, 0
        %v1518 = vsel %vm1278, 1, 0
        %v1519 = vsel %vm1279, 1, 0
        %v1520 = vsel %vm1280, 1, 0
        %v1521 = vsel %vm1281, 1, 0
        %v1522 = vsel %vm1282, 1, 0
        %v1523 = vsel %vm1283, 1, 0
        %v1524 = vsel %vm1284, 1, 0
        %v1525 = vsel %vm1285, 1, 0
        %v1526 = vsel %vm1286, 1, 0
        %v1527 = vsel %vm1287, 1, 0
        %v1528 = vsel %vm1288, 1, 0
        %v1529 = vsel %vm1289, 1, 0
        %v1530 = vsel %vm1290, 1, 0
        %v1531 = vsel %vm1291, 1, 0
        %v1532 = vsel %vm1292, 1, 0
        %v1533 = vsel %vm1293, 1, 0
        %v1534 = vsel %vm1294, 1, 0
        %v1535 = vsel %vm1295, 1, 0
        %v1536 = vsel %vm1296, 1, 0
        %v1537 = vsel %vm1297, 1, 0
        %v1538 = vsel %vm1298, 1, 0
        %v1539 = vsel %vm1299, 1, 0
        %v1540 = vsel %vm1300, 1, 0
        %vm1541 = vcmp.eq.s32.totalorder %v1509, 1
        %vm1542 = vcmp.eq.s32.totalorder %v1510, 1
        %vm1543 = vcmp.eq.s32.totalorder %v1511, 1
        %vm1544 = vcmp.eq.s32.totalorder %v1512, 1
        %vm1545 = vcmp.eq.s32.totalorder %v1513, 1
        %vm1546 = vcmp.eq.s32.totalorder %v1514, 1
        %vm1547 = vcmp.eq.s32.totalorder %v1515, 1
        %vm1548 = vcmp.eq.s32.totalorder %v1516, 1
        %vm1549 = vcmp.eq.s32.totalorder %v1517, 1
        %vm1550 = vcmp.eq.s32.totalorder %v1518, 1
        %vm1551 = vcmp.eq.s32.totalorder %v1519, 1
        %vm1552 = vcmp.eq.s32.totalorder %v1520, 1
        %vm1553 = vcmp.eq.s32.totalorder %v1521, 1
        %vm1554 = vcmp.eq.s32.totalorder %v1522, 1
        %vm1555 = vcmp.eq.s32.totalorder %v1523, 1
        %vm1556 = vcmp.eq.s32.totalorder %v1524, 1
        %vm1557 = vcmp.eq.s32.totalorder %v1525, 1
        %vm1558 = vcmp.eq.s32.totalorder %v1526, 1
        %vm1559 = vcmp.eq.s32.totalorder %v1527, 1
        %vm1560 = vcmp.eq.s32.totalorder %v1528, 1
        %vm1561 = vcmp.eq.s32.totalorder %v1529, 1
        %vm1562 = vcmp.eq.s32.totalorder %v1530, 1
        %vm1563 = vcmp.eq.s32.totalorder %v1531, 1
        %vm1564 = vcmp.eq.s32.totalorder %v1532, 1
        %vm1565 = vcmp.eq.s32.totalorder %v1533, 1
        %vm1566 = vcmp.eq.s32.totalorder %v1534, 1
        %vm1567 = vcmp.eq.s32.totalorder %v1535, 1
        %vm1568 = vcmp.eq.s32.totalorder %v1536, 1
        %vm1569 = vcmp.eq.s32.totalorder %v1537, 1
        %vm1570 = vcmp.eq.s32.totalorder %v1538, 1
        %vm1571 = vcmp.eq.s32.totalorder %v1539, 1
        %vm1572 = vcmp.eq.s32.totalorder %v1540, 1
        %v1573 = vsel %vm1541, %v1365, 0.0
        %v1574 = vsel %vm1542, %v1366, 0.0
        %v1575 = vsel %vm1543, %v1367, 0.0
        %v1576 = vsel %vm1544, %v1368, 0.0
        %v1577 = vsel %vm1545, %v1369, 0.0
        %v1578 = vsel %vm1546, %v1370, 0.0
        %v1579 = vsel %vm1547, %v1371, 0.0
        %v1580 = vsel %vm1548, %v1372, 0.0
        %v1581 = vsel %vm1549, %v1373, 0.0
        %v1582 = vsel %vm1550, %v1374, 0.0
        %v1583 = vsel %vm1551, %v1375, 0.0
        %v1584 = vsel %vm1552, %v1376, 0.0
        %v1585 = vsel %vm1553, %v1377, 0.0
        %v1586 = vsel %vm1554, %v1378, 0.0
        %v1587 = vsel %vm1555, %v1379, 0.0
        %v1588 = vsel %vm1556, %v1380, 0.0
        %v1589 = vsel %vm1557, %v1381, 0.0
        %v1590 = vsel %vm1558, %v1382, 0.0
        %v1591 = vsel %vm1559, %v1383, 0.0
        %v1592 = vsel %vm1560, %v1384, 0.0
        %v1593 = vsel %vm1561, %v1385, 0.0
        %v1594 = vsel %vm1562, %v1386, 0.0
        %v1595 = vsel %vm1563, %v1387, 0.0
        %v1596 = vsel %vm1564, %v1388, 0.0
        %v1597 = vsel %vm1565, %v1389, 0.0
        %v1598 = vsel %vm1566, %v1390, 0.0
        %v1599 = vsel %vm1567, %v1391, 0.0
        %v1600 = vsel %vm1568, %v1392, 0.0
        %v1601 = vsel %vm1569, %v1393, 0.0
        %v1602 = vsel %vm1570, %v1394, 0.0
        %v1603 = vsel %vm1571, %v1395, 0.0
        %v1604 = vsel %vm1572, %v1396, 0.0
        %v1605 = vpack.c.bf16 %v1574, %v1573
        %v1606 = vpack.c.bf16 %v1576, %v1575
        %v1607 = vpack.c.bf16 %v1578, %v1577
        %v1608 = vpack.c.bf16 %v1580, %v1579
        %v1609 = vpack.c.bf16 %v1582, %v1581
        %v1610 = vpack.c.bf16 %v1584, %v1583
        %v1611 = vpack.c.bf16 %v1586, %v1585
        %v1612 = vpack.c.bf16 %v1588, %v1587
        %v1613 = vpack.c.bf16 %v1590, %v1589
        %v1614 = vpack.c.bf16 %v1592, %v1591
        %v1615 = vpack.c.bf16 %v1594, %v1593
        %v1616 = vpack.c.bf16 %v1596, %v1595
        %v1617 = vpack.c.bf16 %v1598, %v1597
        %v1618 = vpack.c.bf16 %v1600, %v1599
        %v1619 = vpack.c.bf16 %v1602, %v1601
        %v1620 = vpack.c.bf16 %v1604, %v1603
        %v1621 = vpack.c.bf16 %v1302, %v1301
        %v1622 = vpack.c.bf16 %v1304, %v1303
        %v1623 = vpack.c.bf16 %v1306, %v1305
        %v1624 = vpack.c.bf16 %v1308, %v1307
        %v1625 = vpack.c.bf16 %v1310, %v1309
        %v1626 = vpack.c.bf16 %v1312, %v1311
        %v1627 = vpack.c.bf16 %v1314, %v1313
        %v1628 = vpack.c.bf16 %v1316, %v1315
        %v1629 = vpack.c.bf16 %v1318, %v1317
        %v1630 = vpack.c.bf16 %v1320, %v1319
        %v1631 = vpack.c.bf16 %v1322, %v1321
        %v1632 = vpack.c.bf16 %v1324, %v1323
        %v1633 = vpack.c.bf16 %v1326, %v1325
        %v1634 = vpack.c.bf16 %v1328, %v1327
        %v1635 = vpack.c.bf16 %v1330, %v1329
        %v1636 = vpack.c.bf16 %v1332, %v1331
        %v1637 = vld [vmem:[%s3] sm:$0xf]
        %v1638 = vld [vmem:[%s3 + $0x4] sm:$0xf]
        %v1639 = vld [vmem:[%s3 + $0x8] sm:$0xf]
        %v1641 = vsel %vm781, %v1621, 0
        %v1644 = vsel %vm781, %v1622, 0
        %v1647 = vsel %vm781, %v1623, 0
        %v1650 = vsel %vm781, %v1624, 0
        %v1653 = vsel %vm781, %v1625, 0
        %v1656 = vsel %vm781, %v1626, 0
        %v1659 = vsel %vm781, %v1627, 0
        %v1662 = vsel %vm781, %v1628, 0
        %v1665 = vsel %vm781, %v1629, 0
        %v1668 = vsel %vm781, %v1630, 0
        %v1671 = vsel %vm781, %v1631, 0
        %v1674 = vsel %vm781, %v1632, 0
        %v1677 = vsel %vm781, %v1633, 0
        %v1680 = vsel %vm781, %v1634, 0
        %v1683 = vsel %vm781, %v1635, 0
        %v1686 = vsel %vm781, %v1636, 0
        %vm1688 = vcmask 1043456
        %v1690 = vsel %vm1688, %v1638, 0
        %1692 = vmatprep.subr.bf16.mxu0 0
        %1693 = vmatpush1.bf16.msra.mxu0 0
        %1694 = vmatprep.subr.bf16.mxu0 0
        %1695 = vmatpush1.bf16.msra.mxu0 0
        %1696 = vmatprep.subr.bf16.mxu0 0
        %1697 = vmatpush1.bf16.msra.mxu0 0
        %1698 = vmatprep.subr.bf16.mxu0 0
        %1699 = vmatpush1.bf16.msra.mxu0 0
        %1700 = vmatprep.subr.bf16.mxu0 0
        %1701 = vmatpush1.bf16.msra.mxu0 0
        %1702 = vmatprep.subr.bf16.mxu0 0
        %1703 = vmatpush1.bf16.msra.mxu0 0
        %1704 = vmatprep.subr.bf16.mxu0 0
        %1705 = vmatpush1.bf16.msra.mxu0 0
        %1706 = vmatprep.subr.bf16.mxu0 0
        %1707 = vmatpush1.bf16.msra.mxu0 %v1690
        %1708 = vmatprep.subr.bf16.mxu0 0
        %1709 = vmatpush2.bf16.msra.mxu0 0
        %1710 = vmatprep.subr.bf16.mxu0 0
        %1711 = vmatpush2.bf16.msra.mxu0 0
        %1712 = vmatprep.subr.bf16.mxu0 0
        %1713 = vmatpush2.bf16.msra.mxu0 0
        %1714 = vmatprep.subr.bf16.mxu0 0
        %1715 = vmatpush2.bf16.msra.mxu0 0
        %1716 = vmatprep.subr.bf16.mxu0 0
        %1717 = vmatpush2.bf16.msra.mxu0 0
        %1718 = vmatprep.subr.bf16.mxu0 0
        %1719 = vmatpush2.bf16.msra.mxu0 0
        %1720 = vmatprep.subr.bf16.mxu0 0
        %1721 = vmatpush2.bf16.msra.mxu0 0
        %1722 = vmatprep.subr.bf16.mxu0 0
        %1723 = vmatpush2.bf16.msra.mxu0 0
        %1724 = vmatprep.mubr.bf16.mxu0 0
        %1725 = vmatmul.mubr.bf16.gmra.mxu0 %v1641
        %v1726 = vpop.f32.mrf.mxu0
        %v1727 = vadd.f32 0.0, %v1726
        %v1728 = vpop.f32.mrf.mxu0
        %v1729 = vpop.f32.mrf.mxu0
        %v1730 = vadd.f32 0.0, %v1729
        %v1731 = vpop.f32.mrf.mxu0
        %1732 = vmatprep.mubr.bf16.mxu0 0
        %1733 = vmatmul.mubr.bf16.gmra.mxu0 %v1644
        %v1734 = vpop.f32.mrf.mxu0
        %v1735 = vadd.f32 0.0, %v1734
        %v1736 = vpop.f32.mrf.mxu0
        %v1737 = vpop.f32.mrf.mxu0
        %v1738 = vadd.f32 0.0, %v1737
        %v1739 = vpop.f32.mrf.mxu0
        %1740 = vmatprep.mubr.bf16.mxu0 0
        %1741 = vmatmul.mubr.bf16.gmra.mxu0 %v1647
        %v1742 = vpop.f32.mrf.mxu0
        %v1743 = vadd.f32 0.0, %v1742
        %v1744 = vpop.f32.mrf.mxu0
        %v1745 = vpop.f32.mrf.mxu0
        %v1746 = vadd.f32 0.0, %v1745
        %v1747 = vpop.f32.mrf.mxu0
        %1748 = vmatprep.mubr.bf16.mxu0 0
        %1749 = vmatmul.mubr.bf16.gmra.mxu0 %v1650
        %v1750 = vpop.f32.mrf.mxu0
        %v1751 = vadd.f32 0.0, %v1750
        %v1752 = vpop.f32.mrf.mxu0
        %v1753 = vpop.f32.mrf.mxu0
        %v1754 = vadd.f32 0.0, %v1753
        %v1755 = vpop.f32.mrf.mxu0
        %1756 = vmatprep.mubr.bf16.mxu0 0
        %1757 = vmatmul.mubr.bf16.gmra.mxu0 %v1653
        %v1758 = vpop.f32.mrf.mxu0
        %v1759 = vadd.f32 0.0, %v1758
        %v1760 = vpop.f32.mrf.mxu0
        %v1761 = vpop.f32.mrf.mxu0
        %v1762 = vadd.f32 0.0, %v1761
        %v1763 = vpop.f32.mrf.mxu0
        %1764 = vmatprep.mubr.bf16.mxu0 0
        %1765 = vmatmul.mubr.bf16.gmra.mxu0 %v1656
        %v1766 = vpop.f32.mrf.mxu0
        %v1767 = vadd.f32 0.0, %v1766
        %v1768 = vpop.f32.mrf.mxu0
        %v1769 = vpop.f32.mrf.mxu0
        %v1770 = vadd.f32 0.0, %v1769
        %v1771 = vpop.f32.mrf.mxu0
        %1772 = vmatprep.mubr.bf16.mxu0 0
        %1773 = vmatmul.mubr.bf16.gmra.mxu0 %v1659
        %v1774 = vpop.f32.mrf.mxu0
        %v1775 = vadd.f32 0.0, %v1774
        %v1776 = vpop.f32.mrf.mxu0
        %v1777 = vpop.f32.mrf.mxu0
        %v1778 = vadd.f32 0.0, %v1777
        %v1779 = vpop.f32.mrf.mxu0
        %1780 = vmatprep.mubr.bf16.mxu0 0
        %1781 = vmatmul.mubr.bf16.gmra.mxu0 %v1662
        %v1782 = vpop.f32.mrf.mxu0
        %v1783 = vadd.f32 0.0, %v1782
        %v1784 = vpop.f32.mrf.mxu0
        %v1785 = vpop.f32.mrf.mxu0
        %v1786 = vadd.f32 0.0, %v1785
        %v1787 = vpop.f32.mrf.mxu0
        %1788 = vmatprep.mubr.bf16.mxu0 0
        %1789 = vmatmul.mubr.bf16.gmra.mxu0 %v1665
        %v1790 = vpop.f32.mrf.mxu0
        %v1791 = vadd.f32 0.0, %v1790
        %v1792 = vpop.f32.mrf.mxu0
        %v1793 = vpop.f32.mrf.mxu0
        %v1794 = vadd.f32 0.0, %v1793
        %v1795 = vpop.f32.mrf.mxu0
        %1796 = vmatprep.mubr.bf16.mxu0 0
        %1797 = vmatmul.mubr.bf16.gmra.mxu0 %v1668
        %v1798 = vpop.f32.mrf.mxu0
        %v1799 = vadd.f32 0.0, %v1798
        %v1800 = vpop.f32.mrf.mxu0
        %v1801 = vpop.f32.mrf.mxu0
        %v1802 = vadd.f32 0.0, %v1801
        %v1803 = vpop.f32.mrf.mxu0
        %1804 = vmatprep.mubr.bf16.mxu0 0
        %1805 = vmatmul.mubr.bf16.gmra.mxu0 %v1671
        %v1806 = vpop.f32.mrf.mxu0
        %v1807 = vadd.f32 0.0, %v1806
        %v1808 = vpop.f32.mrf.mxu0
        %v1809 = vpop.f32.mrf.mxu0
        %v1810 = vadd.f32 0.0, %v1809
        %v1811 = vpop.f32.mrf.mxu0
        %1812 = vmatprep.mubr.bf16.mxu0 0
        %1813 = vmatmul.mubr.bf16.gmra.mxu0 %v1674
        %v1814 = vpop.f32.mrf.mxu0
        %v1815 = vadd.f32 0.0, %v1814
        %v1816 = vpop.f32.mrf.mxu0
        %v1817 = vpop.f32.mrf.mxu0
        %v1818 = vadd.f32 0.0, %v1817
        %v1819 = vpop.f32.mrf.mxu0
        %1820 = vmatprep.mubr.bf16.mxu0 0
        %1821 = vmatmul.mubr.bf16.gmra.mxu0 %v1677
        %v1822 = vpop.f32.mrf.mxu0
        %v1823 = vadd.f32 0.0, %v1822
        %v1824 = vpop.f32.mrf.mxu0
        %v1825 = vpop.f32.mrf.mxu0
        %v1826 = vadd.f32 0.0, %v1825
        %v1827 = vpop.f32.mrf.mxu0
        %1828 = vmatprep.mubr.bf16.mxu0 0
        %1829 = vmatmul.mubr.bf16.gmra.mxu0 %v1680
        %v1830 = vpop.f32.mrf.mxu0
        %v1831 = vadd.f32 0.0, %v1830
        %v1832 = vpop.f32.mrf.mxu0
        %v1833 = vpop.f32.mrf.mxu0
        %v1834 = vadd.f32 0.0, %v1833
        %v1835 = vpop.f32.mrf.mxu0
        %1836 = vmatprep.mubr.bf16.mxu0 0
        %1837 = vmatmul.mubr.bf16.gmra.mxu0 %v1683
        %v1838 = vpop.f32.mrf.mxu0
        %v1839 = vadd.f32 0.0, %v1838
        %v1840 = vpop.f32.mrf.mxu0
        %v1841 = vpop.f32.mrf.mxu0
        %v1842 = vadd.f32 0.0, %v1841
        %v1843 = vpop.f32.mrf.mxu0
        %1844 = vmatprep.mubr.bf16.mxu0 0
        %1845 = vmatmul.mubr.bf16.gmra.mxu0 %v1686
        %v1846 = vpop.f32.mrf.mxu0
        %v1847 = vadd.f32 0.0, %v1846
        %v1848 = vpop.f32.mrf.mxu0
        %v1849 = vpop.f32.mrf.mxu0
        %v1850 = vadd.f32 0.0, %v1849
        %v1851 = vpop.f32.mrf.mxu0
        %1852 = vdwg.mxu0
        %v1854 = vsel %vm781, %v1493, 0
        %v1857 = vsel %vm781, %v1494, 0
        %v1860 = vsel %vm781, %v1495, 0
        %v1863 = vsel %vm781, %v1496, 0
        %v1866 = vsel %vm781, %v1497, 0
        %v1869 = vsel %vm781, %v1498, 0
        %v1872 = vsel %vm781, %v1499, 0
        %v1875 = vsel %vm781, %v1500, 0
        %v1878 = vsel %vm781, %v1501, 0
        %v1881 = vsel %vm781, %v1502, 0
        %v1884 = vsel %vm781, %v1503, 0
        %v1887 = vsel %vm781, %v1504, 0
        %v1890 = vsel %vm781, %v1505, 0
        %v1893 = vsel %vm781, %v1506, 0
        %v1896 = vsel %vm781, %v1507, 0
        %v1899 = vsel %vm781, %v1508, 0
        %v1902 = vsel %vm1688, %v1637, 0
        %1904 = vmatprep.subr.bf16.mxu0 0
        %1905 = vmatpush1.bf16.msra.mxu0 0
        %1906 = vmatprep.subr.bf16.mxu0 0
        %1907 = vmatpush1.bf16.msra.mxu0 0
        %1908 = vmatprep.subr.bf16.mxu0 0
        %1909 = vmatpush1.bf16.msra.mxu0 0
        %1910 = vmatprep.subr.bf16.mxu0 0
        %1911 = vmatpush1.bf16.msra.mxu0 0
        %1912 = vmatprep.subr.bf16.mxu0 0
        %1913 = vmatpush1.bf16.msra.mxu0 0
        %1914 = vmatprep.subr.bf16.mxu0 0
        %1915 = vmatpush1.bf16.msra.mxu0 0
        %1916 = vmatprep.subr.bf16.mxu0 0
        %1917 = vmatpush1.bf16.msra.mxu0 0
        %1918 = vmatprep.subr.bf16.mxu0 0
        %1919 = vmatpush1.bf16.msra.mxu0 %v1902
        %1920 = vmatprep.subr.bf16.mxu0 0
        %1921 = vmatpush2.bf16.msra.mxu0 0
        %1922 = vmatprep.subr.bf16.mxu0 0
        %1923 = vmatpush2.bf16.msra.mxu0 0
        %1924 = vmatprep.subr.bf16.mxu0 0
        %1925 = vmatpush2.bf16.msra.mxu0 0
        %1926 = vmatprep.subr.bf16.mxu0 0
        %1927 = vmatpush2.bf16.msra.mxu0 0
        %1928 = vmatprep.subr.bf16.mxu0 0
        %1929 = vmatpush2.bf16.msra.mxu0 0
        %1930 = vmatprep.subr.bf16.mxu0 0
        %1931 = vmatpush2.bf16.msra.mxu0 0
        %1932 = vmatprep.subr.bf16.mxu0 0
        %1933 = vmatpush2.bf16.msra.mxu0 0
        %1934 = vmatprep.subr.bf16.mxu0 0
        %1935 = vmatpush2.bf16.msra.mxu0 0
        %1936 = vmatprep.mubr.bf16.mxu0 0
        %1937 = vmatmul.mubr.bf16.gmra.mxu0 %v1854
        %v1938 = vpop.f32.mrf.mxu0
        %v1939 = vadd.f32 %v1727, %v1938
        %v1940 = vpop.f32.mrf.mxu0
        %v1941 = vpop.f32.mrf.mxu0
        %v1942 = vadd.f32 %v1730, %v1941
        %v1943 = vpop.f32.mrf.mxu0
        %1944 = vmatprep.mubr.bf16.mxu0 0
        %1945 = vmatmul.mubr.bf16.gmra.mxu0 %v1857
        %v1946 = vpop.f32.mrf.mxu0
        %v1947 = vadd.f32 %v1735, %v1946
        %v1948 = vpop.f32.mrf.mxu0
        %v1949 = vpop.f32.mrf.mxu0
        %v1950 = vadd.f32 %v1738, %v1949
        %v1951 = vpop.f32.mrf.mxu0
        %1952 = vmatprep.mubr.bf16.mxu0 0
        %1953 = vmatmul.mubr.bf16.gmra.mxu0 %v1860
        %v1954 = vpop.f32.mrf.mxu0
        %v1955 = vadd.f32 %v1743, %v1954
        %v1956 = vpop.f32.mrf.mxu0
        %v1957 = vpop.f32.mrf.mxu0
        %v1958 = vadd.f32 %v1746, %v1957
        %v1959 = vpop.f32.mrf.mxu0
        %1960 = vmatprep.mubr.bf16.mxu0 0
        %1961 = vmatmul.mubr.bf16.gmra.mxu0 %v1863
        %v1962 = vpop.f32.mrf.mxu0
        %v1963 = vadd.f32 %v1751, %v1962
        %v1964 = vpop.f32.mrf.mxu0
        %v1965 = vpop.f32.mrf.mxu0
        %v1966 = vadd.f32 %v1754, %v1965
        %v1967 = vpop.f32.mrf.mxu0
        %1968 = vmatprep.mubr.bf16.mxu0 0
        %1969 = vmatmul.mubr.bf16.gmra.mxu0 %v1866
        %v1970 = vpop.f32.mrf.mxu0
        %v1971 = vadd.f32 %v1759, %v1970
        %v1972 = vpop.f32.mrf.mxu0
        %v1973 = vpop.f32.mrf.mxu0
        %v1974 = vadd.f32 %v1762, %v1973
        %v1975 = vpop.f32.mrf.mxu0
        %1976 = vmatprep.mubr.bf16.mxu0 0
        %1977 = vmatmul.mubr.bf16.gmra.mxu0 %v1869
        %v1978 = vpop.f32.mrf.mxu0
        %v1979 = vadd.f32 %v1767, %v1978
        %v1980 = vpop.f32.mrf.mxu0
        %v1981 = vpop.f32.mrf.mxu0
        %v1982 = vadd.f32 %v1770, %v1981
        %v1983 = vpop.f32.mrf.mxu0
        %1984 = vmatprep.mubr.bf16.mxu0 0
        %1985 = vmatmul.mubr.bf16.gmra.mxu0 %v1872
        %v1986 = vpop.f32.mrf.mxu0
        %v1987 = vadd.f32 %v1775, %v1986
        %v1988 = vpop.f32.mrf.mxu0
        %v1989 = vpop.f32.mrf.mxu0
        %v1990 = vadd.f32 %v1778, %v1989
        %v1991 = vpop.f32.mrf.mxu0
        %1992 = vmatprep.mubr.bf16.mxu0 0
        %1993 = vmatmul.mubr.bf16.gmra.mxu0 %v1875
        %v1994 = vpop.f32.mrf.mxu0
        %v1995 = vadd.f32 %v1783, %v1994
        %v1996 = vpop.f32.mrf.mxu0
        %v1997 = vpop.f32.mrf.mxu0
        %v1998 = vadd.f32 %v1786, %v1997
        %v1999 = vpop.f32.mrf.mxu0
        %2000 = vmatprep.mubr.bf16.mxu0 0
        %2001 = vmatmul.mubr.bf16.gmra.mxu0 %v1878
        %v2002 = vpop.f32.mrf.mxu0
        %v2003 = vadd.f32 %v1791, %v2002
        %v2004 = vpop.f32.mrf.mxu0
        %v2005 = vpop.f32.mrf.mxu0
        %v2006 = vadd.f32 %v1794, %v2005
        %v2007 = vpop.f32.mrf.mxu0
        %2008 = vmatprep.mubr.bf16.mxu0 0
        %2009 = vmatmul.mubr.bf16.gmra.mxu0 %v1881
        %v2010 = vpop.f32.mrf.mxu0
        %v2011 = vadd.f32 %v1799, %v2010
        %v2012 = vpop.f32.mrf.mxu0
        %v2013 = vpop.f32.mrf.mxu0
        %v2014 = vadd.f32 %v1802, %v2013
        %v2015 = vpop.f32.mrf.mxu0
        %2016 = vmatprep.mubr.bf16.mxu0 0
        %2017 = vmatmul.mubr.bf16.gmra.mxu0 %v1884
        %v2018 = vpop.f32.mrf.mxu0
        %v2019 = vadd.f32 %v1807, %v2018
        %v2020 = vpop.f32.mrf.mxu0
        %v2021 = vpop.f32.mrf.mxu0
        %v2022 = vadd.f32 %v1810, %v2021
        %v2023 = vpop.f32.mrf.mxu0
        %2024 = vmatprep.mubr.bf16.mxu0 0
        %2025 = vmatmul.mubr.bf16.gmra.mxu0 %v1887
        %v2026 = vpop.f32.mrf.mxu0
        %v2027 = vadd.f32 %v1815, %v2026
        %v2028 = vpop.f32.mrf.mxu0
        %v2029 = vpop.f32.mrf.mxu0
        %v2030 = vadd.f32 %v1818, %v2029
        %v2031 = vpop.f32.mrf.mxu0
        %2032 = vmatprep.mubr.bf16.mxu0 0
        %2033 = vmatmul.mubr.bf16.gmra.mxu0 %v1890
        %v2034 = vpop.f32.mrf.mxu0
        %v2035 = vadd.f32 %v1823, %v2034
        %v2036 = vpop.f32.mrf.mxu0
        %v2037 = vpop.f32.mrf.mxu0
        %v2038 = vadd.f32 %v1826, %v2037
        %v2039 = vpop.f32.mrf.mxu0
        %2040 = vmatprep.mubr.bf16.mxu0 0
        %2041 = vmatmul.mubr.bf16.gmra.mxu0 %v1893
        %v2042 = vpop.f32.mrf.mxu0
        %v2043 = vadd.f32 %v1831, %v2042
        %v2044 = vpop.f32.mrf.mxu0
        %v2045 = vpop.f32.mrf.mxu0
        %v2046 = vadd.f32 %v1834, %v2045
        %v2047 = vpop.f32.mrf.mxu0
        %2048 = vmatprep.mubr.bf16.mxu0 0
        %2049 = vmatmul.mubr.bf16.gmra.mxu0 %v1896
        %v2050 = vpop.f32.mrf.mxu0
        %v2051 = vadd.f32 %v1839, %v2050
        %v2052 = vpop.f32.mrf.mxu0
        %v2053 = vpop.f32.mrf.mxu0
        %v2054 = vadd.f32 %v1842, %v2053
        %v2055 = vpop.f32.mrf.mxu0
        %2056 = vmatprep.mubr.bf16.mxu0 0
        %2057 = vmatmul.mubr.bf16.gmra.mxu0 %v1899
        %v2058 = vpop.f32.mrf.mxu0
        %v2059 = vadd.f32 %v1847, %v2058
        %v2060 = vpop.f32.mrf.mxu0
        %v2061 = vpop.f32.mrf.mxu0
        %v2062 = vadd.f32 %v1850, %v2061
        %v2063 = vpop.f32.mrf.mxu0
        %2064 = vdwg.mxu0
        %v2066 = vsel %vm781, %v1605, 0
        %v2069 = vsel %vm781, %v1606, 0
        %v2072 = vsel %vm781, %v1607, 0
        %v2075 = vsel %vm781, %v1608, 0
        %v2078 = vsel %vm781, %v1609, 0
        %v2081 = vsel %vm781, %v1610, 0
        %v2084 = vsel %vm781, %v1611, 0
        %v2087 = vsel %vm781, %v1612, 0
        %v2090 = vsel %vm781, %v1613, 0
        %v2093 = vsel %vm781, %v1614, 0
        %v2096 = vsel %vm781, %v1615, 0
        %v2099 = vsel %vm781, %v1616, 0
        %v2102 = vsel %vm781, %v1617, 0
        %v2105 = vsel %vm781, %v1618, 0
        %v2108 = vsel %vm781, %v1619, 0
        %v2111 = vsel %vm781, %v1620, 0
        %v2114 = vsel %vm1688, %v1639, 0
        %2116 = vmatprep.subr.bf16.mxu0 0
        %2117 = vmatpush1.bf16.msra.mxu0 0
        %2118 = vmatprep.subr.bf16.mxu0 0
        %2119 = vmatpush1.bf16.msra.mxu0 0
        %2120 = vmatprep.subr.bf16.mxu0 0
        %2121 = vmatpush1.bf16.msra.mxu0 0
        %2122 = vmatprep.subr.bf16.mxu0 0
        %2123 = vmatpush1.bf16.msra.mxu0 0
        %2124 = vmatprep.subr.bf16.mxu0 0
        %2125 = vmatpush1.bf16.msra.mxu0 0
        %2126 = vmatprep.subr.bf16.mxu0 0
        %2127 = vmatpush1.bf16.msra.mxu0 0
        %2128 = vmatprep.subr.bf16.mxu0 0
        %2129 = vmatpush1.bf16.msra.mxu0 0
        %2130 = vmatprep.subr.bf16.mxu0 0
        %2131 = vmatpush1.bf16.msra.mxu0 %v2114
        %2132 = vmatprep.subr.bf16.mxu0 0
        %2133 = vmatpush2.bf16.msra.mxu0 0
        %2134 = vmatprep.subr.bf16.mxu0 0
        %2135 = vmatpush2.bf16.msra.mxu0 0
        %2136 = vmatprep.subr.bf16.mxu0 0
        %2137 = vmatpush2.bf16.msra.mxu0 0
        %2138 = vmatprep.subr.bf16.mxu0 0
        %2139 = vmatpush2.bf16.msra.mxu0 0
        %2140 = vmatprep.subr.bf16.mxu0 0
        %2141 = vmatpush2.bf16.msra.mxu0 0
        %2142 = vmatprep.subr.bf16.mxu0 0
        %2143 = vmatpush2.bf16.msra.mxu0 0
        %2144 = vmatprep.subr.bf16.mxu0 0
        %2145 = vmatpush2.bf16.msra.mxu0 0
        %2146 = vmatprep.subr.bf16.mxu0 0
        %2147 = vmatpush2.bf16.msra.mxu0 0
        %2148 = vmatprep.mubr.bf16.mxu0 0
        %2149 = vmatmul.mubr.bf16.gmra.mxu0 %v2066
        %v2150 = vpop.f32.mrf.mxu0
        %v2151 = vadd.f32 0.0, %v2150
        %v2152 = vpop.f32.mrf.mxu0
        %v2153 = vpop.f32.mrf.mxu0
        %v2154 = vadd.f32 0.0, %v2153
        %v2155 = vpop.f32.mrf.mxu0
        %2156 = vmatprep.mubr.bf16.mxu0 0
        %2157 = vmatmul.mubr.bf16.gmra.mxu0 %v2069
        %v2158 = vpop.f32.mrf.mxu0
        %v2159 = vadd.f32 0.0, %v2158
        %v2160 = vpop.f32.mrf.mxu0
        %v2161 = vpop.f32.mrf.mxu0
        %v2162 = vadd.f32 0.0, %v2161
        %v2163 = vpop.f32.mrf.mxu0
        %2164 = vmatprep.mubr.bf16.mxu0 0
        %2165 = vmatmul.mubr.bf16.gmra.mxu0 %v2072
        %v2166 = vpop.f32.mrf.mxu0
        %v2167 = vadd.f32 0.0, %v2166
        %v2168 = vpop.f32.mrf.mxu0
        %v2169 = vpop.f32.mrf.mxu0
        %v2170 = vadd.f32 0.0, %v2169
        %v2171 = vpop.f32.mrf.mxu0
        %2172 = vmatprep.mubr.bf16.mxu0 0
        %2173 = vmatmul.mubr.bf16.gmra.mxu0 %v2075
        %v2174 = vpop.f32.mrf.mxu0
        %v2175 = vadd.f32 0.0, %v2174
        %v2176 = vpop.f32.mrf.mxu0
        %v2177 = vpop.f32.mrf.mxu0
        %v2178 = vadd.f32 0.0, %v2177
        %v2179 = vpop.f32.mrf.mxu0
        %2180 = vmatprep.mubr.bf16.mxu0 0
        %2181 = vmatmul.mubr.bf16.gmra.mxu0 %v2078
        %v2182 = vpop.f32.mrf.mxu0
        %v2183 = vadd.f32 0.0, %v2182
        %v2184 = vpop.f32.mrf.mxu0
        %v2185 = vpop.f32.mrf.mxu0
        %v2186 = vadd.f32 0.0, %v2185
        %v2187 = vpop.f32.mrf.mxu0
        %2188 = vmatprep.mubr.bf16.mxu0 0
        %2189 = vmatmul.mubr.bf16.gmra.mxu0 %v2081
        %v2190 = vpop.f32.mrf.mxu0
        %v2191 = vadd.f32 0.0, %v2190
        %v2192 = vpop.f32.mrf.mxu0
        %v2193 = vpop.f32.mrf.mxu0
        %v2194 = vadd.f32 0.0, %v2193
        %v2195 = vpop.f32.mrf.mxu0
        %2196 = vmatprep.mubr.bf16.mxu0 0
        %2197 = vmatmul.mubr.bf16.gmra.mxu0 %v2084
        %v2198 = vpop.f32.mrf.mxu0
        %v2199 = vadd.f32 0.0, %v2198
        %v2200 = vpop.f32.mrf.mxu0
        %v2201 = vpop.f32.mrf.mxu0
        %v2202 = vadd.f32 0.0, %v2201
        %v2203 = vpop.f32.mrf.mxu0
        %2204 = vmatprep.mubr.bf16.mxu0 0
        %2205 = vmatmul.mubr.bf16.gmra.mxu0 %v2087
        %v2206 = vpop.f32.mrf.mxu0
        %v2207 = vadd.f32 0.0, %v2206
        %v2208 = vpop.f32.mrf.mxu0
        %v2209 = vpop.f32.mrf.mxu0
        %v2210 = vadd.f32 0.0, %v2209
        %v2211 = vpop.f32.mrf.mxu0
        %2212 = vmatprep.mubr.bf16.mxu0 0
        %2213 = vmatmul.mubr.bf16.gmra.mxu0 %v2090
        %v2214 = vpop.f32.mrf.mxu0
        %v2215 = vadd.f32 0.0, %v2214
        %v2216 = vpop.f32.mrf.mxu0
        %v2217 = vpop.f32.mrf.mxu0
        %v2218 = vadd.f32 0.0, %v2217
        %v2219 = vpop.f32.mrf.mxu0
        %2220 = vmatprep.mubr.bf16.mxu0 0
        %2221 = vmatmul.mubr.bf16.gmra.mxu0 %v2093
        %v2222 = vpop.f32.mrf.mxu0
        %v2223 = vadd.f32 0.0, %v2222
        %v2224 = vpop.f32.mrf.mxu0
        %v2225 = vpop.f32.mrf.mxu0
        %v2226 = vadd.f32 0.0, %v2225
        %v2227 = vpop.f32.mrf.mxu0
        %2228 = vmatprep.mubr.bf16.mxu0 0
        %2229 = vmatmul.mubr.bf16.gmra.mxu0 %v2096
        %v2230 = vpop.f32.mrf.mxu0
        %v2231 = vadd.f32 0.0, %v2230
        %v2232 = vpop.f32.mrf.mxu0
        %v2233 = vpop.f32.mrf.mxu0
        %v2234 = vadd.f32 0.0, %v2233
        %v2235 = vpop.f32.mrf.mxu0
        %2236 = vmatprep.mubr.bf16.mxu0 0
        %2237 = vmatmul.mubr.bf16.gmra.mxu0 %v2099
        %v2238 = vpop.f32.mrf.mxu0
        %v2239 = vadd.f32 0.0, %v2238
        %v2240 = vpop.f32.mrf.mxu0
        %v2241 = vpop.f32.mrf.mxu0
        %v2242 = vadd.f32 0.0, %v2241
        %v2243 = vpop.f32.mrf.mxu0
        %2244 = vmatprep.mubr.bf16.mxu0 0
        %2245 = vmatmul.mubr.bf16.gmra.mxu0 %v2102
        %v2246 = vpop.f32.mrf.mxu0
        %v2247 = vadd.f32 0.0, %v2246
        %v2248 = vpop.f32.mrf.mxu0
        %v2249 = vpop.f32.mrf.mxu0
        %v2250 = vadd.f32 0.0, %v2249
        %v2251 = vpop.f32.mrf.mxu0
        %2252 = vmatprep.mubr.bf16.mxu0 0
        %2253 = vmatmul.mubr.bf16.gmra.mxu0 %v2105
        %v2254 = vpop.f32.mrf.mxu0
        %v2255 = vadd.f32 0.0, %v2254
        %v2256 = vpop.f32.mrf.mxu0
        %v2257 = vpop.f32.mrf.mxu0
        %v2258 = vadd.f32 0.0, %v2257
        %v2259 = vpop.f32.mrf.mxu0
        %2260 = vmatprep.mubr.bf16.mxu0 0
        %2261 = vmatmul.mubr.bf16.gmra.mxu0 %v2108
        %v2262 = vpop.f32.mrf.mxu0
        %v2263 = vadd.f32 0.0, %v2262
        %v2264 = vpop.f32.mrf.mxu0
        %v2265 = vpop.f32.mrf.mxu0
        %v2266 = vadd.f32 0.0, %v2265
        %v2267 = vpop.f32.mrf.mxu0
        %2268 = vmatprep.mubr.bf16.mxu0 0
        %2269 = vmatmul.mubr.bf16.gmra.mxu0 %v2111
        %v2270 = vpop.f32.mrf.mxu0
        %v2271 = vadd.f32 0.0, %v2270
        %v2272 = vpop.f32.mrf.mxu0
        %v2273 = vpop.f32.mrf.mxu0
        %v2274 = vadd.f32 0.0, %v2273
        %v2275 = vpop.f32.mrf.mxu0
        %2276 = vdwg.mxu0
        %v2277 = vadd.f32 %v1939, %v2151
        %v2278 = vadd.f32 %v1942, %v2154
        %v2279 = vadd.f32 %v1947, %v2159
        %v2280 = vadd.f32 %v1950, %v2162
        %v2281 = vadd.f32 %v1955, %v2167
        %v2282 = vadd.f32 %v1958, %v2170
        %v2283 = vadd.f32 %v1963, %v2175
        %v2284 = vadd.f32 %v1966, %v2178
        %v2285 = vadd.f32 %v1971, %v2183
        %v2286 = vadd.f32 %v1974, %v2186
        %v2287 = vadd.f32 %v1979, %v2191
        %v2288 = vadd.f32 %v1982, %v2194
        %v2289 = vadd.f32 %v1987, %v2199
        %v2290 = vadd.f32 %v1990, %v2202
        %v2291 = vadd.f32 %v1995, %v2207
        %v2292 = vadd.f32 %v1998, %v2210
        %v2293 = vadd.f32 %v2003, %v2215
        %v2294 = vadd.f32 %v2006, %v2218
        %v2295 = vadd.f32 %v2011, %v2223
        %v2296 = vadd.f32 %v2014, %v2226
        %v2297 = vadd.f32 %v2019, %v2231
        %v2298 = vadd.f32 %v2022, %v2234
        %v2299 = vadd.f32 %v2027, %v2239
        %v2300 = vadd.f32 %v2030, %v2242
        %v2301 = vadd.f32 %v2035, %v2247
        %v2302 = vadd.f32 %v2038, %v2250
        %v2303 = vadd.f32 %v2043, %v2255
        %v2304 = vadd.f32 %v2046, %v2258
        %v2305 = vadd.f32 %v2051, %v2263
        %v2306 = vadd.f32 %v2054, %v2266
        %v2307 = vadd.f32 %v2059, %v2271
        %v2308 = vadd.f32 %v2062, %v2274
        %v2309 = vld [vmem:[#allocation2 + $0x17] sm:$0xff]
        %v2310 = vld [vmem:[#allocation2 + $0x1f] sm:$0xff]
        %v2311 = vld [vmem:[#allocation2 + $0x27] sm:$0xff]
        %v2312 = vld [vmem:[#allocation2 + $0x2f] sm:$0xff]
        %v2313 = vld [vmem:[#allocation2 + $0x37] sm:$0xff]
        %v2314 = vld [vmem:[#allocation2 + $0x3f] sm:$0xff]
        %v2315 = vld [vmem:[#allocation2 + $0x47] sm:$0xff]
        %v2316 = vld [vmem:[#allocation2 + $0x4f] sm:$0xff]
        %v2317 = vld [vmem:[#allocation2 + $0x57] sm:$0xff]
        %v2318 = vld [vmem:[#allocation2 + $0x5f] sm:$0xff]
        %v2319 = vld [vmem:[#allocation2 + $0x67] sm:$0xff]
        %v2320 = vld [vmem:[#allocation2 + $0x6f] sm:$0xff]
        %v2321 = vld [vmem:[#allocation2 + $0x77] sm:$0xff]
        %v2322 = vld [vmem:[#allocation2 + $0x7f] sm:$0xff]
        %v2323 = vld [vmem:[#allocation2 + $0x87] sm:$0xff]
        %v2324 = vld [vmem:[#allocation2 + $0x8f] sm:$0xff]
        %v2325 = vld [vmem:[#allocation2 + $0x97] sm:$0xff]
        %v2326 = vld [vmem:[#allocation2 + $0x9f] sm:$0xff]
        %v2327 = vld [vmem:[#allocation2 + $0xa7] sm:$0xff]
        %v2328 = vld [vmem:[#allocation2 + $0xaf] sm:$0xff]
        %v2329 = vld [vmem:[#allocation2 + $0xb7] sm:$0xff]
        %v2330 = vld [vmem:[#allocation2 + $0xbf] sm:$0xff]
        %v2331 = vld [vmem:[#allocation2 + $0xc7] sm:$0xff]
        %v2332 = vld [vmem:[#allocation2 + $0xcf] sm:$0xff]
        %v2333 = vld [vmem:[#allocation2 + $0xd7] sm:$0xff]
        %v2334 = vld [vmem:[#allocation2 + $0xdf] sm:$0xff]
        %v2335 = vld [vmem:[#allocation2 + $0xe7] sm:$0xff]
        %v2336 = vld [vmem:[#allocation2 + $0xef] sm:$0xff]
        %v2337 = vld [vmem:[#allocation2 + $0xf7] sm:$0xff]
        %v2338 = vld [vmem:[#allocation2 + $0xff] sm:$0xff]
        %v2339 = vld [vmem:[#allocation2 + $0x107] sm:$0xff]
        %v2340 = vld [vmem:[#allocation2 + $0x10f] sm:$0xff]
        %v2341 = vld [vmem:[#allocation2 + $0x19] sm:$0xff]
        %v2342 = vld [vmem:[#allocation2 + $0x21] sm:$0xff]
        %v2343 = vld [vmem:[#allocation2 + $0x29] sm:$0xff]
        %v2344 = vld [vmem:[#allocation2 + $0x31] sm:$0xff]
        %v2345 = vld [vmem:[#allocation2 + $0x39] sm:$0xff]
        %v2346 = vld [vmem:[#allocation2 + $0x41] sm:$0xff]
        %v2347 = vld [vmem:[#allocation2 + $0x49] sm:$0xff]
        %v2348 = vld [vmem:[#allocation2 + $0x51] sm:$0xff]
        %v2349 = vld [vmem:[#allocation2 + $0x59] sm:$0xff]
        %v2350 = vld [vmem:[#allocation2 + $0x61] sm:$0xff]
        %v2351 = vld [vmem:[#allocation2 + $0x69] sm:$0xff]
        %v2352 = vld [vmem:[#allocation2 + $0x71] sm:$0xff]
        %v2353 = vld [vmem:[#allocation2 + $0x79] sm:$0xff]
        %v2354 = vld [vmem:[#allocation2 + $0x81] sm:$0xff]
        %v2355 = vld [vmem:[#allocation2 + $0x89] sm:$0xff]
        %v2356 = vld [vmem:[#allocation2 + $0x91] sm:$0xff]
        %v2357 = vld [vmem:[#allocation2 + $0x99] sm:$0xff]
        %v2358 = vld [vmem:[#allocation2 + $0xa1] sm:$0xff]
        %v2359 = vld [vmem:[#allocation2 + $0xa9] sm:$0xff]
        %v2360 = vld [vmem:[#allocation2 + $0xb1] sm:$0xff]
        %v2361 = vld [vmem:[#allocation2 + $0xb9] sm:$0xff]
        %v2362 = vld [vmem:[#allocation2 + $0xc1] sm:$0xff]
        %v2363 = vld [vmem:[#allocation2 + $0xc9] sm:$0xff]
        %v2364 = vld [vmem:[#allocation2 + $0xd1] sm:$0xff]
        %v2365 = vld [vmem:[#allocation2 + $0xd9] sm:$0xff]
        %v2366 = vld [vmem:[#allocation2 + $0xe1] sm:$0xff]
        %v2367 = vld [vmem:[#allocation2 + $0xe9] sm:$0xff]
        %v2368 = vld [vmem:[#allocation2 + $0xf1] sm:$0xff]
        %v2369 = vld [vmem:[#allocation2 + $0xf9] sm:$0xff]
        %v2370 = vld [vmem:[#allocation2 + $0x101] sm:$0xff]
        %v2371 = vld [vmem:[#allocation2 + $0x109] sm:$0xff]
        %v2372 = vld [vmem:[#allocation2 + $0x111] sm:$0xff]
        %v2373 = vsel %vm1429, %v2309, 0.0
        %v2374 = vsel %vm1430, %v2310, 0.0
        %v2375 = vsel %vm1431, %v2311, 0.0
        %v2376 = vsel %vm1432, %v2312, 0.0
        %v2377 = vsel %vm1433, %v2313, 0.0
        %v2378 = vsel %vm1434, %v2314, 0.0
        %v2379 = vsel %vm1435, %v2315, 0.0
        %v2380 = vsel %vm1436, %v2316, 0.0
        %v2381 = vsel %vm1437, %v2317, 0.0
        %v2382 = vsel %vm1438, %v2318, 0.0
        %v2383 = vsel %vm1439, %v2319, 0.0
        %v2384 = vsel %vm1440, %v2320, 0.0
        %v2385 = vsel %vm1441, %v2321, 0.0
        %v2386 = vsel %vm1442, %v2322, 0.0
        %v2387 = vsel %vm1443, %v2323, 0.0
        %v2388 = vsel %vm1444, %v2324, 0.0
        %v2389 = vsel %vm1445, %v2325, 0.0
        %v2390 = vsel %vm1446, %v2326, 0.0
        %v2391 = vsel %vm1447, %v2327, 0.0
        %v2392 = vsel %vm1448, %v2328, 0.0
        %v2393 = vsel %vm1449, %v2329, 0.0
        %v2394 = vsel %vm1450, %v2330, 0.0
        %v2395 = vsel %vm1451, %v2331, 0.0
        %v2396 = vsel %vm1452, %v2332, 0.0
        %v2397 = vsel %vm1453, %v2333, 0.0
        %v2398 = vsel %vm1454, %v2334, 0.0
        %v2399 = vsel %vm1455, %v2335, 0.0
        %v2400 = vsel %vm1456, %v2336, 0.0
        %v2401 = vsel %vm1457, %v2337, 0.0
        %v2402 = vsel %vm1458, %v2338, 0.0
        %v2403 = vsel %vm1459, %v2339, 0.0
        %v2404 = vsel %vm1460, %v2340, 0.0
        %v2405 = vpack.c.bf16 %v2374, %v2373
        %v2406 = vpack.c.bf16 %v2376, %v2375
        %v2407 = vpack.c.bf16 %v2378, %v2377
        %v2408 = vpack.c.bf16 %v2380, %v2379
        %v2409 = vpack.c.bf16 %v2382, %v2381
        %v2410 = vpack.c.bf16 %v2384, %v2383
        %v2411 = vpack.c.bf16 %v2386, %v2385
        %v2412 = vpack.c.bf16 %v2388, %v2387
        %v2413 = vpack.c.bf16 %v2390, %v2389
        %v2414 = vpack.c.bf16 %v2392, %v2391
        %v2415 = vpack.c.bf16 %v2394, %v2393
        %v2416 = vpack.c.bf16 %v2396, %v2395
        %v2417 = vpack.c.bf16 %v2398, %v2397
        %v2418 = vpack.c.bf16 %v2400, %v2399
        %v2419 = vpack.c.bf16 %v2402, %v2401
        %v2420 = vpack.c.bf16 %v2404, %v2403
        %v2421 = vsel %vm1541, %v2341, 0.0
        %v2422 = vsel %vm1542, %v2342, 0.0
        %v2423 = vsel %vm1543, %v2343, 0.0
        %v2424 = vsel %vm1544, %v2344, 0.0
        %v2425 = vsel %vm1545, %v2345, 0.0
        %v2426 = vsel %vm1546, %v2346, 0.0
        %v2427 = vsel %vm1547, %v2347, 0.0
        %v2428 = vsel %vm1548, %v2348, 0.0
        %v2429 = vsel %vm1549, %v2349, 0.0
        %v2430 = vsel %vm1550, %v2350, 0.0
        %v2431 = vsel %vm1551, %v2351, 0.0
        %v2432 = vsel %vm1552, %v2352, 0.0
        %v2433 = vsel %vm1553, %v2353, 0.0
        %v2434 = vsel %vm1554, %v2354, 0.0
        %v2435 = vsel %vm1555, %v2355, 0.0
        %v2436 = vsel %vm1556, %v2356, 0.0
        %v2437 = vsel %vm1557, %v2357, 0.0
        %v2438 = vsel %vm1558, %v2358, 0.0
        %v2439 = vsel %vm1559, %v2359, 0.0
        %v2440 = vsel %vm1560, %v2360, 0.0
        %v2441 = vsel %vm1561, %v2361, 0.0
        %v2442 = vsel %vm1562, %v2362, 0.0
        %v2443 = vsel %vm1563, %v2363, 0.0
        %v2444 = vsel %vm1564, %v2364, 0.0
        %v2445 = vsel %vm1565, %v2365, 0.0
        %v2446 = vsel %vm1566, %v2366, 0.0
        %v2447 = vsel %vm1567, %v2367, 0.0
        %v2448 = vsel %vm1568, %v2368, 0.0
        %v2449 = vsel %vm1569, %v2369, 0.0
        %v2450 = vsel %vm1570, %v2370, 0.0
        %v2451 = vsel %vm1571, %v2371, 0.0
        %v2452 = vsel %vm1572, %v2372, 0.0
        %v2453 = vpack.c.bf16 %v2422, %v2421
        %v2454 = vpack.c.bf16 %v2424, %v2423
        %v2455 = vpack.c.bf16 %v2426, %v2425
        %v2456 = vpack.c.bf16 %v2428, %v2427
        %v2457 = vpack.c.bf16 %v2430, %v2429
        %v2458 = vpack.c.bf16 %v2432, %v2431
        %v2459 = vpack.c.bf16 %v2434, %v2433
        %v2460 = vpack.c.bf16 %v2436, %v2435
        %v2461 = vpack.c.bf16 %v2438, %v2437
        %v2462 = vpack.c.bf16 %v2440, %v2439
        %v2463 = vpack.c.bf16 %v2442, %v2441
        %v2464 = vpack.c.bf16 %v2444, %v2443
        %v2465 = vpack.c.bf16 %v2446, %v2445
        %v2466 = vpack.c.bf16 %v2448, %v2447
        %v2467 = vpack.c.bf16 %v2450, %v2449
        %v2468 = vpack.c.bf16 %v2452, %v2451
        %s2469 = scalar_lea.vmem %s3, 12
        %v2470 = vld [vmem:[%s2469] sm:$0xf]
        %v2471 = vld [vmem:[%s2469 + $0x4] sm:$0xf]
        %v2472 = vld [vmem:[%s2469 + $0x8] sm:$0xf]
        %v2474 = vsel %vm781, %v2405, 0
        %v2477 = vsel %vm781, %v2406, 0
        %v2480 = vsel %vm781, %v2407, 0
        %v2483 = vsel %vm781, %v2408, 0
        %v2486 = vsel %vm781, %v2409, 0
        %v2489 = vsel %vm781, %v2410, 0
        %v2492 = vsel %vm781, %v2411, 0
        %v2495 = vsel %vm781, %v2412, 0
        %v2498 = vsel %vm781, %v2413, 0
        %v2501 = vsel %vm781, %v2414, 0
        %v2504 = vsel %vm781, %v2415, 0
        %v2507 = vsel %vm781, %v2416, 0
        %v2510 = vsel %vm781, %v2417, 0
        %v2513 = vsel %vm781, %v2418, 0
        %v2516 = vsel %vm781, %v2419, 0
        %v2519 = vsel %vm781, %v2420, 0
        %v2522 = vsel %vm1688, %v2470, 0
        %2524 = vmatprep.subr.bf16.mxu0 0
        %2525 = vmatpush1.bf16.msra.mxu0 0
        %2526 = vmatprep.subr.bf16.mxu0 0
        %2527 = vmatpush1.bf16.msra.mxu0 0
        %2528 = vmatprep.subr.bf16.mxu0 0
        %2529 = vmatpush1.bf16.msra.mxu0 0
        %2530 = vmatprep.subr.bf16.mxu0 0
        %2531 = vmatpush1.bf16.msra.mxu0 0
        %2532 = vmatprep.subr.bf16.mxu0 0
        %2533 = vmatpush1.bf16.msra.mxu0 0
        %2534 = vmatprep.subr.bf16.mxu0 0
        %2535 = vmatpush1.bf16.msra.mxu0 0
        %2536 = vmatprep.subr.bf16.mxu0 0
        %2537 = vmatpush1.bf16.msra.mxu0 0
        %2538 = vmatprep.subr.bf16.mxu0 0
        %2539 = vmatpush1.bf16.msra.mxu0 %v2522
        %2540 = vmatprep.subr.bf16.mxu0 0
        %2541 = vmatpush2.bf16.msra.mxu0 0
        %2542 = vmatprep.subr.bf16.mxu0 0
        %2543 = vmatpush2.bf16.msra.mxu0 0
        %2544 = vmatprep.subr.bf16.mxu0 0
        %2545 = vmatpush2.bf16.msra.mxu0 0
        %2546 = vmatprep.subr.bf16.mxu0 0
        %2547 = vmatpush2.bf16.msra.mxu0 0
        %2548 = vmatprep.subr.bf16.mxu0 0
        %2549 = vmatpush2.bf16.msra.mxu0 0
        %2550 = vmatprep.subr.bf16.mxu0 0
        %2551 = vmatpush2.bf16.msra.mxu0 0
        %2552 = vmatprep.subr.bf16.mxu0 0
        %2553 = vmatpush2.bf16.msra.mxu0 0
        %2554 = vmatprep.subr.bf16.mxu0 0
        %2555 = vmatpush2.bf16.msra.mxu0 0
        %2556 = vmatprep.mubr.bf16.mxu0 0
        %2557 = vmatmul.mubr.bf16.gmra.mxu0 %v2474
        %v2558 = vpop.f32.mrf.mxu0
        %v2559 = vadd.f32 0.0, %v2558
        %v2560 = vpop.f32.mrf.mxu0
        %v2561 = vpop.f32.mrf.mxu0
        %v2562 = vadd.f32 0.0, %v2561
        %v2563 = vpop.f32.mrf.mxu0
        %2564 = vmatprep.mubr.bf16.mxu0 0
        %2565 = vmatmul.mubr.bf16.gmra.mxu0 %v2477
        %v2566 = vpop.f32.mrf.mxu0
        %v2567 = vadd.f32 0.0, %v2566
        %v2568 = vpop.f32.mrf.mxu0
        %v2569 = vpop.f32.mrf.mxu0
        %v2570 = vadd.f32 0.0, %v2569
        %v2571 = vpop.f32.mrf.mxu0
        %2572 = vmatprep.mubr.bf16.mxu0 0
        %2573 = vmatmul.mubr.bf16.gmra.mxu0 %v2480
        %v2574 = vpop.f32.mrf.mxu0
        %v2575 = vadd.f32 0.0, %v2574
        %v2576 = vpop.f32.mrf.mxu0
        %v2577 = vpop.f32.mrf.mxu0
        %v2578 = vadd.f32 0.0, %v2577
        %v2579 = vpop.f32.mrf.mxu0
        %2580 = vmatprep.mubr.bf16.mxu0 0
        %2581 = vmatmul.mubr.bf16.gmra.mxu0 %v2483
        %v2582 = vpop.f32.mrf.mxu0
        %v2583 = vadd.f32 0.0, %v2582
        %v2584 = vpop.f32.mrf.mxu0
        %v2585 = vpop.f32.mrf.mxu0
        %v2586 = vadd.f32 0.0, %v2585
        %v2587 = vpop.f32.mrf.mxu0
        %2588 = vmatprep.mubr.bf16.mxu0 0
        %2589 = vmatmul.mubr.bf16.gmra.mxu0 %v2486
        %v2590 = vpop.f32.mrf.mxu0
        %v2591 = vadd.f32 0.0, %v2590
        %v2592 = vpop.f32.mrf.mxu0
        %v2593 = vpop.f32.mrf.mxu0
        %v2594 = vadd.f32 0.0, %v2593
        %v2595 = vpop.f32.mrf.mxu0
        %2596 = vmatprep.mubr.bf16.mxu0 0
        %2597 = vmatmul.mubr.bf16.gmra.mxu0 %v2489
        %v2598 = vpop.f32.mrf.mxu0
        %v2599 = vadd.f32 0.0, %v2598
        %v2600 = vpop.f32.mrf.mxu0
        %v2601 = vpop.f32.mrf.mxu0
        %v2602 = vadd.f32 0.0, %v2601
        %v2603 = vpop.f32.mrf.mxu0
        %2604 = vmatprep.mubr.bf16.mxu0 0
        %2605 = vmatmul.mubr.bf16.gmra.mxu0 %v2492
        %v2606 = vpop.f32.mrf.mxu0
        %v2607 = vadd.f32 0.0, %v2606
        %v2608 = vpop.f32.mrf.mxu0
        %v2609 = vpop.f32.mrf.mxu0
        %v2610 = vadd.f32 0.0, %v2609
        %v2611 = vpop.f32.mrf.mxu0
        %2612 = vmatprep.mubr.bf16.mxu0 0
        %2613 = vmatmul.mubr.bf16.gmra.mxu0 %v2495
        %v2614 = vpop.f32.mrf.mxu0
        %v2615 = vadd.f32 0.0, %v2614
        %v2616 = vpop.f32.mrf.mxu0
        %v2617 = vpop.f32.mrf.mxu0
        %v2618 = vadd.f32 0.0, %v2617
        %v2619 = vpop.f32.mrf.mxu0
        %2620 = vmatprep.mubr.bf16.mxu0 0
        %2621 = vmatmul.mubr.bf16.gmra.mxu0 %v2498
        %v2622 = vpop.f32.mrf.mxu0
        %v2623 = vadd.f32 0.0, %v2622
        %v2624 = vpop.f32.mrf.mxu0
        %v2625 = vpop.f32.mrf.mxu0
        %v2626 = vadd.f32 0.0, %v2625
        %v2627 = vpop.f32.mrf.mxu0
        %2628 = vmatprep.mubr.bf16.mxu0 0
        %2629 = vmatmul.mubr.bf16.gmra.mxu0 %v2501
        %v2630 = vpop.f32.mrf.mxu0
        %v2631 = vadd.f32 0.0, %v2630
        %v2632 = vpop.f32.mrf.mxu0
        %v2633 = vpop.f32.mrf.mxu0
        %v2634 = vadd.f32 0.0, %v2633
        %v2635 = vpop.f32.mrf.mxu0
        %2636 = vmatprep.mubr.bf16.mxu0 0
        %2637 = vmatmul.mubr.bf16.gmra.mxu0 %v2504
        %v2638 = vpop.f32.mrf.mxu0
        %v2639 = vadd.f32 0.0, %v2638
        %v2640 = vpop.f32.mrf.mxu0
        %v2641 = vpop.f32.mrf.mxu0
        %v2642 = vadd.f32 0.0, %v2641
        %v2643 = vpop.f32.mrf.mxu0
        %2644 = vmatprep.mubr.bf16.mxu0 0
        %2645 = vmatmul.mubr.bf16.gmra.mxu0 %v2507
        %v2646 = vpop.f32.mrf.mxu0
        %v2647 = vadd.f32 0.0, %v2646
        %v2648 = vpop.f32.mrf.mxu0
        %v2649 = vpop.f32.mrf.mxu0
        %v2650 = vadd.f32 0.0, %v2649
        %v2651 = vpop.f32.mrf.mxu0
        %2652 = vmatprep.mubr.bf16.mxu0 0
        %2653 = vmatmul.mubr.bf16.gmra.mxu0 %v2510
        %v2654 = vpop.f32.mrf.mxu0
        %v2655 = vadd.f32 0.0, %v2654
        %v2656 = vpop.f32.mrf.mxu0
        %v2657 = vpop.f32.mrf.mxu0
        %v2658 = vadd.f32 0.0, %v2657
        %v2659 = vpop.f32.mrf.mxu0
        %2660 = vmatprep.mubr.bf16.mxu0 0
        %2661 = vmatmul.mubr.bf16.gmra.mxu0 %v2513
        %v2662 = vpop.f32.mrf.mxu0
        %v2663 = vadd.f32 0.0, %v2662
        %v2664 = vpop.f32.mrf.mxu0
        %v2665 = vpop.f32.mrf.mxu0
        %v2666 = vadd.f32 0.0, %v2665
        %v2667 = vpop.f32.mrf.mxu0
        %2668 = vmatprep.mubr.bf16.mxu0 0
        %2669 = vmatmul.mubr.bf16.gmra.mxu0 %v2516
        %v2670 = vpop.f32.mrf.mxu0
        %v2671 = vadd.f32 0.0, %v2670
        %v2672 = vpop.f32.mrf.mxu0
        %v2673 = vpop.f32.mrf.mxu0
        %v2674 = vadd.f32 0.0, %v2673
        %v2675 = vpop.f32.mrf.mxu0
        %2676 = vmatprep.mubr.bf16.mxu0 0
        %2677 = vmatmul.mubr.bf16.gmra.mxu0 %v2519
        %v2678 = vpop.f32.mrf.mxu0
        %v2679 = vadd.f32 0.0, %v2678
        %v2680 = vpop.f32.mrf.mxu0
        %v2681 = vpop.f32.mrf.mxu0
        %v2682 = vadd.f32 0.0, %v2681
        %v2683 = vpop.f32.mrf.mxu0
        %2684 = vdwg.mxu0
        %v2685 = vadd.f32 %v2277, %v2559
        %v2686 = vadd.f32 %v2278, %v2562
        %v2687 = vadd.f32 %v2279, %v2567
        %v2688 = vadd.f32 %v2280, %v2570
        %v2689 = vadd.f32 %v2281, %v2575
        %v2690 = vadd.f32 %v2282, %v2578
        %v2691 = vadd.f32 %v2283, %v2583
        %v2692 = vadd.f32 %v2284, %v2586
        %v2693 = vadd.f32 %v2285, %v2591
        %v2694 = vadd.f32 %v2286, %v2594
        %v2695 = vadd.f32 %v2287, %v2599
        %v2696 = vadd.f32 %v2288, %v2602
        %v2697 = vadd.f32 %v2289, %v2607
        %v2698 = vadd.f32 %v2290, %v2610
        %v2699 = vadd.f32 %v2291, %v2615
        %v2700 = vadd.f32 %v2292, %v2618
        %v2701 = vadd.f32 %v2293, %v2623
        %v2702 = vadd.f32 %v2294, %v2626
        %v2703 = vadd.f32 %v2295, %v2631
        %v2704 = vadd.f32 %v2296, %v2634
        %v2705 = vadd.f32 %v2297, %v2639
        %v2706 = vadd.f32 %v2298, %v2642
        %v2707 = vadd.f32 %v2299, %v2647
        %v2708 = vadd.f32 %v2300, %v2650
        %v2709 = vadd.f32 %v2301, %v2655
        %v2710 = vadd.f32 %v2302, %v2658
        %v2711 = vadd.f32 %v2303, %v2663
        %v2712 = vadd.f32 %v2304, %v2666
        %v2713 = vadd.f32 %v2305, %v2671
        %v2714 = vadd.f32 %v2306, %v2674
        %v2715 = vadd.f32 %v2307, %v2679
        %v2716 = vadd.f32 %v2308, %v2682
        %v2718 = vsel %vm781, %v765, 0
        %v2721 = vsel %vm781, %v766, 0
        %v2724 = vsel %vm781, %v767, 0
        %v2727 = vsel %vm781, %v768, 0
        %v2730 = vsel %vm781, %v769, 0
        %v2733 = vsel %vm781, %v770, 0
        %v2736 = vsel %vm781, %v771, 0
        %v2739 = vsel %vm781, %v772, 0
        %v2742 = vsel %vm781, %v773, 0
        %v2745 = vsel %vm781, %v774, 0
        %v2748 = vsel %vm781, %v775, 0
        %v2751 = vsel %vm781, %v776, 0
        %v2754 = vsel %vm781, %v777, 0
        %v2757 = vsel %vm781, %v778, 0
        %v2760 = vsel %vm781, %v779, 0
        %v2763 = vsel %vm781, %v780, 0
        %v2766 = vsel %vm1688, %v2471, 0
        %2768 = vmatprep.subr.bf16.mxu0 0
        %2769 = vmatpush1.bf16.msra.mxu0 0
        %2770 = vmatprep.subr.bf16.mxu0 0
        %2771 = vmatpush1.bf16.msra.mxu0 0
        %2772 = vmatprep.subr.bf16.mxu0 0
        %2773 = vmatpush1.bf16.msra.mxu0 0
        %2774 = vmatprep.subr.bf16.mxu0 0
        %2775 = vmatpush1.bf16.msra.mxu0 0
        %2776 = vmatprep.subr.bf16.mxu0 0
        %2777 = vmatpush1.bf16.msra.mxu0 0
        %2778 = vmatprep.subr.bf16.mxu0 0
        %2779 = vmatpush1.bf16.msra.mxu0 0
        %2780 = vmatprep.subr.bf16.mxu0 0
        %2781 = vmatpush1.bf16.msra.mxu0 0
        %2782 = vmatprep.subr.bf16.mxu0 0
        %2783 = vmatpush1.bf16.msra.mxu0 %v2766
        %2784 = vmatprep.subr.bf16.mxu0 0
        %2785 = vmatpush2.bf16.msra.mxu0 0
        %2786 = vmatprep.subr.bf16.mxu0 0
        %2787 = vmatpush2.bf16.msra.mxu0 0
        %2788 = vmatprep.subr.bf16.mxu0 0
        %2789 = vmatpush2.bf16.msra.mxu0 0
        %2790 = vmatprep.subr.bf16.mxu0 0
        %2791 = vmatpush2.bf16.msra.mxu0 0
        %2792 = vmatprep.subr.bf16.mxu0 0
        %2793 = vmatpush2.bf16.msra.mxu0 0
        %2794 = vmatprep.subr.bf16.mxu0 0
        %2795 = vmatpush2.bf16.msra.mxu0 0
        %2796 = vmatprep.subr.bf16.mxu0 0
        %2797 = vmatpush2.bf16.msra.mxu0 0
        %2798 = vmatprep.subr.bf16.mxu0 0
        %2799 = vmatpush2.bf16.msra.mxu0 0
        %2800 = vmatprep.mubr.bf16.mxu0 0
        %2801 = vmatmul.mubr.bf16.gmra.mxu0 %v2718
        %v2802 = vpop.f32.mrf.mxu0
        %v2803 = vadd.f32 0.0, %v2802
        %v2804 = vpop.f32.mrf.mxu0
        %v2805 = vpop.f32.mrf.mxu0
        %v2806 = vadd.f32 0.0, %v2805
        %v2807 = vpop.f32.mrf.mxu0
        %2808 = vmatprep.mubr.bf16.mxu0 0
        %2809 = vmatmul.mubr.bf16.gmra.mxu0 %v2721
        %v2810 = vpop.f32.mrf.mxu0
        %v2811 = vadd.f32 0.0, %v2810
        %v2812 = vpop.f32.mrf.mxu0
        %v2813 = vpop.f32.mrf.mxu0
        %v2814 = vadd.f32 0.0, %v2813
        %v2815 = vpop.f32.mrf.mxu0
        %2816 = vmatprep.mubr.bf16.mxu0 0
        %2817 = vmatmul.mubr.bf16.gmra.mxu0 %v2724
        %v2818 = vpop.f32.mrf.mxu0
        %v2819 = vadd.f32 0.0, %v2818
        %v2820 = vpop.f32.mrf.mxu0
        %v2821 = vpop.f32.mrf.mxu0
        %v2822 = vadd.f32 0.0, %v2821
        %v2823 = vpop.f32.mrf.mxu0
        %2824 = vmatprep.mubr.bf16.mxu0 0
        %2825 = vmatmul.mubr.bf16.gmra.mxu0 %v2727
        %v2826 = vpop.f32.mrf.mxu0
        %v2827 = vadd.f32 0.0, %v2826
        %v2828 = vpop.f32.mrf.mxu0
        %v2829 = vpop.f32.mrf.mxu0
        %v2830 = vadd.f32 0.0, %v2829
        %v2831 = vpop.f32.mrf.mxu0
        %2832 = vmatprep.mubr.bf16.mxu0 0
        %2833 = vmatmul.mubr.bf16.gmra.mxu0 %v2730
        %v2834 = vpop.f32.mrf.mxu0
        %v2835 = vadd.f32 0.0, %v2834
        %v2836 = vpop.f32.mrf.mxu0
        %v2837 = vpop.f32.mrf.mxu0
        %v2838 = vadd.f32 0.0, %v2837
        %v2839 = vpop.f32.mrf.mxu0
        %2840 = vmatprep.mubr.bf16.mxu0 0
        %2841 = vmatmul.mubr.bf16.gmra.mxu0 %v2733
        %v2842 = vpop.f32.mrf.mxu0
        %v2843 = vadd.f32 0.0, %v2842
        %v2844 = vpop.f32.mrf.mxu0
        %v2845 = vpop.f32.mrf.mxu0
        %v2846 = vadd.f32 0.0, %v2845
        %v2847 = vpop.f32.mrf.mxu0
        %2848 = vmatprep.mubr.bf16.mxu0 0
        %2849 = vmatmul.mubr.bf16.gmra.mxu0 %v2736
        %v2850 = vpop.f32.mrf.mxu0
        %v2851 = vadd.f32 0.0, %v2850
        %v2852 = vpop.f32.mrf.mxu0
        %v2853 = vpop.f32.mrf.mxu0
        %v2854 = vadd.f32 0.0, %v2853
        %v2855 = vpop.f32.mrf.mxu0
        %2856 = vmatprep.mubr.bf16.mxu0 0
        %2857 = vmatmul.mubr.bf16.gmra.mxu0 %v2739
        %v2858 = vpop.f32.mrf.mxu0
        %v2859 = vadd.f32 0.0, %v2858
        %v2860 = vpop.f32.mrf.mxu0
        %v2861 = vpop.f32.mrf.mxu0
        %v2862 = vadd.f32 0.0, %v2861
        %v2863 = vpop.f32.mrf.mxu0
        %2864 = vmatprep.mubr.bf16.mxu0 0
        %2865 = vmatmul.mubr.bf16.gmra.mxu0 %v2742
        %v2866 = vpop.f32.mrf.mxu0
        %v2867 = vadd.f32 0.0, %v2866
        %v2868 = vpop.f32.mrf.mxu0
        %v2869 = vpop.f32.mrf.mxu0
        %v2870 = vadd.f32 0.0, %v2869
        %v2871 = vpop.f32.mrf.mxu0
        %2872 = vmatprep.mubr.bf16.mxu0 0
        %2873 = vmatmul.mubr.bf16.gmra.mxu0 %v2745
        %v2874 = vpop.f32.mrf.mxu0
        %v2875 = vadd.f32 0.0, %v2874
        %v2876 = vpop.f32.mrf.mxu0
        %v2877 = vpop.f32.mrf.mxu0
        %v2878 = vadd.f32 0.0, %v2877
        %v2879 = vpop.f32.mrf.mxu0
        %2880 = vmatprep.mubr.bf16.mxu0 0
        %2881 = vmatmul.mubr.bf16.gmra.mxu0 %v2748
        %v2882 = vpop.f32.mrf.mxu0
        %v2883 = vadd.f32 0.0, %v2882
        %v2884 = vpop.f32.mrf.mxu0
        %v2885 = vpop.f32.mrf.mxu0
        %v2886 = vadd.f32 0.0, %v2885
        %v2887 = vpop.f32.mrf.mxu0
        %2888 = vmatprep.mubr.bf16.mxu0 0
        %2889 = vmatmul.mubr.bf16.gmra.mxu0 %v2751
        %v2890 = vpop.f32.mrf.mxu0
        %v2891 = vadd.f32 0.0, %v2890
        %v2892 = vpop.f32.mrf.mxu0
        %v2893 = vpop.f32.mrf.mxu0
        %v2894 = vadd.f32 0.0, %v2893
        %v2895 = vpop.f32.mrf.mxu0
        %2896 = vmatprep.mubr.bf16.mxu0 0
        %2897 = vmatmul.mubr.bf16.gmra.mxu0 %v2754
        %v2898 = vpop.f32.mrf.mxu0
        %v2899 = vadd.f32 0.0, %v2898
        %v2900 = vpop.f32.mrf.mxu0
        %v2901 = vpop.f32.mrf.mxu0
        %v2902 = vadd.f32 0.0, %v2901
        %v2903 = vpop.f32.mrf.mxu0
        %2904 = vmatprep.mubr.bf16.mxu0 0
        %2905 = vmatmul.mubr.bf16.gmra.mxu0 %v2757
        %v2906 = vpop.f32.mrf.mxu0
        %v2907 = vadd.f32 0.0, %v2906
        %v2908 = vpop.f32.mrf.mxu0
        %v2909 = vpop.f32.mrf.mxu0
        %v2910 = vadd.f32 0.0, %v2909
        %v2911 = vpop.f32.mrf.mxu0
        %2912 = vmatprep.mubr.bf16.mxu0 0
        %2913 = vmatmul.mubr.bf16.gmra.mxu0 %v2760
        %v2914 = vpop.f32.mrf.mxu0
        %v2915 = vadd.f32 0.0, %v2914
        %v2916 = vpop.f32.mrf.mxu0
        %v2917 = vpop.f32.mrf.mxu0
        %v2918 = vadd.f32 0.0, %v2917
        %v2919 = vpop.f32.mrf.mxu0
        %2920 = vmatprep.mubr.bf16.mxu0 0
        %2921 = vmatmul.mubr.bf16.gmra.mxu0 %v2763
        %v2922 = vpop.f32.mrf.mxu0
        %v2923 = vadd.f32 0.0, %v2922
        %v2924 = vpop.f32.mrf.mxu0
        %v2925 = vpop.f32.mrf.mxu0
        %v2926 = vadd.f32 0.0, %v2925
        %v2927 = vpop.f32.mrf.mxu0
        %2928 = vdwg.mxu0
        %v2929 = vadd.f32 %v2685, %v2803
        %v2930 = vadd.f32 %v2686, %v2806
        %v2931 = vadd.f32 %v2687, %v2811
        %v2932 = vadd.f32 %v2688, %v2814
        %v2933 = vadd.f32 %v2689, %v2819
        %v2934 = vadd.f32 %v2690, %v2822
        %v2935 = vadd.f32 %v2691, %v2827
        %v2936 = vadd.f32 %v2692, %v2830
        %v2937 = vadd.f32 %v2693, %v2835
        %v2938 = vadd.f32 %v2694, %v2838
        %v2939 = vadd.f32 %v2695, %v2843
        %v2940 = vadd.f32 %v2696, %v2846
        %v2941 = vadd.f32 %v2697, %v2851
        %v2942 = vadd.f32 %v2698, %v2854
        %v2943 = vadd.f32 %v2699, %v2859
        %v2944 = vadd.f32 %v2700, %v2862
        %v2945 = vadd.f32 %v2701, %v2867
        %v2946 = vadd.f32 %v2702, %v2870
        %v2947 = vadd.f32 %v2703, %v2875
        %v2948 = vadd.f32 %v2704, %v2878
        %v2949 = vadd.f32 %v2705, %v2883
        %v2950 = vadd.f32 %v2706, %v2886
        %v2951 = vadd.f32 %v2707, %v2891
        %v2952 = vadd.f32 %v2708, %v2894
        %v2953 = vadd.f32 %v2709, %v2899
        %v2954 = vadd.f32 %v2710, %v2902
        %v2955 = vadd.f32 %v2711, %v2907
        %v2956 = vadd.f32 %v2712, %v2910
        %v2957 = vadd.f32 %v2713, %v2915
        %v2958 = vadd.f32 %v2714, %v2918
        %v2959 = vadd.f32 %v2715, %v2923
        %v2960 = vadd.f32 %v2716, %v2926
        %v2962 = vsel %vm781, %v2453, 0
        %v2965 = vsel %vm781, %v2454, 0
        %v2968 = vsel %vm781, %v2455, 0
        %v2971 = vsel %vm781, %v2456, 0
        %v2974 = vsel %vm781, %v2457, 0
        %v2977 = vsel %vm781, %v2458, 0
        %v2980 = vsel %vm781, %v2459, 0
        %v2983 = vsel %vm781, %v2460, 0
        %v2986 = vsel %vm781, %v2461, 0
        %v2989 = vsel %vm781, %v2462, 0
        %v2992 = vsel %vm781, %v2463, 0
        %v2995 = vsel %vm781, %v2464, 0
        %v2998 = vsel %vm781, %v2465, 0
        %v3001 = vsel %vm781, %v2466, 0
        %v3004 = vsel %vm781, %v2467, 0
        %v3007 = vsel %vm781, %v2468, 0
        %v3010 = vsel %vm1688, %v2472, 0
        %3012 = vmatprep.subr.bf16.mxu0 0
        %3013 = vmatpush1.bf16.msra.mxu0 0
        %3014 = vmatprep.subr.bf16.mxu0 0
        %3015 = vmatpush1.bf16.msra.mxu0 0
        %3016 = vmatprep.subr.bf16.mxu0 0
        %3017 = vmatpush1.bf16.msra.mxu0 0
        %3018 = vmatprep.subr.bf16.mxu0 0
        %3019 = vmatpush1.bf16.msra.mxu0 0
        %3020 = vmatprep.subr.bf16.mxu0 0
        %3021 = vmatpush1.bf16.msra.mxu0 0
        %3022 = vmatprep.subr.bf16.mxu0 0
        %3023 = vmatpush1.bf16.msra.mxu0 0
        %3024 = vmatprep.subr.bf16.mxu0 0
        %3025 = vmatpush1.bf16.msra.mxu0 0
        %3026 = vmatprep.subr.bf16.mxu0 0
        %3027 = vmatpush1.bf16.msra.mxu0 %v3010
        %3028 = vmatprep.subr.bf16.mxu0 0
        %3029 = vmatpush2.bf16.msra.mxu0 0
        %3030 = vmatprep.subr.bf16.mxu0 0
        %3031 = vmatpush2.bf16.msra.mxu0 0
        %3032 = vmatprep.subr.bf16.mxu0 0
        %3033 = vmatpush2.bf16.msra.mxu0 0
        %3034 = vmatprep.subr.bf16.mxu0 0
        %3035 = vmatpush2.bf16.msra.mxu0 0
        %3036 = vmatprep.subr.bf16.mxu0 0
        %3037 = vmatpush2.bf16.msra.mxu0 0
        %3038 = vmatprep.subr.bf16.mxu0 0
        %3039 = vmatpush2.bf16.msra.mxu0 0
        %3040 = vmatprep.subr.bf16.mxu0 0
        %3041 = vmatpush2.bf16.msra.mxu0 0
        %3042 = vmatprep.subr.bf16.mxu0 0
        %3043 = vmatpush2.bf16.msra.mxu0 0
        %3044 = vmatprep.mubr.bf16.mxu0 0
        %3045 = vmatmul.mubr.bf16.gmra.mxu0 %v2962
        %v3046 = vpop.f32.mrf.mxu0
        %v3047 = vadd.f32 0.0, %v3046
        %v3048 = vpop.f32.mrf.mxu0
        %v3049 = vpop.f32.mrf.mxu0
        %v3050 = vadd.f32 0.0, %v3049
        %v3051 = vpop.f32.mrf.mxu0
        %3052 = vmatprep.mubr.bf16.mxu0 0
        %3053 = vmatmul.mubr.bf16.gmra.mxu0 %v2965
        %v3054 = vpop.f32.mrf.mxu0
        %v3055 = vadd.f32 0.0, %v3054
        %v3056 = vpop.f32.mrf.mxu0
        %v3057 = vpop.f32.mrf.mxu0
        %v3058 = vadd.f32 0.0, %v3057
        %v3059 = vpop.f32.mrf.mxu0
        %3060 = vmatprep.mubr.bf16.mxu0 0
        %3061 = vmatmul.mubr.bf16.gmra.mxu0 %v2968
        %v3062 = vpop.f32.mrf.mxu0
        %v3063 = vadd.f32 0.0, %v3062
        %v3064 = vpop.f32.mrf.mxu0
        %v3065 = vpop.f32.mrf.mxu0
        %v3066 = vadd.f32 0.0, %v3065
        %v3067 = vpop.f32.mrf.mxu0
        %3068 = vmatprep.mubr.bf16.mxu0 0
        %3069 = vmatmul.mubr.bf16.gmra.mxu0 %v2971
        %v3070 = vpop.f32.mrf.mxu0
        %v3071 = vadd.f32 0.0, %v3070
        %v3072 = vpop.f32.mrf.mxu0
        %v3073 = vpop.f32.mrf.mxu0
        %v3074 = vadd.f32 0.0, %v3073
        %v3075 = vpop.f32.mrf.mxu0
        %3076 = vmatprep.mubr.bf16.mxu0 0
        %3077 = vmatmul.mubr.bf16.gmra.mxu0 %v2974
        %v3078 = vpop.f32.mrf.mxu0
        %v3079 = vadd.f32 0.0, %v3078
        %v3080 = vpop.f32.mrf.mxu0
        %v3081 = vpop.f32.mrf.mxu0
        %v3082 = vadd.f32 0.0, %v3081
        %v3083 = vpop.f32.mrf.mxu0
        %3084 = vmatprep.mubr.bf16.mxu0 0
        %3085 = vmatmul.mubr.bf16.gmra.mxu0 %v2977
        %v3086 = vpop.f32.mrf.mxu0
        %v3087 = vadd.f32 0.0, %v3086
        %v3088 = vpop.f32.mrf.mxu0
        %v3089 = vpop.f32.mrf.mxu0
        %v3090 = vadd.f32 0.0, %v3089
        %v3091 = vpop.f32.mrf.mxu0
        %3092 = vmatprep.mubr.bf16.mxu0 0
        %3093 = vmatmul.mubr.bf16.gmra.mxu0 %v2980
        %v3094 = vpop.f32.mrf.mxu0
        %v3095 = vadd.f32 0.0, %v3094
        %v3096 = vpop.f32.mrf.mxu0
        %v3097 = vpop.f32.mrf.mxu0
        %v3098 = vadd.f32 0.0, %v3097
        %v3099 = vpop.f32.mrf.mxu0
        %3100 = vmatprep.mubr.bf16.mxu0 0
        %3101 = vmatmul.mubr.bf16.gmra.mxu0 %v2983
        %v3102 = vpop.f32.mrf.mxu0
        %v3103 = vadd.f32 0.0, %v3102
        %v3104 = vpop.f32.mrf.mxu0
        %v3105 = vpop.f32.mrf.mxu0
        %v3106 = vadd.f32 0.0, %v3105
        %v3107 = vpop.f32.mrf.mxu0
        %3108 = vmatprep.mubr.bf16.mxu0 0
        %3109 = vmatmul.mubr.bf16.gmra.mxu0 %v2986
        %v3110 = vpop.f32.mrf.mxu0
        %v3111 = vadd.f32 0.0, %v3110
        %v3112 = vpop.f32.mrf.mxu0
        %v3113 = vpop.f32.mrf.mxu0
        %v3114 = vadd.f32 0.0, %v3113
        %v3115 = vpop.f32.mrf.mxu0
        %3116 = vmatprep.mubr.bf16.mxu0 0
        %3117 = vmatmul.mubr.bf16.gmra.mxu0 %v2989
        %v3118 = vpop.f32.mrf.mxu0
        %v3119 = vadd.f32 0.0, %v3118
        %v3120 = vpop.f32.mrf.mxu0
        %v3121 = vpop.f32.mrf.mxu0
        %v3122 = vadd.f32 0.0, %v3121
        %v3123 = vpop.f32.mrf.mxu0
        %3124 = vmatprep.mubr.bf16.mxu0 0
        %3125 = vmatmul.mubr.bf16.gmra.mxu0 %v2992
        %v3126 = vpop.f32.mrf.mxu0
        %v3127 = vadd.f32 0.0, %v3126
        %v3128 = vpop.f32.mrf.mxu0
        %v3129 = vpop.f32.mrf.mxu0
        %v3130 = vadd.f32 0.0, %v3129
        %v3131 = vpop.f32.mrf.mxu0
        %3132 = vmatprep.mubr.bf16.mxu0 0
        %3133 = vmatmul.mubr.bf16.gmra.mxu0 %v2995
        %v3134 = vpop.f32.mrf.mxu0
        %v3135 = vadd.f32 0.0, %v3134
        %v3136 = vpop.f32.mrf.mxu0
        %v3137 = vpop.f32.mrf.mxu0
        %v3138 = vadd.f32 0.0, %v3137
        %v3139 = vpop.f32.mrf.mxu0
        %3140 = vmatprep.mubr.bf16.mxu0 0
        %3141 = vmatmul.mubr.bf16.gmra.mxu0 %v2998
        %v3142 = vpop.f32.mrf.mxu0
        %v3143 = vadd.f32 0.0, %v3142
        %v3144 = vpop.f32.mrf.mxu0
        %v3145 = vpop.f32.mrf.mxu0
        %v3146 = vadd.f32 0.0, %v3145
        %v3147 = vpop.f32.mrf.mxu0
        %3148 = vmatprep.mubr.bf16.mxu0 0
        %3149 = vmatmul.mubr.bf16.gmra.mxu0 %v3001
        %v3150 = vpop.f32.mrf.mxu0
        %v3151 = vadd.f32 0.0, %v3150
        %v3152 = vpop.f32.mrf.mxu0
        %v3153 = vpop.f32.mrf.mxu0
        %v3154 = vadd.f32 0.0, %v3153
        %v3155 = vpop.f32.mrf.mxu0
        %3156 = vmatprep.mubr.bf16.mxu0 0
        %3157 = vmatmul.mubr.bf16.gmra.mxu0 %v3004
        %v3158 = vpop.f32.mrf.mxu0
        %v3159 = vadd.f32 0.0, %v3158
        %v3160 = vpop.f32.mrf.mxu0
        %v3161 = vpop.f32.mrf.mxu0
        %v3162 = vadd.f32 0.0, %v3161
        %v3163 = vpop.f32.mrf.mxu0
        %3164 = vmatprep.mubr.bf16.mxu0 0
        %3165 = vmatmul.mubr.bf16.gmra.mxu0 %v3007
        %v3166 = vpop.f32.mrf.mxu0
        %v3167 = vadd.f32 0.0, %v3166
        %v3168 = vpop.f32.mrf.mxu0
        %v3169 = vpop.f32.mrf.mxu0
        %v3170 = vadd.f32 0.0, %v3169
        %v3171 = vpop.f32.mrf.mxu0
        %3172 = vdwg.mxu0
        %v3173 = vadd.f32 %v2929, %v3047
        %v3174 = vadd.f32 %v2930, %v3050
        %v3175 = vadd.f32 %v2931, %v3055
        %v3176 = vadd.f32 %v2932, %v3058
        %v3177 = vadd.f32 %v2933, %v3063
        %v3178 = vadd.f32 %v2934, %v3066
        %v3179 = vadd.f32 %v2935, %v3071
        %v3180 = vadd.f32 %v2936, %v3074
        %v3181 = vadd.f32 %v2937, %v3079
        %v3182 = vadd.f32 %v2938, %v3082
        %v3183 = vadd.f32 %v2939, %v3087
        %v3184 = vadd.f32 %v2940, %v3090
        %v3185 = vadd.f32 %v2941, %v3095
        %v3186 = vadd.f32 %v2942, %v3098
        %v3187 = vadd.f32 %v2943, %v3103
        %v3188 = vadd.f32 %v2944, %v3106
        %v3189 = vadd.f32 %v2945, %v3111
        %v3190 = vadd.f32 %v2946, %v3114
        %v3191 = vadd.f32 %v2947, %v3119
        %v3192 = vadd.f32 %v2948, %v3122
        %v3193 = vadd.f32 %v2949, %v3127
        %v3194 = vadd.f32 %v2950, %v3130
        %v3195 = vadd.f32 %v2951, %v3135
        %v3196 = vadd.f32 %v2952, %v3138
        %v3197 = vadd.f32 %v2953, %v3143
        %v3198 = vadd.f32 %v2954, %v3146
        %v3199 = vadd.f32 %v2955, %v3151
        %v3200 = vadd.f32 %v2956, %v3154
        %v3201 = vadd.f32 %v2957, %v3159
        %v3202 = vadd.f32 %v2958, %v3162
        %v3203 = vadd.f32 %v2959, %v3167
        %v3204 = vadd.f32 %v2960, %v3170
        %v3205 = vld [vmem:[#allocation2 + $0x28] sm:$0xff]
        %v3206 = vld [vmem:[#allocation2 + $0x30] sm:$0xff]
        %v3207 = vld [vmem:[#allocation2 + $0x38] sm:$0xff]
        %v3208 = vld [vmem:[#allocation2 + $0x40] sm:$0xff]
        %v3209 = vld [vmem:[#allocation2 + $0x48] sm:$0xff]
        %v3210 = vld [vmem:[#allocation2 + $0x50] sm:$0xff]
        %v3211 = vld [vmem:[#allocation2 + $0x58] sm:$0xff]
        %v3212 = vld [vmem:[#allocation2 + $0x60] sm:$0xff]
        %v3213 = vld [vmem:[#allocation2 + $0x68] sm:$0xff]
        %v3214 = vld [vmem:[#allocation2 + $0x70] sm:$0xff]
        %v3215 = vld [vmem:[#allocation2 + $0x78] sm:$0xff]
        %v3216 = vld [vmem:[#allocation2 + $0x80] sm:$0xff]
        %v3217 = vld [vmem:[#allocation2 + $0x88] sm:$0xff]
        %v3218 = vld [vmem:[#allocation2 + $0x90] sm:$0xff]
        %v3219 = vld [vmem:[#allocation2 + $0x98] sm:$0xff]
        %v3220 = vld [vmem:[#allocation2 + $0xa0] sm:$0xff]
        %v3221 = vld [vmem:[#allocation2 + $0xa8] sm:$0xff]
        %v3222 = vld [vmem:[#allocation2 + $0xb0] sm:$0xff]
        %v3223 = vld [vmem:[#allocation2 + $0xb8] sm:$0xff]
        %v3224 = vld [vmem:[#allocation2 + $0xc0] sm:$0xff]
        %v3225 = vld [vmem:[#allocation2 + $0xc8] sm:$0xff]
        %v3226 = vld [vmem:[#allocation2 + $0xd0] sm:$0xff]
        %v3227 = vld [vmem:[#allocation2 + $0xd8] sm:$0xff]
        %v3228 = vld [vmem:[#allocation2 + $0xe0] sm:$0xff]
        %v3229 = vld [vmem:[#allocation2 + $0xe8] sm:$0xff]
        %v3230 = vld [vmem:[#allocation2 + $0xf0] sm:$0xff]
        %v3231 = vld [vmem:[#allocation2 + $0xf8] sm:$0xff]
        %v3232 = vld [vmem:[#allocation2 + $0x100] sm:$0xff]
        %v3233 = vld [vmem:[#allocation2 + $0x108] sm:$0xff]
        %v3234 = vld [vmem:[#allocation2 + $0x110] sm:$0xff]
        %v3235 = vld [vmem:[#allocation2 + $0x118] sm:$0xff]
        %v3236 = vld [vmem:[#allocation2 + $0x120] sm:$0xff]
        %v3237 = vld [vmem:[#allocation2 + $0x27] sm:$0xff]
        %v3238 = vld [vmem:[#allocation2 + $0x2f] sm:$0xff]
        %v3239 = vld [vmem:[#allocation2 + $0x37] sm:$0xff]
        %v3240 = vld [vmem:[#allocation2 + $0x3f] sm:$0xff]
        %v3241 = vld [vmem:[#allocation2 + $0x47] sm:$0xff]
        %v3242 = vld [vmem:[#allocation2 + $0x4f] sm:$0xff]
        %v3243 = vld [vmem:[#allocation2 + $0x57] sm:$0xff]
        %v3244 = vld [vmem:[#allocation2 + $0x5f] sm:$0xff]
        %v3245 = vld [vmem:[#allocation2 + $0x67] sm:$0xff]
        %v3246 = vld [vmem:[#allocation2 + $0x6f] sm:$0xff]
        %v3247 = vld [vmem:[#allocation2 + $0x77] sm:$0xff]
        %v3248 = vld [vmem:[#allocation2 + $0x7f] sm:$0xff]
        %v3249 = vld [vmem:[#allocation2 + $0x87] sm:$0xff]
        %v3250 = vld [vmem:[#allocation2 + $0x8f] sm:$0xff]
        %v3251 = vld [vmem:[#allocation2 + $0x97] sm:$0xff]
        %v3252 = vld [vmem:[#allocation2 + $0x9f] sm:$0xff]
        %v3253 = vld [vmem:[#allocation2 + $0xa7] sm:$0xff]
        %v3254 = vld [vmem:[#allocation2 + $0xaf] sm:$0xff]
        %v3255 = vld [vmem:[#allocation2 + $0xb7] sm:$0xff]
        %v3256 = vld [vmem:[#allocation2 + $0xbf] sm:$0xff]
        %v3257 = vld [vmem:[#allocation2 + $0xc7] sm:$0xff]
        %v3258 = vld [vmem:[#allocation2 + $0xcf] sm:$0xff]
        %v3259 = vld [vmem:[#allocation2 + $0xd7] sm:$0xff]
        %v3260 = vld [vmem:[#allocation2 + $0xdf] sm:$0xff]
        %v3261 = vld [vmem:[#allocation2 + $0xe7] sm:$0xff]
        %v3262 = vld [vmem:[#allocation2 + $0xef] sm:$0xff]
        %v3263 = vld [vmem:[#allocation2 + $0xf7] sm:$0xff]
        %v3264 = vld [vmem:[#allocation2 + $0xff] sm:$0xff]
        %v3265 = vld [vmem:[#allocation2 + $0x107] sm:$0xff]
        %v3266 = vld [vmem:[#allocation2 + $0x10f] sm:$0xff]
        %v3267 = vld [vmem:[#allocation2 + $0x117] sm:$0xff]
        %v3268 = vld [vmem:[#allocation2 + $0x11f] sm:$0xff]
        %v3269 = vld [vmem:[#allocation2 + $0x29] sm:$0xff]
        %v3270 = vld [vmem:[#allocation2 + $0x31] sm:$0xff]
        %v3271 = vld [vmem:[#allocation2 + $0x39] sm:$0xff]
        %v3272 = vld [vmem:[#allocation2 + $0x41] sm:$0xff]
        %v3273 = vld [vmem:[#allocation2 + $0x49] sm:$0xff]
        %v3274 = vld [vmem:[#allocation2 + $0x51] sm:$0xff]
        %v3275 = vld [vmem:[#allocation2 + $0x59] sm:$0xff]
        %v3276 = vld [vmem:[#allocation2 + $0x61] sm:$0xff]
        %v3277 = vld [vmem:[#allocation2 + $0x69] sm:$0xff]
        %v3278 = vld [vmem:[#allocation2 + $0x71] sm:$0xff]
        %v3279 = vld [vmem:[#allocation2 + $0x79] sm:$0xff]
        %v3280 = vld [vmem:[#allocation2 + $0x81] sm:$0xff]
        %v3281 = vld [vmem:[#allocation2 + $0x89] sm:$0xff]
        %v3282 = vld [vmem:[#allocation2 + $0x91] sm:$0xff]
        %v3283 = vld [vmem:[#allocation2 + $0x99] sm:$0xff]
        %v3284 = vld [vmem:[#allocation2 + $0xa1] sm:$0xff]
        %v3285 = vld [vmem:[#allocation2 + $0xa9] sm:$0xff]
        %v3286 = vld [vmem:[#allocation2 + $0xb1] sm:$0xff]
        %v3287 = vld [vmem:[#allocation2 + $0xb9] sm:$0xff]
        %v3288 = vld [vmem:[#allocation2 + $0xc1] sm:$0xff]
        %v3289 = vld [vmem:[#allocation2 + $0xc9] sm:$0xff]
        %v3290 = vld [vmem:[#allocation2 + $0xd1] sm:$0xff]
        %v3291 = vld [vmem:[#allocation2 + $0xd9] sm:$0xff]
        %v3292 = vld [vmem:[#allocation2 + $0xe1] sm:$0xff]
        %v3293 = vld [vmem:[#allocation2 + $0xe9] sm:$0xff]
        %v3294 = vld [vmem:[#allocation2 + $0xf1] sm:$0xff]
        %v3295 = vld [vmem:[#allocation2 + $0xf9] sm:$0xff]
        %v3296 = vld [vmem:[#allocation2 + $0x101] sm:$0xff]
        %v3297 = vld [vmem:[#allocation2 + $0x109] sm:$0xff]
        %v3298 = vld [vmem:[#allocation2 + $0x111] sm:$0xff]
        %v3299 = vld [vmem:[#allocation2 + $0x119] sm:$0xff]
        %v3300 = vld [vmem:[#allocation2 + $0x121] sm:$0xff]
        %v3301 = vsel %vm1429, %v3237, 0.0
        %v3302 = vsel %vm1430, %v3238, 0.0
        %v3303 = vsel %vm1431, %v3239, 0.0
        %v3304 = vsel %vm1432, %v3240, 0.0
        %v3305 = vsel %vm1433, %v3241, 0.0
        %v3306 = vsel %vm1434, %v3242, 0.0
        %v3307 = vsel %vm1435, %v3243, 0.0
        %v3308 = vsel %vm1436, %v3244, 0.0
        %v3309 = vsel %vm1437, %v3245, 0.0
        %v3310 = vsel %vm1438, %v3246, 0.0
        %v3311 = vsel %vm1439, %v3247, 0.0
        %v3312 = vsel %vm1440, %v3248, 0.0
        %v3313 = vsel %vm1441, %v3249, 0.0
        %v3314 = vsel %vm1442, %v3250, 0.0
        %v3315 = vsel %vm1443, %v3251, 0.0
        %v3316 = vsel %vm1444, %v3252, 0.0
        %v3317 = vsel %vm1445, %v3253, 0.0
        %v3318 = vsel %vm1446, %v3254, 0.0
        %v3319 = vsel %vm1447, %v3255, 0.0
        %v3320 = vsel %vm1448, %v3256, 0.0
        %v3321 = vsel %vm1449, %v3257, 0.0
        %v3322 = vsel %vm1450, %v3258, 0.0
        %v3323 = vsel %vm1451, %v3259, 0.0
        %v3324 = vsel %vm1452, %v3260, 0.0
        %v3325 = vsel %vm1453, %v3261, 0.0
        %v3326 = vsel %vm1454, %v3262, 0.0
        %v3327 = vsel %vm1455, %v3263, 0.0
        %v3328 = vsel %vm1456, %v3264, 0.0
        %v3329 = vsel %vm1457, %v3265, 0.0
        %v3330 = vsel %vm1458, %v3266, 0.0
        %v3331 = vsel %vm1459, %v3267, 0.0
        %v3332 = vsel %vm1460, %v3268, 0.0
        %v3333 = vpack.c.bf16 %v3302, %v3301
        %v3334 = vpack.c.bf16 %v3304, %v3303
        %v3335 = vpack.c.bf16 %v3306, %v3305
        %v3336 = vpack.c.bf16 %v3308, %v3307
        %v3337 = vpack.c.bf16 %v3310, %v3309
        %v3338 = vpack.c.bf16 %v3312, %v3311
        %v3339 = vpack.c.bf16 %v3314, %v3313
        %v3340 = vpack.c.bf16 %v3316, %v3315
        %v3341 = vpack.c.bf16 %v3318, %v3317
        %v3342 = vpack.c.bf16 %v3320, %v3319
        %v3343 = vpack.c.bf16 %v3322, %v3321
        %v3344 = vpack.c.bf16 %v3324, %v3323
        %v3345 = vpack.c.bf16 %v3326, %v3325
        %v3346 = vpack.c.bf16 %v3328, %v3327
        %v3347 = vpack.c.bf16 %v3330, %v3329
        %v3348 = vpack.c.bf16 %v3332, %v3331
        %v3349 = vsel %vm1541, %v3269, 0.0
        %v3350 = vsel %vm1542, %v3270, 0.0
        %v3351 = vsel %vm1543, %v3271, 0.0
        %v3352 = vsel %vm1544, %v3272, 0.0
        %v3353 = vsel %vm1545, %v3273, 0.0
        %v3354 = vsel %vm1546, %v3274, 0.0
        %v3355 = vsel %vm1547, %v3275, 0.0
        %v3356 = vsel %vm1548, %v3276, 0.0
        %v3357 = vsel %vm1549, %v3277, 0.0
        %v3358 = vsel %vm1550, %v3278, 0.0
        %v3359 = vsel %vm1551, %v3279, 0.0
        %v3360 = vsel %vm1552, %v3280, 0.0
        %v3361 = vsel %vm1553, %v3281, 0.0
        %v3362 = vsel %vm1554, %v3282, 0.0
        %v3363 = vsel %vm1555, %v3283, 0.0
        %v3364 = vsel %vm1556, %v3284, 0.0
        %v3365 = vsel %vm1557, %v3285, 0.0
        %v3366 = vsel %vm1558, %v3286, 0.0
        %v3367 = vsel %vm1559, %v3287, 0.0
        %v3368 = vsel %vm1560, %v3288, 0.0
        %v3369 = vsel %vm1561, %v3289, 0.0
        %v3370 = vsel %vm1562, %v3290, 0.0
        %v3371 = vsel %vm1563, %v3291, 0.0
        %v3372 = vsel %vm1564, %v3292, 0.0
        %v3373 = vsel %vm1565, %v3293, 0.0
        %v3374 = vsel %vm1566, %v3294, 0.0
        %v3375 = vsel %vm1567, %v3295, 0.0
        %v3376 = vsel %vm1568, %v3296, 0.0
        %v3377 = vsel %vm1569, %v3297, 0.0
        %v3378 = vsel %vm1570, %v3298, 0.0
        %v3379 = vsel %vm1571, %v3299, 0.0
        %v3380 = vsel %vm1572, %v3300, 0.0
        %v3381 = vpack.c.bf16 %v3350, %v3349
        %v3382 = vpack.c.bf16 %v3352, %v3351
        %v3383 = vpack.c.bf16 %v3354, %v3353
        %v3384 = vpack.c.bf16 %v3356, %v3355
        %v3385 = vpack.c.bf16 %v3358, %v3357
        %v3386 = vpack.c.bf16 %v3360, %v3359
        %v3387 = vpack.c.bf16 %v3362, %v3361
        %v3388 = vpack.c.bf16 %v3364, %v3363
        %v3389 = vpack.c.bf16 %v3366, %v3365
        %v3390 = vpack.c.bf16 %v3368, %v3367
        %v3391 = vpack.c.bf16 %v3370, %v3369
        %v3392 = vpack.c.bf16 %v3372, %v3371
        %v3393 = vpack.c.bf16 %v3374, %v3373
        %v3394 = vpack.c.bf16 %v3376, %v3375
        %v3395 = vpack.c.bf16 %v3378, %v3377
        %v3396 = vpack.c.bf16 %v3380, %v3379
        %v3397 = vpack.c.bf16 %v3206, %v3205
        %v3398 = vpack.c.bf16 %v3208, %v3207
        %v3399 = vpack.c.bf16 %v3210, %v3209
        %v3400 = vpack.c.bf16 %v3212, %v3211
        %v3401 = vpack.c.bf16 %v3214, %v3213
        %v3402 = vpack.c.bf16 %v3216, %v3215
        %v3403 = vpack.c.bf16 %v3218, %v3217
        %v3404 = vpack.c.bf16 %v3220, %v3219
        %v3405 = vpack.c.bf16 %v3222, %v3221
        %v3406 = vpack.c.bf16 %v3224, %v3223
        %v3407 = vpack.c.bf16 %v3226, %v3225
        %v3408 = vpack.c.bf16 %v3228, %v3227
        %v3409 = vpack.c.bf16 %v3230, %v3229
        %v3410 = vpack.c.bf16 %v3232, %v3231
        %v3411 = vpack.c.bf16 %v3234, %v3233
        %v3412 = vpack.c.bf16 %v3236, %v3235
        %s3413 = scalar_lea.vmem %s3, 24
        %v3414 = vld [vmem:[%s3413] sm:$0xf]
        %v3415 = vld [vmem:[%s3413 + $0x4] sm:$0xf]
        %v3416 = vld [vmem:[%s3413 + $0x8] sm:$0xf]
        %v3418 = vsel %vm781, %v3333, 0
        %v3421 = vsel %vm781, %v3334, 0
        %v3424 = vsel %vm781, %v3335, 0
        %v3427 = vsel %vm781, %v3336, 0
        %v3430 = vsel %vm781, %v3337, 0
        %v3433 = vsel %vm781, %v3338, 0
        %v3436 = vsel %vm781, %v3339, 0
        %v3439 = vsel %vm781, %v3340, 0
        %v3442 = vsel %vm781, %v3341, 0
        %v3445 = vsel %vm781, %v3342, 0
        %v3448 = vsel %vm781, %v3343, 0
        %v3451 = vsel %vm781, %v3344, 0
        %v3454 = vsel %vm781, %v3345, 0
        %v3457 = vsel %vm781, %v3346, 0
        %v3460 = vsel %vm781, %v3347, 0
        %v3463 = vsel %vm781, %v3348, 0
        %v3466 = vsel %vm1688, %v3414, 0
        %3468 = vmatprep.subr.bf16.mxu0 0
        %3469 = vmatpush1.bf16.msra.mxu0 0
        %3470 = vmatprep.subr.bf16.mxu0 0
        %3471 = vmatpush1.bf16.msra.mxu0 0
        %3472 = vmatprep.subr.bf16.mxu0 0
        %3473 = vmatpush1.bf16.msra.mxu0 0
        %3474 = vmatprep.subr.bf16.mxu0 0
        %3475 = vmatpush1.bf16.msra.mxu0 0
        %3476 = vmatprep.subr.bf16.mxu0 0
        %3477 = vmatpush1.bf16.msra.mxu0 0
        %3478 = vmatprep.subr.bf16.mxu0 0
        %3479 = vmatpush1.bf16.msra.mxu0 0
        %3480 = vmatprep.subr.bf16.mxu0 0
        %3481 = vmatpush1.bf16.msra.mxu0 0
        %3482 = vmatprep.subr.bf16.mxu0 0
        %3483 = vmatpush1.bf16.msra.mxu0 %v3466
        %3484 = vmatprep.subr.bf16.mxu0 0
        %3485 = vmatpush2.bf16.msra.mxu0 0
        %3486 = vmatprep.subr.bf16.mxu0 0
        %3487 = vmatpush2.bf16.msra.mxu0 0
        %3488 = vmatprep.subr.bf16.mxu0 0
        %3489 = vmatpush2.bf16.msra.mxu0 0
        %3490 = vmatprep.subr.bf16.mxu0 0
        %3491 = vmatpush2.bf16.msra.mxu0 0
        %3492 = vmatprep.subr.bf16.mxu0 0
        %3493 = vmatpush2.bf16.msra.mxu0 0
        %3494 = vmatprep.subr.bf16.mxu0 0
        %3495 = vmatpush2.bf16.msra.mxu0 0
        %3496 = vmatprep.subr.bf16.mxu0 0
        %3497 = vmatpush2.bf16.msra.mxu0 0
        %3498 = vmatprep.subr.bf16.mxu0 0
        %3499 = vmatpush2.bf16.msra.mxu0 0
        %3500 = vmatprep.mubr.bf16.mxu0 0
        %3501 = vmatmul.mubr.bf16.gmra.mxu0 %v3418
        %v3502 = vpop.f32.mrf.mxu0
        %v3503 = vadd.f32 0.0, %v3502
        %v3504 = vpop.f32.mrf.mxu0
        %v3505 = vpop.f32.mrf.mxu0
        %v3506 = vadd.f32 0.0, %v3505
        %v3507 = vpop.f32.mrf.mxu0
        %3508 = vmatprep.mubr.bf16.mxu0 0
        %3509 = vmatmul.mubr.bf16.gmra.mxu0 %v3421
        %v3510 = vpop.f32.mrf.mxu0
        %v3511 = vadd.f32 0.0, %v3510
        %v3512 = vpop.f32.mrf.mxu0
        %v3513 = vpop.f32.mrf.mxu0
        %v3514 = vadd.f32 0.0, %v3513
        %v3515 = vpop.f32.mrf.mxu0
        %3516 = vmatprep.mubr.bf16.mxu0 0
        %3517 = vmatmul.mubr.bf16.gmra.mxu0 %v3424
        %v3518 = vpop.f32.mrf.mxu0
        %v3519 = vadd.f32 0.0, %v3518
        %v3520 = vpop.f32.mrf.mxu0
        %v3521 = vpop.f32.mrf.mxu0
        %v3522 = vadd.f32 0.0, %v3521
        %v3523 = vpop.f32.mrf.mxu0
        %3524 = vmatprep.mubr.bf16.mxu0 0
        %3525 = vmatmul.mubr.bf16.gmra.mxu0 %v3427
        %v3526 = vpop.f32.mrf.mxu0
        %v3527 = vadd.f32 0.0, %v3526
        %v3528 = vpop.f32.mrf.mxu0
        %v3529 = vpop.f32.mrf.mxu0
        %v3530 = vadd.f32 0.0, %v3529
        %v3531 = vpop.f32.mrf.mxu0
        %3532 = vmatprep.mubr.bf16.mxu0 0
        %3533 = vmatmul.mubr.bf16.gmra.mxu0 %v3430
        %v3534 = vpop.f32.mrf.mxu0
        %v3535 = vadd.f32 0.0, %v3534
        %v3536 = vpop.f32.mrf.mxu0
        %v3537 = vpop.f32.mrf.mxu0
        %v3538 = vadd.f32 0.0, %v3537
        %v3539 = vpop.f32.mrf.mxu0
        %3540 = vmatprep.mubr.bf16.mxu0 0
        %3541 = vmatmul.mubr.bf16.gmra.mxu0 %v3433
        %v3542 = vpop.f32.mrf.mxu0
        %v3543 = vadd.f32 0.0, %v3542
        %v3544 = vpop.f32.mrf.mxu0
        %v3545 = vpop.f32.mrf.mxu0
        %v3546 = vadd.f32 0.0, %v3545
        %v3547 = vpop.f32.mrf.mxu0
        %3548 = vmatprep.mubr.bf16.mxu0 0
        %3549 = vmatmul.mubr.bf16.gmra.mxu0 %v3436
        %v3550 = vpop.f32.mrf.mxu0
        %v3551 = vadd.f32 0.0, %v3550
        %v3552 = vpop.f32.mrf.mxu0
        %v3553 = vpop.f32.mrf.mxu0
        %v3554 = vadd.f32 0.0, %v3553
        %v3555 = vpop.f32.mrf.mxu0
        %3556 = vmatprep.mubr.bf16.mxu0 0
        %3557 = vmatmul.mubr.bf16.gmra.mxu0 %v3439
        %v3558 = vpop.f32.mrf.mxu0
        %v3559 = vadd.f32 0.0, %v3558
        %v3560 = vpop.f32.mrf.mxu0
        %v3561 = vpop.f32.mrf.mxu0
        %v3562 = vadd.f32 0.0, %v3561
        %v3563 = vpop.f32.mrf.mxu0
        %3564 = vmatprep.mubr.bf16.mxu0 0
        %3565 = vmatmul.mubr.bf16.gmra.mxu0 %v3442
        %v3566 = vpop.f32.mrf.mxu0
        %v3567 = vadd.f32 0.0, %v3566
        %v3568 = vpop.f32.mrf.mxu0
        %v3569 = vpop.f32.mrf.mxu0
        %v3570 = vadd.f32 0.0, %v3569
        %v3571 = vpop.f32.mrf.mxu0
        %3572 = vmatprep.mubr.bf16.mxu0 0
        %3573 = vmatmul.mubr.bf16.gmra.mxu0 %v3445
        %v3574 = vpop.f32.mrf.mxu0
        %v3575 = vadd.f32 0.0, %v3574
        %v3576 = vpop.f32.mrf.mxu0
        %v3577 = vpop.f32.mrf.mxu0
        %v3578 = vadd.f32 0.0, %v3577
        %v3579 = vpop.f32.mrf.mxu0
        %3580 = vmatprep.mubr.bf16.mxu0 0
        %3581 = vmatmul.mubr.bf16.gmra.mxu0 %v3448
        %v3582 = vpop.f32.mrf.mxu0
        %v3583 = vadd.f32 0.0, %v3582
        %v3584 = vpop.f32.mrf.mxu0
        %v3585 = vpop.f32.mrf.mxu0
        %v3586 = vadd.f32 0.0, %v3585
        %v3587 = vpop.f32.mrf.mxu0
        %3588 = vmatprep.mubr.bf16.mxu0 0
        %3589 = vmatmul.mubr.bf16.gmra.mxu0 %v3451
        %v3590 = vpop.f32.mrf.mxu0
        %v3591 = vadd.f32 0.0, %v3590
        %v3592 = vpop.f32.mrf.mxu0
        %v3593 = vpop.f32.mrf.mxu0
        %v3594 = vadd.f32 0.0, %v3593
        %v3595 = vpop.f32.mrf.mxu0
        %3596 = vmatprep.mubr.bf16.mxu0 0
        %3597 = vmatmul.mubr.bf16.gmra.mxu0 %v3454
        %v3598 = vpop.f32.mrf.mxu0
        %v3599 = vadd.f32 0.0, %v3598
        %v3600 = vpop.f32.mrf.mxu0
        %v3601 = vpop.f32.mrf.mxu0
        %v3602 = vadd.f32 0.0, %v3601
        %v3603 = vpop.f32.mrf.mxu0
        %3604 = vmatprep.mubr.bf16.mxu0 0
        %3605 = vmatmul.mubr.bf16.gmra.mxu0 %v3457
        %v3606 = vpop.f32.mrf.mxu0
        %v3607 = vadd.f32 0.0, %v3606
        %v3608 = vpop.f32.mrf.mxu0
        %v3609 = vpop.f32.mrf.mxu0
        %v3610 = vadd.f32 0.0, %v3609
        %v3611 = vpop.f32.mrf.mxu0
        %3612 = vmatprep.mubr.bf16.mxu0 0
        %3613 = vmatmul.mubr.bf16.gmra.mxu0 %v3460
        %v3614 = vpop.f32.mrf.mxu0
        %v3615 = vadd.f32 0.0, %v3614
        %v3616 = vpop.f32.mrf.mxu0
        %v3617 = vpop.f32.mrf.mxu0
        %v3618 = vadd.f32 0.0, %v3617
        %v3619 = vpop.f32.mrf.mxu0
        %3620 = vmatprep.mubr.bf16.mxu0 0
        %3621 = vmatmul.mubr.bf16.gmra.mxu0 %v3463
        %v3622 = vpop.f32.mrf.mxu0
        %v3623 = vadd.f32 0.0, %v3622
        %v3624 = vpop.f32.mrf.mxu0
        %v3625 = vpop.f32.mrf.mxu0
        %v3626 = vadd.f32 0.0, %v3625
        %v3627 = vpop.f32.mrf.mxu0
        %3628 = vdwg.mxu0
        %v3629 = vadd.f32 %v3173, %v3503
        %v3630 = vadd.f32 %v3174, %v3506
        %v3631 = vadd.f32 %v3175, %v3511
        %v3632 = vadd.f32 %v3176, %v3514
        %v3633 = vadd.f32 %v3177, %v3519
        %v3634 = vadd.f32 %v3178, %v3522
        %v3635 = vadd.f32 %v3179, %v3527
        %v3636 = vadd.f32 %v3180, %v3530
        %v3637 = vadd.f32 %v3181, %v3535
        %v3638 = vadd.f32 %v3182, %v3538
        %v3639 = vadd.f32 %v3183, %v3543
        %v3640 = vadd.f32 %v3184, %v3546
        %v3641 = vadd.f32 %v3185, %v3551
        %v3642 = vadd.f32 %v3186, %v3554
        %v3643 = vadd.f32 %v3187, %v3559
        %v3644 = vadd.f32 %v3188, %v3562
        %v3645 = vadd.f32 %v3189, %v3567
        %v3646 = vadd.f32 %v3190, %v3570
        %v3647 = vadd.f32 %v3191, %v3575
        %v3648 = vadd.f32 %v3192, %v3578
        %v3649 = vadd.f32 %v3193, %v3583
        %v3650 = vadd.f32 %v3194, %v3586
        %v3651 = vadd.f32 %v3195, %v3591
        %v3652 = vadd.f32 %v3196, %v3594
        %v3653 = vadd.f32 %v3197, %v3599
        %v3654 = vadd.f32 %v3198, %v3602
        %v3655 = vadd.f32 %v3199, %v3607
        %v3656 = vadd.f32 %v3200, %v3610
        %v3657 = vadd.f32 %v3201, %v3615
        %v3658 = vadd.f32 %v3202, %v3618
        %v3659 = vadd.f32 %v3203, %v3623
        %v3660 = vadd.f32 %v3204, %v3626
        %v3662 = vsel %vm781, %v3397, 0
        %v3665 = vsel %vm781, %v3398, 0
        %v3668 = vsel %vm781, %v3399, 0
        %v3671 = vsel %vm781, %v3400, 0
        %v3674 = vsel %vm781, %v3401, 0
        %v3677 = vsel %vm781, %v3402, 0
        %v3680 = vsel %vm781, %v3403, 0
        %v3683 = vsel %vm781, %v3404, 0
        %v3686 = vsel %vm781, %v3405, 0
        %v3689 = vsel %vm781, %v3406, 0
        %v3692 = vsel %vm781, %v3407, 0
        %v3695 = vsel %vm781, %v3408, 0
        %v3698 = vsel %vm781, %v3409, 0
        %v3701 = vsel %vm781, %v3410, 0
        %v3704 = vsel %vm781, %v3411, 0
        %v3707 = vsel %vm781, %v3412, 0
        %v3710 = vsel %vm1688, %v3415, 0
        %3712 = vmatprep.subr.bf16.mxu0 0
        %3713 = vmatpush1.bf16.msra.mxu0 0
        %3714 = vmatprep.subr.bf16.mxu0 0
        %3715 = vmatpush1.bf16.msra.mxu0 0
        %3716 = vmatprep.subr.bf16.mxu0 0
        %3717 = vmatpush1.bf16.msra.mxu0 0
        %3718 = vmatprep.subr.bf16.mxu0 0
        %3719 = vmatpush1.bf16.msra.mxu0 0
        %3720 = vmatprep.subr.bf16.mxu0 0
        %3721 = vmatpush1.bf16.msra.mxu0 0
        %3722 = vmatprep.subr.bf16.mxu0 0
        %3723 = vmatpush1.bf16.msra.mxu0 0
        %3724 = vmatprep.subr.bf16.mxu0 0
        %3725 = vmatpush1.bf16.msra.mxu0 0
        %3726 = vmatprep.subr.bf16.mxu0 0
        %3727 = vmatpush1.bf16.msra.mxu0 %v3710
        %3728 = vmatprep.subr.bf16.mxu0 0
        %3729 = vmatpush2.bf16.msra.mxu0 0
        %3730 = vmatprep.subr.bf16.mxu0 0
        %3731 = vmatpush2.bf16.msra.mxu0 0
        %3732 = vmatprep.subr.bf16.mxu0 0
        %3733 = vmatpush2.bf16.msra.mxu0 0
        %3734 = vmatprep.subr.bf16.mxu0 0
        %3735 = vmatpush2.bf16.msra.mxu0 0
        %3736 = vmatprep.subr.bf16.mxu0 0
        %3737 = vmatpush2.bf16.msra.mxu0 0
        %3738 = vmatprep.subr.bf16.mxu0 0
        %3739 = vmatpush2.bf16.msra.mxu0 0
        %3740 = vmatprep.subr.bf16.mxu0 0
        %3741 = vmatpush2.bf16.msra.mxu0 0
        %3742 = vmatprep.subr.bf16.mxu0 0
        %3743 = vmatpush2.bf16.msra.mxu0 0
        %3744 = vmatprep.mubr.bf16.mxu0 0
        %3745 = vmatmul.mubr.bf16.gmra.mxu0 %v3662
        %v3746 = vpop.f32.mrf.mxu0
        %v3747 = vadd.f32 0.0, %v3746
        %v3748 = vpop.f32.mrf.mxu0
        %v3749 = vpop.f32.mrf.mxu0
        %v3750 = vadd.f32 0.0, %v3749
        %v3751 = vpop.f32.mrf.mxu0
        %3752 = vmatprep.mubr.bf16.mxu0 0
        %3753 = vmatmul.mubr.bf16.gmra.mxu0 %v3665
        %v3754 = vpop.f32.mrf.mxu0
        %v3755 = vadd.f32 0.0, %v3754
        %v3756 = vpop.f32.mrf.mxu0
        %v3757 = vpop.f32.mrf.mxu0
        %v3758 = vadd.f32 0.0, %v3757
        %v3759 = vpop.f32.mrf.mxu0
        %3760 = vmatprep.mubr.bf16.mxu0 0
        %3761 = vmatmul.mubr.bf16.gmra.mxu0 %v3668
        %v3762 = vpop.f32.mrf.mxu0
        %v3763 = vadd.f32 0.0, %v3762
        %v3764 = vpop.f32.mrf.mxu0
        %v3765 = vpop.f32.mrf.mxu0
        %v3766 = vadd.f32 0.0, %v3765
        %v3767 = vpop.f32.mrf.mxu0
        %3768 = vmatprep.mubr.bf16.mxu0 0
        %3769 = vmatmul.mubr.bf16.gmra.mxu0 %v3671
        %v3770 = vpop.f32.mrf.mxu0
        %v3771 = vadd.f32 0.0, %v3770
        %v3772 = vpop.f32.mrf.mxu0
        %v3773 = vpop.f32.mrf.mxu0
        %v3774 = vadd.f32 0.0, %v3773
        %v3775 = vpop.f32.mrf.mxu0
        %3776 = vmatprep.mubr.bf16.mxu0 0
        %3777 = vmatmul.mubr.bf16.gmra.mxu0 %v3674
        %v3778 = vpop.f32.mrf.mxu0
        %v3779 = vadd.f32 0.0, %v3778
        %v3780 = vpop.f32.mrf.mxu0
        %v3781 = vpop.f32.mrf.mxu0
        %v3782 = vadd.f32 0.0, %v3781
        %v3783 = vpop.f32.mrf.mxu0
        %3784 = vmatprep.mubr.bf16.mxu0 0
        %3785 = vmatmul.mubr.bf16.gmra.mxu0 %v3677
        %v3786 = vpop.f32.mrf.mxu0
        %v3787 = vadd.f32 0.0, %v3786
        %v3788 = vpop.f32.mrf.mxu0
        %v3789 = vpop.f32.mrf.mxu0
        %v3790 = vadd.f32 0.0, %v3789
        %v3791 = vpop.f32.mrf.mxu0
        %3792 = vmatprep.mubr.bf16.mxu0 0
        %3793 = vmatmul.mubr.bf16.gmra.mxu0 %v3680
        %v3794 = vpop.f32.mrf.mxu0
        %v3795 = vadd.f32 0.0, %v3794
        %v3796 = vpop.f32.mrf.mxu0
        %v3797 = vpop.f32.mrf.mxu0
        %v3798 = vadd.f32 0.0, %v3797
        %v3799 = vpop.f32.mrf.mxu0
        %3800 = vmatprep.mubr.bf16.mxu0 0
        %3801 = vmatmul.mubr.bf16.gmra.mxu0 %v3683
        %v3802 = vpop.f32.mrf.mxu0
        %v3803 = vadd.f32 0.0, %v3802
        %v3804 = vpop.f32.mrf.mxu0
        %v3805 = vpop.f32.mrf.mxu0
        %v3806 = vadd.f32 0.0, %v3805
        %v3807 = vpop.f32.mrf.mxu0
        %3808 = vmatprep.mubr.bf16.mxu0 0
        %3809 = vmatmul.mubr.bf16.gmra.mxu0 %v3686
        %v3810 = vpop.f32.mrf.mxu0
        %v3811 = vadd.f32 0.0, %v3810
        %v3812 = vpop.f32.mrf.mxu0
        %v3813 = vpop.f32.mrf.mxu0
        %v3814 = vadd.f32 0.0, %v3813
        %v3815 = vpop.f32.mrf.mxu0
        %3816 = vmatprep.mubr.bf16.mxu0 0
        %3817 = vmatmul.mubr.bf16.gmra.mxu0 %v3689
        %v3818 = vpop.f32.mrf.mxu0
        %v3819 = vadd.f32 0.0, %v3818
        %v3820 = vpop.f32.mrf.mxu0
        %v3821 = vpop.f32.mrf.mxu0
        %v3822 = vadd.f32 0.0, %v3821
        %v3823 = vpop.f32.mrf.mxu0
        %3824 = vmatprep.mubr.bf16.mxu0 0
        %3825 = vmatmul.mubr.bf16.gmra.mxu0 %v3692
        %v3826 = vpop.f32.mrf.mxu0
        %v3827 = vadd.f32 0.0, %v3826
        %v3828 = vpop.f32.mrf.mxu0
        %v3829 = vpop.f32.mrf.mxu0
        %v3830 = vadd.f32 0.0, %v3829
        %v3831 = vpop.f32.mrf.mxu0
        %3832 = vmatprep.mubr.bf16.mxu0 0
        %3833 = vmatmul.mubr.bf16.gmra.mxu0 %v3695
        %v3834 = vpop.f32.mrf.mxu0
        %v3835 = vadd.f32 0.0, %v3834
        %v3836 = vpop.f32.mrf.mxu0
        %v3837 = vpop.f32.mrf.mxu0
        %v3838 = vadd.f32 0.0, %v3837
        %v3839 = vpop.f32.mrf.mxu0
        %3840 = vmatprep.mubr.bf16.mxu0 0
        %3841 = vmatmul.mubr.bf16.gmra.mxu0 %v3698
        %v3842 = vpop.f32.mrf.mxu0
        %v3843 = vadd.f32 0.0, %v3842
        %v3844 = vpop.f32.mrf.mxu0
        %v3845 = vpop.f32.mrf.mxu0
        %v3846 = vadd.f32 0.0, %v3845
        %v3847 = vpop.f32.mrf.mxu0
        %3848 = vmatprep.mubr.bf16.mxu0 0
        %3849 = vmatmul.mubr.bf16.gmra.mxu0 %v3701
        %v3850 = vpop.f32.mrf.mxu0
        %v3851 = vadd.f32 0.0, %v3850
        %v3852 = vpop.f32.mrf.mxu0
        %v3853 = vpop.f32.mrf.mxu0
        %v3854 = vadd.f32 0.0, %v3853
        %v3855 = vpop.f32.mrf.mxu0
        %3856 = vmatprep.mubr.bf16.mxu0 0
        %3857 = vmatmul.mubr.bf16.gmra.mxu0 %v3704
        %v3858 = vpop.f32.mrf.mxu0
        %v3859 = vadd.f32 0.0, %v3858
        %v3860 = vpop.f32.mrf.mxu0
        %v3861 = vpop.f32.mrf.mxu0
        %v3862 = vadd.f32 0.0, %v3861
        %v3863 = vpop.f32.mrf.mxu0
        %3864 = vmatprep.mubr.bf16.mxu0 0
        %3865 = vmatmul.mubr.bf16.gmra.mxu0 %v3707
        %v3866 = vpop.f32.mrf.mxu0
        %v3867 = vadd.f32 0.0, %v3866
        %v3868 = vpop.f32.mrf.mxu0
        %v3869 = vpop.f32.mrf.mxu0
        %v3870 = vadd.f32 0.0, %v3869
        %v3871 = vpop.f32.mrf.mxu0
        %3872 = vdwg.mxu0
        %v3873 = vadd.f32 %v3629, %v3747
        %v3874 = vadd.f32 %v3630, %v3750
        %v3875 = vadd.f32 %v3631, %v3755
        %v3876 = vadd.f32 %v3632, %v3758
        %v3877 = vadd.f32 %v3633, %v3763
        %v3878 = vadd.f32 %v3634, %v3766
        %v3879 = vadd.f32 %v3635, %v3771
        %v3880 = vadd.f32 %v3636, %v3774
        %v3881 = vadd.f32 %v3637, %v3779
        %v3882 = vadd.f32 %v3638, %v3782
        %v3883 = vadd.f32 %v3639, %v3787
        %v3884 = vadd.f32 %v3640, %v3790
        %v3885 = vadd.f32 %v3641, %v3795
        %v3886 = vadd.f32 %v3642, %v3798
        %v3887 = vadd.f32 %v3643, %v3803
        %v3888 = vadd.f32 %v3644, %v3806
        %v3889 = vadd.f32 %v3645, %v3811
        %v3890 = vadd.f32 %v3646, %v3814
        %v3891 = vadd.f32 %v3647, %v3819
        %v3892 = vadd.f32 %v3648, %v3822
        %v3893 = vadd.f32 %v3649, %v3827
        %v3894 = vadd.f32 %v3650, %v3830
        %v3895 = vadd.f32 %v3651, %v3835
        %v3896 = vadd.f32 %v3652, %v3838
        %v3897 = vadd.f32 %v3653, %v3843
        %v3898 = vadd.f32 %v3654, %v3846
        %v3899 = vadd.f32 %v3655, %v3851
        %v3900 = vadd.f32 %v3656, %v3854
        %v3901 = vadd.f32 %v3657, %v3859
        %v3902 = vadd.f32 %v3658, %v3862
        %v3903 = vadd.f32 %v3659, %v3867
        %v3904 = vadd.f32 %v3660, %v3870
        %v3906 = vsel %vm781, %v3381, 0
        %v3909 = vsel %vm781, %v3382, 0
        %v3912 = vsel %vm781, %v3383, 0
        %v3915 = vsel %vm781, %v3384, 0
        %v3918 = vsel %vm781, %v3385, 0
        %v3921 = vsel %vm781, %v3386, 0
        %v3924 = vsel %vm781, %v3387, 0
        %v3927 = vsel %vm781, %v3388, 0
        %v3930 = vsel %vm781, %v3389, 0
        %v3933 = vsel %vm781, %v3390, 0
        %v3936 = vsel %vm781, %v3391, 0
        %v3939 = vsel %vm781, %v3392, 0
        %v3942 = vsel %vm781, %v3393, 0
        %v3945 = vsel %vm781, %v3394, 0
        %v3948 = vsel %vm781, %v3395, 0
        %v3951 = vsel %vm781, %v3396, 0
        %v3954 = vsel %vm1688, %v3416, 0
        %3956 = vmatprep.subr.bf16.mxu0 0
        %3957 = vmatpush1.bf16.msra.mxu0 0
        %3958 = vmatprep.subr.bf16.mxu0 0
        %3959 = vmatpush1.bf16.msra.mxu0 0
        %3960 = vmatprep.subr.bf16.mxu0 0
        %3961 = vmatpush1.bf16.msra.mxu0 0
        %3962 = vmatprep.subr.bf16.mxu0 0
        %3963 = vmatpush1.bf16.msra.mxu0 0
        %3964 = vmatprep.subr.bf16.mxu0 0
        %3965 = vmatpush1.bf16.msra.mxu0 0
        %3966 = vmatprep.subr.bf16.mxu0 0
        %3967 = vmatpush1.bf16.msra.mxu0 0
        %3968 = vmatprep.subr.bf16.mxu0 0
        %3969 = vmatpush1.bf16.msra.mxu0 0
        %3970 = vmatprep.subr.bf16.mxu0 0
        %3971 = vmatpush1.bf16.msra.mxu0 %v3954
        %3972 = vmatprep.subr.bf16.mxu0 0
        %3973 = vmatpush2.bf16.msra.mxu0 0
        %3974 = vmatprep.subr.bf16.mxu0 0
        %3975 = vmatpush2.bf16.msra.mxu0 0
        %3976 = vmatprep.subr.bf16.mxu0 0
        %3977 = vmatpush2.bf16.msra.mxu0 0
        %3978 = vmatprep.subr.bf16.mxu0 0
        %3979 = vmatpush2.bf16.msra.mxu0 0
        %3980 = vmatprep.subr.bf16.mxu0 0
        %3981 = vmatpush2.bf16.msra.mxu0 0
        %3982 = vmatprep.subr.bf16.mxu0 0
        %3983 = vmatpush2.bf16.msra.mxu0 0
        %3984 = vmatprep.subr.bf16.mxu0 0
        %3985 = vmatpush2.bf16.msra.mxu0 0
        %3986 = vmatprep.subr.bf16.mxu0 0
        %3987 = vmatpush2.bf16.msra.mxu0 0
        %3988 = vmatprep.mubr.bf16.mxu0 0
        %3989 = vmatmul.mubr.bf16.gmra.mxu0 %v3906
        %v3990 = vpop.f32.mrf.mxu0
        %v3991 = vadd.f32 0.0, %v3990
        %v3992 = vpop.f32.mrf.mxu0
        %v3993 = vpop.f32.mrf.mxu0
        %v3994 = vadd.f32 0.0, %v3993
        %v3995 = vpop.f32.mrf.mxu0
        %3996 = vmatprep.mubr.bf16.mxu0 0
        %3997 = vmatmul.mubr.bf16.gmra.mxu0 %v3909
        %v3998 = vpop.f32.mrf.mxu0
        %v3999 = vadd.f32 0.0, %v3998
        %v4000 = vpop.f32.mrf.mxu0
        %v4001 = vpop.f32.mrf.mxu0
        %v4002 = vadd.f32 0.0, %v4001
        %v4003 = vpop.f32.mrf.mxu0
        %4004 = vmatprep.mubr.bf16.mxu0 0
        %4005 = vmatmul.mubr.bf16.gmra.mxu0 %v3912
        %v4006 = vpop.f32.mrf.mxu0
        %v4007 = vadd.f32 0.0, %v4006
        %v4008 = vpop.f32.mrf.mxu0
        %v4009 = vpop.f32.mrf.mxu0
        %v4010 = vadd.f32 0.0, %v4009
        %v4011 = vpop.f32.mrf.mxu0
        %4012 = vmatprep.mubr.bf16.mxu0 0
        %4013 = vmatmul.mubr.bf16.gmra.mxu0 %v3915
        %v4014 = vpop.f32.mrf.mxu0
        %v4015 = vadd.f32 0.0, %v4014
        %v4016 = vpop.f32.mrf.mxu0
        %v4017 = vpop.f32.mrf.mxu0
        %v4018 = vadd.f32 0.0, %v4017
        %v4019 = vpop.f32.mrf.mxu0
        %4020 = vmatprep.mubr.bf16.mxu0 0
        %4021 = vmatmul.mubr.bf16.gmra.mxu0 %v3918
        %v4022 = vpop.f32.mrf.mxu0
        %v4023 = vadd.f32 0.0, %v4022
        %v4024 = vpop.f32.mrf.mxu0
        %v4025 = vpop.f32.mrf.mxu0
        %v4026 = vadd.f32 0.0, %v4025
        %v4027 = vpop.f32.mrf.mxu0
        %4028 = vmatprep.mubr.bf16.mxu0 0
        %4029 = vmatmul.mubr.bf16.gmra.mxu0 %v3921
        %v4030 = vpop.f32.mrf.mxu0
        %v4031 = vadd.f32 0.0, %v4030
        %v4032 = vpop.f32.mrf.mxu0
        %v4033 = vpop.f32.mrf.mxu0
        %v4034 = vadd.f32 0.0, %v4033
        %v4035 = vpop.f32.mrf.mxu0
        %4036 = vmatprep.mubr.bf16.mxu0 0
        %4037 = vmatmul.mubr.bf16.gmra.mxu0 %v3924
        %v4038 = vpop.f32.mrf.mxu0
        %v4039 = vadd.f32 0.0, %v4038
        %v4040 = vpop.f32.mrf.mxu0
        %v4041 = vpop.f32.mrf.mxu0
        %v4042 = vadd.f32 0.0, %v4041
        %v4043 = vpop.f32.mrf.mxu0
        %4044 = vmatprep.mubr.bf16.mxu0 0
        %4045 = vmatmul.mubr.bf16.gmra.mxu0 %v3927
        %v4046 = vpop.f32.mrf.mxu0
        %v4047 = vadd.f32 0.0, %v4046
        %v4048 = vpop.f32.mrf.mxu0
        %v4049 = vpop.f32.mrf.mxu0
        %v4050 = vadd.f32 0.0, %v4049
        %v4051 = vpop.f32.mrf.mxu0
        %4052 = vmatprep.mubr.bf16.mxu0 0
        %4053 = vmatmul.mubr.bf16.gmra.mxu0 %v3930
        %v4054 = vpop.f32.mrf.mxu0
        %v4055 = vadd.f32 0.0, %v4054
        %v4056 = vpop.f32.mrf.mxu0
        %v4057 = vpop.f32.mrf.mxu0
        %v4058 = vadd.f32 0.0, %v4057
        %v4059 = vpop.f32.mrf.mxu0
        %4060 = vmatprep.mubr.bf16.mxu0 0
        %4061 = vmatmul.mubr.bf16.gmra.mxu0 %v3933
        %v4062 = vpop.f32.mrf.mxu0
        %v4063 = vadd.f32 0.0, %v4062
        %v4064 = vpop.f32.mrf.mxu0
        %v4065 = vpop.f32.mrf.mxu0
        %v4066 = vadd.f32 0.0, %v4065
        %v4067 = vpop.f32.mrf.mxu0
        %4068 = vmatprep.mubr.bf16.mxu0 0
        %4069 = vmatmul.mubr.bf16.gmra.mxu0 %v3936
        %v4070 = vpop.f32.mrf.mxu0
        %v4071 = vadd.f32 0.0, %v4070
        %v4072 = vpop.f32.mrf.mxu0
        %v4073 = vpop.f32.mrf.mxu0
        %v4074 = vadd.f32 0.0, %v4073
        %v4075 = vpop.f32.mrf.mxu0
        %4076 = vmatprep.mubr.bf16.mxu0 0
        %4077 = vmatmul.mubr.bf16.gmra.mxu0 %v3939
        %v4078 = vpop.f32.mrf.mxu0
        %v4079 = vadd.f32 0.0, %v4078
        %v4080 = vpop.f32.mrf.mxu0
        %v4081 = vpop.f32.mrf.mxu0
        %v4082 = vadd.f32 0.0, %v4081
        %v4083 = vpop.f32.mrf.mxu0
        %4084 = vmatprep.mubr.bf16.mxu0 0
        %4085 = vmatmul.mubr.bf16.gmra.mxu0 %v3942
        %v4086 = vpop.f32.mrf.mxu0
        %v4087 = vadd.f32 0.0, %v4086
        %v4088 = vpop.f32.mrf.mxu0
        %v4089 = vpop.f32.mrf.mxu0
        %v4090 = vadd.f32 0.0, %v4089
        %v4091 = vpop.f32.mrf.mxu0
        %4092 = vmatprep.mubr.bf16.mxu0 0
        %4093 = vmatmul.mubr.bf16.gmra.mxu0 %v3945
        %v4094 = vpop.f32.mrf.mxu0
        %v4095 = vadd.f32 0.0, %v4094
        %v4096 = vpop.f32.mrf.mxu0
        %v4097 = vpop.f32.mrf.mxu0
        %v4098 = vadd.f32 0.0, %v4097
        %v4099 = vpop.f32.mrf.mxu0
        %4100 = vmatprep.mubr.bf16.mxu0 0
        %4101 = vmatmul.mubr.bf16.gmra.mxu0 %v3948
        %v4102 = vpop.f32.mrf.mxu0
        %v4103 = vadd.f32 0.0, %v4102
        %v4104 = vpop.f32.mrf.mxu0
        %v4105 = vpop.f32.mrf.mxu0
        %v4106 = vadd.f32 0.0, %v4105
        %v4107 = vpop.f32.mrf.mxu0
        %4108 = vmatprep.mubr.bf16.mxu0 0
        %4109 = vmatmul.mubr.bf16.gmra.mxu0 %v3951
        %v4110 = vpop.f32.mrf.mxu0
        %v4111 = vadd.f32 0.0, %v4110
        %v4112 = vpop.f32.mrf.mxu0
        %v4113 = vpop.f32.mrf.mxu0
        %v4114 = vadd.f32 0.0, %v4113
        %v4115 = vpop.f32.mrf.mxu0
        %4116 = vdwg.mxu0
        %v4117 = vadd.f32 %v3873, %v3991
        %v4118 = vadd.f32 %v3874, %v3994
        %v4119 = vadd.f32 %v3875, %v3999
        %v4120 = vadd.f32 %v3876, %v4002
        %v4121 = vadd.f32 %v3877, %v4007
        %v4122 = vadd.f32 %v3878, %v4010
        %v4123 = vadd.f32 %v3879, %v4015
        %v4124 = vadd.f32 %v3880, %v4018
        %v4125 = vadd.f32 %v3881, %v4023
        %v4126 = vadd.f32 %v3882, %v4026
        %v4127 = vadd.f32 %v3883, %v4031
        %v4128 = vadd.f32 %v3884, %v4034
        %v4129 = vadd.f32 %v3885, %v4039
        %v4130 = vadd.f32 %v3886, %v4042
        %v4131 = vadd.f32 %v3887, %v4047
        %v4132 = vadd.f32 %v3888, %v4050
        %v4133 = vadd.f32 %v3889, %v4055
        %v4134 = vadd.f32 %v3890, %v4058
        %v4135 = vadd.f32 %v3891, %v4063
        %v4136 = vadd.f32 %v3892, %v4066
        %v4137 = vadd.f32 %v3893, %v4071
        %v4138 = vadd.f32 %v3894, %v4074
        %v4139 = vadd.f32 %v3895, %v4079
        %v4140 = vadd.f32 %v3896, %v4082
        %v4141 = vadd.f32 %v3897, %v4087
        %v4142 = vadd.f32 %v3898, %v4090
        %v4143 = vadd.f32 %v3899, %v4095
        %v4144 = vadd.f32 %v3900, %v4098
        %v4145 = vadd.f32 %v3901, %v4103
        %v4146 = vadd.f32 %v3902, %v4106
        %v4147 = vadd.f32 %v3903, %v4111
        %v4148 = vadd.f32 %v3904, %v4114
        %v4149 = vld [vmem:[%s4] sm:$0x1]
        %v4151 = vlaneseq
        %v4152 = vshrl.u32 %v4151, 7
        %v4153 = vsub.s32 0, %v4152
        %v4154 = vrot.slane %v4149, %v4153
        %v4156 = vadd.f32 %v4117, %v4154
        %v4157 = vadd.f32 %v4118, %v4154
        %v4158 = vadd.f32 %v4119, %v4154
        %v4159 = vadd.f32 %v4120, %v4154
        %v4160 = vadd.f32 %v4121, %v4154
        %v4161 = vadd.f32 %v4122, %v4154
        %v4162 = vadd.f32 %v4123, %v4154
        %v4163 = vadd.f32 %v4124, %v4154
        %v4164 = vadd.f32 %v4125, %v4154
        %v4165 = vadd.f32 %v4126, %v4154
        %v4166 = vadd.f32 %v4127, %v4154
        %v4167 = vadd.f32 %v4128, %v4154
        %v4168 = vadd.f32 %v4129, %v4154
        %v4169 = vadd.f32 %v4130, %v4154
        %v4170 = vadd.f32 %v4131, %v4154
        %v4171 = vadd.f32 %v4132, %v4154
        %v4172 = vadd.f32 %v4133, %v4154
        %v4173 = vadd.f32 %v4134, %v4154
        %v4174 = vadd.f32 %v4135, %v4154
        %v4175 = vadd.f32 %v4136, %v4154
        %v4176 = vadd.f32 %v4137, %v4154
        %v4177 = vadd.f32 %v4138, %v4154
        %v4178 = vadd.f32 %v4139, %v4154
        %v4179 = vadd.f32 %v4140, %v4154
        %v4180 = vadd.f32 %v4141, %v4154
        %v4181 = vadd.f32 %v4142, %v4154
        %v4182 = vadd.f32 %v4143, %v4154
        %v4183 = vadd.f32 %v4144, %v4154
        %v4184 = vadd.f32 %v4145, %v4154
        %v4185 = vadd.f32 %v4146, %v4154
        %v4186 = vadd.f32 %v4147, %v4154
        %v4187 = vadd.f32 %v4148, %v4154
        %v4188 = vmax.f32 %v4156, 0.0
        %v4189 = vmax.f32 %v4157, 0.0
        %v4190 = vmax.f32 %v4158, 0.0
        %v4191 = vmax.f32 %v4159, 0.0
        %v4192 = vmax.f32 %v4160, 0.0
        %v4193 = vmax.f32 %v4161, 0.0
        %v4194 = vmax.f32 %v4162, 0.0
        %v4195 = vmax.f32 %v4163, 0.0
        %v4196 = vmax.f32 %v4164, 0.0
        %v4197 = vmax.f32 %v4165, 0.0
        %v4198 = vmax.f32 %v4166, 0.0
        %v4199 = vmax.f32 %v4167, 0.0
        %v4200 = vmax.f32 %v4168, 0.0
        %v4201 = vmax.f32 %v4169, 0.0
        %v4202 = vmax.f32 %v4170, 0.0
        %v4203 = vmax.f32 %v4171, 0.0
        %v4204 = vmax.f32 %v4172, 0.0
        %v4205 = vmax.f32 %v4173, 0.0
        %v4206 = vmax.f32 %v4174, 0.0
        %v4207 = vmax.f32 %v4175, 0.0
        %v4208 = vmax.f32 %v4176, 0.0
        %v4209 = vmax.f32 %v4177, 0.0
        %v4210 = vmax.f32 %v4178, 0.0
        %v4211 = vmax.f32 %v4179, 0.0
        %v4212 = vmax.f32 %v4180, 0.0
        %v4213 = vmax.f32 %v4181, 0.0
        %v4214 = vmax.f32 %v4182, 0.0
        %v4215 = vmax.f32 %v4183, 0.0
        %v4216 = vmax.f32 %v4184, 0.0
        %v4217 = vmax.f32 %v4185, 0.0
        %v4218 = vmax.f32 %v4186, 0.0
        %v4219 = vmax.f32 %v4187, 0.0
        %v4220 = vld [vmem:[#allocation5] sm:$0xff]
        %v4221 = vld [vmem:[#allocation5 + $0x8] sm:$0xff]
        %v4222 = vld [vmem:[#allocation5 + $0x10] sm:$0xff]
        %v4223 = vld [vmem:[#allocation5 + $0x18] sm:$0xff]
        %v4224 = vld [vmem:[#allocation5 + $0x20] sm:$0xff]
        %v4225 = vld [vmem:[#allocation5 + $0x28] sm:$0xff]
        %v4226 = vld [vmem:[#allocation5 + $0x30] sm:$0xff]
        %v4227 = vld [vmem:[#allocation5 + $0x38] sm:$0xff]
        %v4228 = vld [vmem:[#allocation5 + $0x40] sm:$0xff]
        %v4229 = vld [vmem:[#allocation5 + $0x48] sm:$0xff]
        %v4230 = vld [vmem:[#allocation5 + $0x50] sm:$0xff]
        %v4231 = vld [vmem:[#allocation5 + $0x58] sm:$0xff]
        %v4232 = vld [vmem:[#allocation5 + $0x60] sm:$0xff]
        %v4233 = vld [vmem:[#allocation5 + $0x68] sm:$0xff]
        %v4234 = vld [vmem:[#allocation5 + $0x70] sm:$0xff]
        %v4235 = vld [vmem:[#allocation5 + $0x78] sm:$0xff]
        %4236 = vmatprep.subr.mxu0 0.0
        %4237 = vmatpush1.msra.mxu0 %v4203
        %4238 = vmatprep.subr.mxu0 0.0
        %4239 = vmatpush1.msra.mxu0 %v4202
        %4240 = vmatprep.subr.mxu0 0.0
        %4241 = vmatpush1.msra.mxu0 %v4201
        %4242 = vmatprep.subr.mxu0 0.0
        %4243 = vmatpush1.msra.mxu0 %v4200
        %4244 = vmatprep.subr.mxu0 0.0
        %4245 = vmatpush1.msra.mxu0 %v4199
        %4246 = vmatprep.subr.mxu0 0.0
        %4247 = vmatpush1.msra.mxu0 %v4198
        %4248 = vmatprep.subr.mxu0 0.0
        %4249 = vmatpush1.msra.mxu0 %v4197
        %4250 = vmatprep.subr.mxu0 0.0
        %4251 = vmatpush1.msra.mxu0 %v4196
        %4252 = vmatprep.subr.mxu0 0.0
        %4253 = vmatpush1.msra.mxu0 %v4195
        %4254 = vmatprep.subr.mxu0 0.0
        %4255 = vmatpush1.msra.mxu0 %v4194
        %4256 = vmatprep.subr.mxu0 0.0
        %4257 = vmatpush1.msra.mxu0 %v4193
        %4258 = vmatprep.subr.mxu0 0.0
        %4259 = vmatpush1.msra.mxu0 %v4192
        %4260 = vmatprep.subr.mxu0 0.0
        %4261 = vmatpush1.msra.mxu0 %v4191
        %4262 = vmatprep.subr.mxu0 0.0
        %4263 = vmatpush1.msra.mxu0 %v4190
        %4264 = vmatprep.subr.mxu0 0.0
        %4265 = vmatpush1.msra.mxu0 %v4189
        %4266 = vmatprep.subr.mxu0 0.0
        %4267 = vmatpush1.msra.mxu0 %v4188
        %4268 = vmatprep.subr.mxu0 0.0
        %4269 = vmatpush2.msra.mxu0 %v4219
        %4270 = vmatprep.subr.mxu0 0.0
        %4271 = vmatpush2.msra.mxu0 %v4218
        %4272 = vmatprep.subr.mxu0 0.0
        %4273 = vmatpush2.msra.mxu0 %v4217
        %4274 = vmatprep.subr.mxu0 0.0
        %4275 = vmatpush2.msra.mxu0 %v4216
        %4276 = vmatprep.subr.mxu0 0.0
        %4277 = vmatpush2.msra.mxu0 %v4215
        %4278 = vmatprep.subr.mxu0 0.0
        %4279 = vmatpush2.msra.mxu0 %v4214
        %4280 = vmatprep.subr.mxu0 0.0
        %4281 = vmatpush2.msra.mxu0 %v4213
        %4282 = vmatprep.subr.mxu0 0.0
        %4283 = vmatpush2.msra.mxu0 %v4212
        %4284 = vmatprep.subr.mxu0 0.0
        %4285 = vmatpush2.msra.mxu0 %v4211
        %4286 = vmatprep.subr.mxu0 0.0
        %4287 = vmatpush2.msra.mxu0 %v4210
        %4288 = vmatprep.subr.mxu0 0.0
        %4289 = vmatpush2.msra.mxu0 %v4209
        %4290 = vmatprep.subr.mxu0 0.0
        %4291 = vmatpush2.msra.mxu0 %v4208
        %4292 = vmatprep.subr.mxu0 0.0
        %4293 = vmatpush2.msra.mxu0 %v4207
        %4294 = vmatprep.subr.mxu0 0.0
        %4295 = vmatpush2.msra.mxu0 %v4206
        %4296 = vmatprep.subr.mxu0 0.0
        %4297 = vmatpush2.msra.mxu0 %v4205
        %4298 = vmatprep.subr.mxu0 0.0
        %4299 = vmatpush2.msra.mxu0 %v4204
        %4300 = vmatprep.mubr.f32.mxu0 %v4221
        %4301 = vmatmul.mubr.f32.gmra.mxu0 %v4220
        %v4302 = vpop.f32.mrf.mxu0
        %v4303 = vadd.f32 0.0, %v4302
        %v4304 = vpop.f32.mrf.mxu0
        %4305 = vmatprep.mubr.f32.mxu0 %v4223
        %4306 = vmatmul.mubr.f32.gmra.mxu0 %v4222
        %v4307 = vpop.f32.mrf.mxu0
        %v4308 = vadd.f32 0.0, %v4307
        %v4309 = vpop.f32.mrf.mxu0
        %4310 = vmatprep.mubr.f32.mxu0 %v4225
        %4311 = vmatmul.mubr.f32.gmra.mxu0 %v4224
        %v4312 = vpop.f32.mrf.mxu0
        %v4313 = vadd.f32 0.0, %v4312
        %v4314 = vpop.f32.mrf.mxu0
        %4315 = vmatprep.mubr.f32.mxu0 %v4227
        %4316 = vmatmul.mubr.f32.gmra.mxu0 %v4226
        %v4317 = vpop.f32.mrf.mxu0
        %v4318 = vadd.f32 0.0, %v4317
        %v4319 = vpop.f32.mrf.mxu0
        %4320 = vmatprep.mubr.f32.mxu0 %v4229
        %4321 = vmatmul.mubr.f32.gmra.mxu0 %v4228
        %v4322 = vpop.f32.mrf.mxu0
        %v4323 = vadd.f32 0.0, %v4322
        %v4324 = vpop.f32.mrf.mxu0
        %4325 = vmatprep.mubr.f32.mxu0 %v4231
        %4326 = vmatmul.mubr.f32.gmra.mxu0 %v4230
        %v4327 = vpop.f32.mrf.mxu0
        %v4328 = vadd.f32 0.0, %v4327
        %v4329 = vpop.f32.mrf.mxu0
        %4330 = vmatprep.mubr.f32.mxu0 %v4233
        %4331 = vmatmul.mubr.f32.gmra.mxu0 %v4232
        %v4332 = vpop.f32.mrf.mxu0
        %v4333 = vadd.f32 0.0, %v4332
        %v4334 = vpop.f32.mrf.mxu0
        %4335 = vmatprep.mubr.f32.mxu0 %v4235
        %4336 = vmatmul.mubr.f32.gmra.mxu0 %v4234
        %v4337 = vpop.f32.mrf.mxu0
        %v4338 = vadd.f32 0.0, %v4337
        %v4339 = vpop.f32.mrf.mxu0
        %4340 = vdwg.mxu0
        %v4341 = vpack.c.bf16 %v4308, %v4303
        %v4342 = vpack.c.bf16 %v4318, %v4313
        %v4343 = vpack.c.bf16 %v4328, %v4323
        %v4344 = vpack.c.bf16 %v4338, %v4333
        %v4345 = vld [vmem:[%s5] sm:$0xf]
        %v4346 = vld [vmem:[%s6] sm:$0x1]
        %v4348 = vlaneseq
        %v4349 = vshrl.u32 %v4348, 7
        %v4350 = vsub.s32 0, %v4349
        %v4351 = vrot.slane %v4346, %v4350
        %v4354 = vsel %vm781, %v4341, 0
        %v4357 = vsel %vm781, %v4342, 0
        %v4360 = vsel %vm781, %v4343, 0
        %v4363 = vsel %vm781, %v4344, 0
        %v4366 = vsel %vm1688, %v4345, 0
        %4368 = vmatprep.subr.bf16.mxu0 0
        %4369 = vmatpush1.bf16.msra.mxu0 0
        %4370 = vmatprep.subr.bf16.mxu0 0
        %4371 = vmatpush1.bf16.msra.mxu0 0
        %4372 = vmatprep.subr.bf16.mxu0 0
        %4373 = vmatpush1.bf16.msra.mxu0 0
        %4374 = vmatprep.subr.bf16.mxu0 0
        %4375 = vmatpush1.bf16.msra.mxu0 0
        %4376 = vmatprep.subr.bf16.mxu0 0
        %4377 = vmatpush1.bf16.msra.mxu0 0
        %4378 = vmatprep.subr.bf16.mxu0 0
        %4379 = vmatpush1.bf16.msra.mxu0 0
        %4380 = vmatprep.subr.bf16.mxu0 0
        %4381 = vmatpush1.bf16.msra.mxu0 0
        %4382 = vmatprep.subr.bf16.mxu0 0
        %4383 = vmatpush1.bf16.msra.mxu0 %v4366
        %4384 = vmatprep.subr.bf16.mxu0 0
        %4385 = vmatpush2.bf16.msra.mxu0 0
        %4386 = vmatprep.subr.bf16.mxu0 0
        %4387 = vmatpush2.bf16.msra.mxu0 0
        %4388 = vmatprep.subr.bf16.mxu0 0
        %4389 = vmatpush2.bf16.msra.mxu0 0
        %4390 = vmatprep.subr.bf16.mxu0 0
        %4391 = vmatpush2.bf16.msra.mxu0 0
        %4392 = vmatprep.subr.bf16.mxu0 0
        %4393 = vmatpush2.bf16.msra.mxu0 0
        %4394 = vmatprep.subr.bf16.mxu0 0
        %4395 = vmatpush2.bf16.msra.mxu0 0
        %4396 = vmatprep.subr.bf16.mxu0 0
        %4397 = vmatpush2.bf16.msra.mxu0 0
        %4398 = vmatprep.subr.bf16.mxu0 0
        %4399 = vmatpush2.bf16.msra.mxu0 0
        %4400 = vmatprep.mubr.bf16.mxu0 0
        %4401 = vmatmul.mubr.bf16.gmra.mxu0 %v4354
        %v4402 = vpop.f32.mrf.mxu0
        %v4403 = vadd.f32 %v4351, %v4402
        %v4404 = vpop.f32.mrf.mxu0
        %v4405 = vpop.f32.mrf.mxu0
        %v4406 = vadd.f32 %v4351, %v4405
        %v4407 = vpop.f32.mrf.mxu0
        %4408 = vmatprep.mubr.bf16.mxu0 0
        %4409 = vmatmul.mubr.bf16.gmra.mxu0 %v4357
        %v4410 = vpop.f32.mrf.mxu0
        %v4411 = vadd.f32 %v4351, %v4410
        %v4412 = vpop.f32.mrf.mxu0
        %v4413 = vpop.f32.mrf.mxu0
        %v4414 = vadd.f32 %v4351, %v4413
        %v4415 = vpop.f32.mrf.mxu0
        %4416 = vmatprep.mubr.bf16.mxu0 0
        %4417 = vmatmul.mubr.bf16.gmra.mxu0 %v4360
        %v4418 = vpop.f32.mrf.mxu0
        %v4419 = vadd.f32 %v4351, %v4418
        %v4420 = vpop.f32.mrf.mxu0
        %v4421 = vpop.f32.mrf.mxu0
        %v4422 = vadd.f32 %v4351, %v4421
        %v4423 = vpop.f32.mrf.mxu0
        %4424 = vmatprep.mubr.bf16.mxu0 0
        %4425 = vmatmul.mubr.bf16.gmra.mxu0 %v4363
        %v4426 = vpop.f32.mrf.mxu0
        %v4427 = vadd.f32 %v4351, %v4426
        %v4428 = vpop.f32.mrf.mxu0
        %v4429 = vpop.f32.mrf.mxu0
        %v4430 = vadd.f32 %v4351, %v4429
        %v4431 = vpop.f32.mrf.mxu0
        %4432 = vdwg.mxu0
        %v4433 = vunpack.c.l.bf16 %v396
        %v4434 = vunpack.c.l.bf16 %v397
        %v4435 = vunpack.c.l.bf16 %v398
        %v4436 = vunpack.c.l.bf16 %v399
        %v4437 = vunpack.c.l.bf16 %v400
        %v4438 = vunpack.c.l.bf16 %v401
        %v4439 = vunpack.c.l.bf16 %v402
        %v4440 = vunpack.c.l.bf16 %v403
        %v4441 = vunpack.c.l.bf16 %v404
        %v4442 = vunpack.c.l.bf16 %v405
        %v4443 = vunpack.c.l.bf16 %v406
        %v4444 = vunpack.c.l.bf16 %v407
        %v4445 = vunpack.c.l.bf16 %v408
        %v4446 = vunpack.c.l.bf16 %v409
        %v4447 = vunpack.c.l.bf16 %v410
        %v4448 = vunpack.c.l.bf16 %v411
        %v4449 = vunpack.c.l.bf16 %v412
        %v4450 = vunpack.c.l.bf16 %v413
        %v4451 = vunpack.c.l.bf16 %v414
        %v4452 = vunpack.c.l.bf16 %v415
        %v4453 = vunpack.c.l.bf16 %v416
        %v4454 = vunpack.c.l.bf16 %v417
        %v4455 = vunpack.c.l.bf16 %v418
        %v4456 = vunpack.c.l.bf16 %v419
        %v4457 = vunpack.c.l.bf16 %v420
        %v4458 = vunpack.c.l.bf16 %v421
        %v4459 = vunpack.c.l.bf16 %v422
        %v4460 = vunpack.c.l.bf16 %v423
        %v4461 = vunpack.c.l.bf16 %v424
        %v4462 = vunpack.c.l.bf16 %v425
        %v4463 = vunpack.c.l.bf16 %v426
        %v4464 = vunpack.c.l.bf16 %v427
        %4465 = vmatprep.subr.mxu0 0.0
        %4466 = vmatpush1.msra.mxu0 %v4448
        %4467 = vmatprep.subr.mxu0 0.0
        %4468 = vmatpush1.msra.mxu0 %v4447
        %4469 = vmatprep.subr.mxu0 0.0
        %4470 = vmatpush1.msra.mxu0 %v4446
        %4471 = vmatprep.subr.mxu0 0.0
        %4472 = vmatpush1.msra.mxu0 %v4445
        %4473 = vmatprep.subr.mxu0 0.0
        %4474 = vmatpush1.msra.mxu0 %v4444
        %4475 = vmatprep.subr.mxu0 0.0
        %4476 = vmatpush1.msra.mxu0 %v4443
        %4477 = vmatprep.subr.mxu0 0.0
        %4478 = vmatpush1.msra.mxu0 %v4442
        %4479 = vmatprep.subr.mxu0 0.0
        %4480 = vmatpush1.msra.mxu0 %v4441
        %4481 = vmatprep.subr.mxu0 0.0
        %4482 = vmatpush1.msra.mxu0 %v4440
        %4483 = vmatprep.subr.mxu0 0.0
        %4484 = vmatpush1.msra.mxu0 %v4439
        %4485 = vmatprep.subr.mxu0 0.0
        %4486 = vmatpush1.msra.mxu0 %v4438
        %4487 = vmatprep.subr.mxu0 0.0
        %4488 = vmatpush1.msra.mxu0 %v4437
        %4489 = vmatprep.subr.mxu0 0.0
        %4490 = vmatpush1.msra.mxu0 %v4436
        %4491 = vmatprep.subr.mxu0 0.0
        %4492 = vmatpush1.msra.mxu0 %v4435
        %4493 = vmatprep.subr.mxu0 0.0
        %4494 = vmatpush1.msra.mxu0 %v4434
        %4495 = vmatprep.subr.mxu0 0.0
        %4496 = vmatpush1.msra.mxu0 %v4433
        %4497 = vmatprep.subr.mxu0 0.0
        %4498 = vmatpush2.msra.mxu0 %v4464
        %4499 = vmatprep.subr.mxu0 0.0
        %4500 = vmatpush2.msra.mxu0 %v4463
        %4501 = vmatprep.subr.mxu0 0.0
        %4502 = vmatpush2.msra.mxu0 %v4462
        %4503 = vmatprep.subr.mxu0 0.0
        %4504 = vmatpush2.msra.mxu0 %v4461
        %4505 = vmatprep.subr.mxu0 0.0
        %4506 = vmatpush2.msra.mxu0 %v4460
        %4507 = vmatprep.subr.mxu0 0.0
        %4508 = vmatpush2.msra.mxu0 %v4459
        %4509 = vmatprep.subr.mxu0 0.0
        %4510 = vmatpush2.msra.mxu0 %v4458
        %4511 = vmatprep.subr.mxu0 0.0
        %4512 = vmatpush2.msra.mxu0 %v4457
        %4513 = vmatprep.subr.mxu0 0.0
        %4514 = vmatpush2.msra.mxu0 %v4456
        %4515 = vmatprep.subr.mxu0 0.0
        %4516 = vmatpush2.msra.mxu0 %v4455
        %4517 = vmatprep.subr.mxu0 0.0
        %4518 = vmatpush2.msra.mxu0 %v4454
        %4519 = vmatprep.subr.mxu0 0.0
        %4520 = vmatpush2.msra.mxu0 %v4453
        %4521 = vmatprep.subr.mxu0 0.0
        %4522 = vmatpush2.msra.mxu0 %v4452
        %4523 = vmatprep.subr.mxu0 0.0
        %4524 = vmatpush2.msra.mxu0 %v4451
        %4525 = vmatprep.subr.mxu0 0.0
        %4526 = vmatpush2.msra.mxu0 %v4450
        %4527 = vmatprep.subr.mxu0 0.0
        %4528 = vmatpush2.msra.mxu0 %v4449
        %4529 = vmatprep.mubr.f32.mxu0 %v4221
        %4530 = vmatmul.mubr.f32.gmra.mxu0 %v4220
        %v4531 = vpop.f32.mrf.mxu0
        %v4532 = vadd.f32 0.0, %v4531
        %v4533 = vpop.f32.mrf.mxu0
        %4534 = vmatprep.mubr.f32.mxu0 %v4223
        %4535 = vmatmul.mubr.f32.gmra.mxu0 %v4222
        %v4536 = vpop.f32.mrf.mxu0
        %v4537 = vadd.f32 0.0, %v4536
        %v4538 = vpop.f32.mrf.mxu0
        %4539 = vmatprep.mubr.f32.mxu0 %v4225
        %4540 = vmatmul.mubr.f32.gmra.mxu0 %v4224
        %v4541 = vpop.f32.mrf.mxu0
        %v4542 = vadd.f32 0.0, %v4541
        %v4543 = vpop.f32.mrf.mxu0
        %4544 = vmatprep.mubr.f32.mxu0 %v4227
        %4545 = vmatmul.mubr.f32.gmra.mxu0 %v4226
        %v4546 = vpop.f32.mrf.mxu0
        %v4547 = vadd.f32 0.0, %v4546
        %v4548 = vpop.f32.mrf.mxu0
        %4549 = vmatprep.mubr.f32.mxu0 %v4229
        %4550 = vmatmul.mubr.f32.gmra.mxu0 %v4228
        %v4551 = vpop.f32.mrf.mxu0
        %v4552 = vadd.f32 0.0, %v4551
        %v4553 = vpop.f32.mrf.mxu0
        %4554 = vmatprep.mubr.f32.mxu0 %v4231
        %4555 = vmatmul.mubr.f32.gmra.mxu0 %v4230
        %v4556 = vpop.f32.mrf.mxu0
        %v4557 = vadd.f32 0.0, %v4556
        %v4558 = vpop.f32.mrf.mxu0
        %4559 = vmatprep.mubr.f32.mxu0 %v4233
        %4560 = vmatmul.mubr.f32.gmra.mxu0 %v4232
        %v4561 = vpop.f32.mrf.mxu0
        %v4562 = vadd.f32 0.0, %v4561
        %v4563 = vpop.f32.mrf.mxu0
        %4564 = vmatprep.mubr.f32.mxu0 %v4235
        %4565 = vmatmul.mubr.f32.gmra.mxu0 %v4234
        %v4566 = vpop.f32.mrf.mxu0
        %v4567 = vadd.f32 0.0, %v4566
        %v4568 = vpop.f32.mrf.mxu0
        %4569 = vdwg.mxu0
        %v4570 = vpack.c.bf16 %v4537, %v4532
        %v4571 = vpack.c.bf16 %v4547, %v4542
        %v4572 = vpack.c.bf16 %v4557, %v4552
        %v4573 = vpack.c.bf16 %v4567, %v4562
        %v4574 = vld [vmem:[%s7] sm:$0xf]
        %v4575 = vld [vmem:[%s7 + $0x4] sm:$0xf]
        %v4576 = vld [vmem:[%s8] sm:$0x1]
        %v4578 = vlaneseq
        %v4579 = vshrl.u32 %v4578, 7
        %v4580 = vsub.s32 0, %v4579
        %v4581 = vrot.slane %v4576, %v4580
        %v4585 = vunpack.c.l.b16 %v4574
        %v4586 = vunpack.c.l.b16 %v4575
        %v4587 = vpack.c.b16 %v4586, %v4585
        %v4590 = vsel %vm523, %v4570, 0
        %v4593 = vsel %vm523, %v4571, 0
        %v4596 = vsel %vm523, %v4572, 0
        %v4599 = vsel %vm523, %v4573, 0
        %4601 = vmatprep.subr.bf16.mxu0 0
        %4602 = vmatpush1.bf16.msra.mxu0 0
        %4603 = vmatprep.subr.bf16.mxu0 0
        %4604 = vmatpush1.bf16.msra.mxu0 0
        %4605 = vmatprep.subr.bf16.mxu0 0
        %4606 = vmatpush1.bf16.msra.mxu0 0
        %4607 = vmatprep.subr.bf16.mxu0 0
        %4608 = vmatpush1.bf16.msra.mxu0 0
        %4609 = vmatprep.subr.bf16.mxu0 0
        %4610 = vmatpush1.bf16.msra.mxu0 0
        %4611 = vmatprep.subr.bf16.mxu0 0
        %4612 = vmatpush1.bf16.msra.mxu0 0
        %4613 = vmatprep.subr.bf16.mxu0 0
        %4614 = vmatpush1.bf16.msra.mxu0 0
        %4615 = vmatprep.subr.bf16.mxu0 0
        %4616 = vmatpush1.bf16.msra.mxu0 %v4587
        %4617 = vmatprep.subr.bf16.mxu0 0
        %4618 = vmatpush2.bf16.msra.mxu0 0
        %4619 = vmatprep.subr.bf16.mxu0 0
        %4620 = vmatpush2.bf16.msra.mxu0 0
        %4621 = vmatprep.subr.bf16.mxu0 0
        %4622 = vmatpush2.bf16.msra.mxu0 0
        %4623 = vmatprep.subr.bf16.mxu0 0
        %4624 = vmatpush2.bf16.msra.mxu0 0
        %4625 = vmatprep.subr.bf16.mxu0 0
        %4626 = vmatpush2.bf16.msra.mxu0 0
        %4627 = vmatprep.subr.bf16.mxu0 0
        %4628 = vmatpush2.bf16.msra.mxu0 0
        %4629 = vmatprep.subr.bf16.mxu0 0
        %4630 = vmatpush2.bf16.msra.mxu0 0
        %4631 = vmatprep.subr.bf16.mxu0 0
        %4632 = vmatpush2.bf16.msra.mxu0 0
        %4633 = vmatprep.mubr.bf16.mxu0 0
        %4634 = vmatmul.mubr.bf16.gmra.mxu0 %v4590
        %v4635 = vpop.f32.mrf.mxu0
        %v4636 = vadd.f32 %v4581, %v4635
        %v4637 = vpop.f32.mrf.mxu0
        %v4638 = vpop.f32.mrf.mxu0
        %v4639 = vadd.f32 %v4581, %v4638
        %v4640 = vpop.f32.mrf.mxu0
        %4641 = vmatprep.mubr.bf16.mxu0 0
        %4642 = vmatmul.mubr.bf16.gmra.mxu0 %v4593
        %v4643 = vpop.f32.mrf.mxu0
        %v4644 = vadd.f32 %v4581, %v4643
        %v4645 = vpop.f32.mrf.mxu0
        %v4646 = vpop.f32.mrf.mxu0
        %v4647 = vadd.f32 %v4581, %v4646
        %v4648 = vpop.f32.mrf.mxu0
        %4649 = vmatprep.mubr.bf16.mxu0 0
        %4650 = vmatmul.mubr.bf16.gmra.mxu0 %v4596
        %v4651 = vpop.f32.mrf.mxu0
        %v4652 = vadd.f32 %v4581, %v4651
        %v4653 = vpop.f32.mrf.mxu0
        %v4654 = vpop.f32.mrf.mxu0
        %v4655 = vadd.f32 %v4581, %v4654
        %v4656 = vpop.f32.mrf.mxu0
        %4657 = vmatprep.mubr.bf16.mxu0 0
        %4658 = vmatmul.mubr.bf16.gmra.mxu0 %v4599
        %v4659 = vpop.f32.mrf.mxu0
        %v4660 = vadd.f32 %v4581, %v4659
        %v4661 = vpop.f32.mrf.mxu0
        %v4662 = vpop.f32.mrf.mxu0
        %v4663 = vadd.f32 %v4581, %v4662
        %v4664 = vpop.f32.mrf.mxu0
        %4665 = vdwg.mxu0
        %v4666 = vadd.f32 %v4403, %v4636
        %v4667 = vadd.f32 %v4406, %v4639
        %v4668 = vadd.f32 %v4411, %v4644
        %v4669 = vadd.f32 %v4414, %v4647
        %v4670 = vadd.f32 %v4419, %v4652
        %v4671 = vadd.f32 %v4422, %v4655
        %v4672 = vadd.f32 %v4427, %v4660
        %v4673 = vadd.f32 %v4430, %v4663
        %v4674 = vmax.f32 %v4666, 0.0
        %v4675 = vmax.f32 %v4667, 0.0
        %v4676 = vmax.f32 %v4668, 0.0
        %v4677 = vmax.f32 %v4669, 0.0
        %v4678 = vmax.f32 %v4670, 0.0
        %v4679 = vmax.f32 %v4671, 0.0
        %v4680 = vmax.f32 %v4672, 0.0
        %v4681 = vmax.f32 %v4673, 0.0
        %vm4682 = vcmask 261120
        %4683 = vst.msk [vmem:[%s394] sm:$0xff] %vm4682, %v4674
        %4684 = vst.msk [vmem:[%s394 + $0x8] sm:$0xff] %vm4682, %v4675
        %4685 = vst.msk [vmem:[%s394 + $0x10] sm:$0xff] %vm4682, %v4676
        %4686 = vst.msk [vmem:[%s394 + $0x18] sm:$0xff] %vm4682, %v4677
        %4687 = vst.msk [vmem:[%s394 + $0x20] sm:$0xff] %vm4682, %v4678
        %4688 = vst.msk [vmem:[%s394 + $0x28] sm:$0xff] %vm4682, %v4679
        %4689 = vst.msk [vmem:[%s394 + $0x30] sm:$0xff] %vm4682, %v4680
        %4690 = vst.msk [vmem:[%s394 + $0x38] sm:$0xff] %vm4682, %v4681
        %p4691 = scmp.lt.s32.totalorder %s25, 1
        %s4692 = scalar_select %p4691, %s25, 1
        %s4693 = smul.addr %s4692, 8
        %s4694 = smul.addr %s4693, 8
        %s4695 = scalar_lea.vmem %s10, %s4694
        // Predicated region
        $region69: #{tpu_custom_call.1} parent=59 // pred_check
          %p4696 = pneg %p258
        $region70: #{tpu_custom_call.1} parent=59 // pred_check_branch
          %4698 = sbr.rel (%p4696) target = $region72
        $region71: #{tpu_custom_call.1} parent=59 // pred_region
          _
        $region72: #{tpu_custom_call.1} parent=59 // pred_fallthru
          _
      $region60: #{tpu_custom_call.1} parent=5 // pred_fallthru
        _
      %p4699 = scmp.le.s32.totalorder 2, %s20
      // Predicated region
      $region73: #{tpu_custom_call.1} parent=5 // pred_check
        %p4700 = pneg %p4699
      $region74: #{tpu_custom_call.1} parent=5 // pred_check_branch
        %4702 = sbr.rel (%p4700) target = $region76
      $region75: #{tpu_custom_call.1} parent=5 // pred_region
        %s4703 = ssub.s32 %s20, 2
        // Predicated region
        $region77: #{tpu_custom_call.1} parent=75 // pred_check
          %p4704 = pneg %p264
        $region78: #{tpu_custom_call.1} parent=75 // pred_check_branch
          %4706 = sbr.rel (%p4704) target = $region80
        $region79: #{tpu_custom_call.1} parent=75 // pred_region
          %p4707 = scmp.lt.s32.totalorder %s26, 1
          %s4708 = scalar_select %p4707, %s26, 1
          %s4709 = smul.addr %s4708, 8
          %s4710 = smul.addr %s4709, 8
          %s4711 = scalar_lea.vmem %s10, %s4710
        $region80: #{tpu_custom_call.1} parent=75 // pred_fallthru
          _
      $region76: #{tpu_custom_call.1} parent=5 // pred_fallthru
        _
    $region6: #{tpu_custom_call.1} parent=1 // loop_footer
      %s24 = sadd.s32 1, %s20
    $region7: #{tpu_custom_call.1} parent=1 // loop_footer_branch
      %19 = sbr.rel target = $region3
    $region8: #{tpu_custom_call.1} parent=1 // loop_exit
      _
    %4712 = vsyncpa [#allocation4], 1
    %s4713 = scalar_lea.sflag [#allocation4], 1
    %4714 = vsyncpa %s4713, 1
    %4715 = vsyncpa [#allocation6], 1

</llo_original>
